<compile_context>
chip_gen: v7x
topology: tpu7x:2x2x1
jax: 0.10.0
libtpu: 0.0.40
codegen_flags: <defaults>
</compile_context>

<pallas_src>
import functools
import math

import jax
import jax.numpy as jnp
from jax.experimental import pallas as pl
from jax.experimental.pallas import tpu as pltpu


def _convlstm_kernel(x_ref, wxa_ref, wh_ref, out_ref, h_ref, c_ref, xg_ref,
                     *, T_block, BWt, W, C_hid, K):
    """One grid step = one (batch-block, time-block).

    x_ref  : (T_block*BWt, K*C_in+1) bf16  im2col'd input (+ ones column for bias)
    wxa_ref: (K*C_in+1, 4H)          bf16  folded input->gate weights (+ bias row)
    wh_ref : (K, H, 4H)              bf16  per-tap hidden->gate weights
    out_ref: (T_block*BWt, H)        f32   h_t for every timestep of this block
    h_ref  : (BWt, H)                f32   running hidden state (resident over time blocks)
    c_ref  : (BWt, H)                f32   running cell state   (resident over time blocks)
    xg_ref : (T_block*BWt, 4H)       f32   scratch: precomputed x-path pre-activations
    """
    H = C_hid
    pad = K // 2
    t_blk = pl.program_id(1)

    @pl.when(t_blk == 0)
    def _():
        h_ref[...] = jnp.zeros_like(h_ref)
        c_ref[...] = jnp.zeros_like(c_ref)

    # Input path (all taps + bias) for the whole time block: one MXU pass,
    # hoisted out of the sequential recurrence.
    xg_ref[...] = jnp.dot(x_ref[...], wxa_ref[...],
                          preferred_element_type=jnp.float32)

    # Loop-invariant boundary masks for the rolled hidden-path contributions.
    w_idx = jax.lax.broadcasted_iota(jnp.int32, (BWt, 1), 0) % W
    masks = []
    for dk in range(K):
        s = dk - pad
        if s < 0:
            masks.append(w_idx >= -s)
        elif s > 0:
            masks.append(w_idx < W - s)
        else:
            masks.append(None)

    def step(t, carry):
        h, c = carry
        h_bf = h.astype(jnp.bfloat16)
        start = t * BWt
        if BWt % 8 == 0:
            start = pl.multiple_of(start, 8)
        acc = xg_ref[pl.ds(start, BWt), :]                      # (BWt, 4H) f32
        # Hidden->gate "same" conv: K un-shifted matmuls, shift the results
        # on the XLU (pltpu.roll) and mask the zero-padding boundary rows.
        for dk in range(K):
            z = jnp.dot(h_bf, wh_ref[dk], preferred_element_type=jnp.float32)
            s = dk - pad
            if s != 0:
                z = pltpu.roll(z, (-s) % BWt, axis=0)
                z = jnp.where(masks[dk], z, 0.0)
            acc = acc + z
        i = jax.nn.sigmoid(acc[:, 0 * H:1 * H])
        f = jax.nn.sigmoid(acc[:, 1 * H:2 * H])
        o = jax.nn.sigmoid(acc[:, 2 * H:3 * H])
        g = jnp.tanh(acc[:, 3 * H:4 * H])
        c_next = f * c + i * g
        h_next = o * jnp.tanh(c_next)
        out_ref[pl.ds(start, BWt), :] = h_next
        return (h_next, c_next)

    h_last, c_last = jax.lax.fori_loop(0, T_block, step,
                                       (h_ref[...], c_ref[...]), unroll=True)
    h_ref[...] = h_last
    c_ref[...] = c_last


def _pick_block(n, cap):
    for b in range(min(n, cap), 0, -1):
        if n % b == 0:
            return b
    return 1


def convlstm_pallas(x_btcw, weight, bias, hidden_channels, kernel_size,
                    *, t_block_cap=16):
    """x_btcw: (B, T, C_in, W) float32 (PyTorch layout).
       weight: (4*H, C_in + H, K)  (PyTorch Conv1d weight layout)
       bias  : (4*H,)
    Returns (outputs (B, T, H, W), (h_final (B, H, W), c_final (B, H, W)))."""
    B, T, C_in, W = x_btcw.shape
    H = hidden_channels
    K = kernel_size
    pad = K // 2  # NOTE: matches PyTorch Conv1d(padding=K//2); odd K assumed.
    assert weight.shape == (4 * H, C_in + H, K)

    # ---- blocking choices --------------------------------------------------
    n_b = 2 if (B % 2 == 0 and B >= 2) else 1   # parallel batch axis (2 TCs on v7x)
    B_tile = B // n_b
    BWt = B_tile * W
    T_block = _pick_block(T, t_block_cap)
    n_t = T // T_block
    KCa = K * C_in + 1

    # ---- parameter prep (wrapper-side, plain JAX) --------------------------
    w_x = jnp.transpose(weight[:, :C_in, :], (2, 1, 0))     # (K, C_in, 4H)
    w_h = jnp.transpose(weight[:, C_in:, :], (2, 1, 0))     # (K, H,    4H)
    w_x_aug = jnp.concatenate(
        [w_x.reshape(K * C_in, 4 * H), bias.reshape(1, 4 * H)], axis=0)
    w_x_aug = w_x_aug.astype(jnp.bfloat16)                   # (K*C_in+1, 4H)
    w_h = w_h.astype(jnp.bfloat16)

    # im2col the input over the K taps (channels-last, zero "same" padding),
    # and append a constant-1 column so the bias rides in the same matmul.
    x_twbc = jnp.transpose(x_btcw, (1, 0, 3, 2))             # (T, B, W, C_in)
    x_padw = jnp.pad(x_twbc, ((0, 0), (0, 0), (pad, pad), (0, 0)))
    x_col = jnp.concatenate([x_padw[:, :, k:k + W, :] for k in range(K)],
                            axis=-1)                          # (T, B, W, K*C_in)
    ones = jnp.ones(x_col.shape[:-1] + (1,), x_col.dtype)
    x_aug = jnp.concatenate([x_col, ones], axis=-1)           # (T, B, W, KCa)

    # Flatten to per-(batch-block, time-block) 2-D matmul slabs:
    #   (n_b, n_t, T_block * B_tile * W, KCa); row = tj*BWt + bt*W + w
    x_aug = jnp.transpose(x_aug, (1, 0, 2, 3))                # (B, T, W, KCa)
    x_aug = x_aug.reshape(n_b, B_tile, T, W, KCa)
    x_aug = jnp.transpose(x_aug, (0, 2, 1, 3, 4))             # (n_b, T, B_tile, W, KCa)
    x_aug = x_aug.reshape(n_b, n_t, T_block * BWt, KCa).astype(jnp.bfloat16)

    kernel = functools.partial(_convlstm_kernel, T_block=T_block, BWt=BWt,
                               W=W, C_hid=H, K=K)

    grid_spec = pltpu.PrefetchScalarGridSpec(
        num_scalar_prefetch=0,
        grid=(n_b, n_t),
        in_specs=[
            pl.BlockSpec((None, None, T_block * BWt, KCa),
                         lambda b, t: (b, t, 0, 0)),
            pl.BlockSpec((KCa, 4 * H), lambda b, t: (0, 0)),
            pl.BlockSpec((K, H, 4 * H), lambda b, t: (0, 0, 0)),
        ],
        out_specs=[
            pl.BlockSpec((None, None, T_block * BWt, H),
                         lambda b, t: (b, t, 0, 0)),
            pl.BlockSpec((None, BWt, H), lambda b, t: (b, 0, 0)),   # final h (carry)
            pl.BlockSpec((None, BWt, H), lambda b, t: (b, 0, 0)),   # final c (carry)
        ],
        scratch_shapes=[pltpu.VMEM((T_block * BWt, 4 * H), jnp.float32)],
    )

    out_flat, h_flat, c_flat = pl.pallas_call(
        kernel,
        grid_spec=grid_spec,
        out_shape=(
            jax.ShapeDtypeStruct((n_b, n_t, T_block * BWt, H), jnp.float32),
            jax.ShapeDtypeStruct((n_b, BWt, H), jnp.float32),
            jax.ShapeDtypeStruct((n_b, BWt, H), jnp.float32),
        ),
        compiler_params=pltpu.CompilerParams(
            dimension_semantics=("parallel", "arbitrary")),
    )(x_aug, w_x_aug, w_h)

    # ---- unpack back to PyTorch layout -------------------------------------
    outputs = out_flat.reshape(n_b, n_t, T_block, B_tile, W, H)
    outputs = jnp.transpose(outputs, (0, 3, 1, 2, 5, 4)).reshape(B, T, H, W)
    h_final = jnp.transpose(h_flat.reshape(n_b, B_tile, W, H),
                            (0, 1, 3, 2)).reshape(B, H, W)
    c_final = jnp.transpose(c_flat.reshape(n_b, B_tile, W, H),
                            (0, 1, 3, 2)).reshape(B, H, W)
    return outputs, (h_final, c_final)


def convlstm_ref(x_btcw, weight, bias, hidden_channels, kernel_size):
    """Pure-JAX reference (mirrors the PyTorch forward exactly, f32)."""
    B, T, C_in, W = x_btcw.shape
    H = hidden_channels
    pad = kernel_size // 2
    h = jnp.zeros((B, H, W), jnp.float32)
    c = jnp.zeros((B, H, W), jnp.float32)
    outs = []
    for t in range(T):
        comb = jnp.concatenate([x_btcw[:, t], h], axis=1)      # (B, C_in+H, W)
        conv = jax.lax.conv_general_dilated(
            comb, weight, window_strides=(1,), padding=[(pad, pad)],
            dimension_numbers=("NCH", "OIH", "NCH"))
        conv = conv + bias[None, :, None]
        i = jax.nn.sigmoid(conv[:, 0 * H:1 * H])
        f = jax.nn.sigmoid(conv[:, 1 * H:2 * H])
        o = jax.nn.sigmoid(conv[:, 2 * H:3 * H])
        g = jnp.tanh(conv[:, 3 * H:4 * H])
        c = f * c + i * g
        h = o * jnp.tanh(c)
        outs.append(h[:, None])
    return jnp.concatenate(outs, axis=1), (h, c)


if __name__ == "__main__":
    # Small, deterministic setup (matches the PyTorch module's expectations).
    B, T, C_in, W = 2, 8, 4, 16
    H, K = 32, 3

    key = jax.random.PRNGKey(0)
    kx, kw, kb = jax.random.split(key, 3)

    x = jax.random.normal(kx, (B, T, C_in, W), dtype=jnp.float32)

    # Deterministic Conv1d-style parameter init (same shapes as nn.Conv1d).
    fan_in = (C_in + H) * K
    bound = 1.0 / math.sqrt(fan_in)
    weight = jax.random.uniform(kw, (4 * H, C_in + H, K),
                                minval=-bound, maxval=bound, dtype=jnp.float32)
    bias = jax.random.uniform(kb, (4 * H,),
                              minval=-bound, maxval=bound, dtype=jnp.float32)

    outputs, (h_final, c_final) = convlstm_pallas(x, weight, bias, H, K)
    jax.block_until_ready((outputs, h_final, c_final))

    # Correctness check against the pure-JAX f32 reference.  Tolerance is
    # loosened vs f32-only because matmul operands are bf16 (f32 accumulation,
    # f32 state/gates).
    ref_out, (ref_h, ref_c) = convlstm_ref(x, weight, bias, H, K)
    assert outputs.shape == (B, T, H, W)
    assert h_final.shape == (B, H, W) and c_final.shape == (B, H, W)
    assert jnp.allclose(outputs, ref_out, atol=3e-2, rtol=3e-2)
    assert jnp.allclose(h_final, ref_h, atol=3e-2, rtol=3e-2)
    assert jnp.allclose(c_final, ref_c, atol=3e-2, rtol=3e-2)

    print("KERNEL_OK")
</pallas_src>

<mosaic_0001>
module attributes {stable_mosaic.version = 11 : i64} {
  func.func @_convlstm_kernel(%arg0: i32, %arg1: i32, %arg2: memref<1x1x128x13xbf16, #tpu.memory_space<vmem>>, %arg3: memref<13x128xbf16, #tpu.memory_space<vmem>>, %arg4: memref<3x32x128xbf16, #tpu.memory_space<vmem>>, %arg5: memref<1x1x128x32xf32, #tpu.memory_space<vmem>>, %arg6: memref<1x16x32xf32, #tpu.memory_space<vmem>>, %arg7: memref<1x16x32xf32, #tpu.memory_space<vmem>>, %arg8: memref<128x128xf32, #tpu.memory_space<vmem>>) attributes {dimension_semantics = [#tpu.dimension_semantics<parallel>, #tpu.dimension_semantics<arbitrary>], iteration_bounds = array<i64: 2, 1>, scalar_prefetch = 0 : i64, scratch_operands = 1 : i64, tpu.core_type = #tpu.core_type<tc>, window_params = [{transform_indices = @transform_0, window_bounds = array<i64: 1, 1, 128, 13>}, {pipeline_mode = #tpu.pipeline_mode<synchronous>, transform_indices = @transform_1, window_bounds = array<i64: 13, 128>}, {pipeline_mode = #tpu.pipeline_mode<synchronous>, transform_indices = @transform_2, window_bounds = array<i64: 3, 32, 128>}, {transform_indices = @transform_3, window_bounds = array<i64: 1, 1, 128, 32>}, {transform_indices = @transform_4, window_bounds = array<i64: 1, 16, 32>}, {transform_indices = @transform_5, window_bounds = array<i64: 1, 16, 32>}]} {
    %c0_i32 = arith.constant 0 : i32
    %0 = arith.cmpi eq, %arg1, %c0_i32 : i32
    %1 = arith.extui %0 : i1 to i32
    %c0_i32_0 = arith.constant 0 : i32
    %2 = arith.cmpi ne, %1, %c0_i32_0 : i32
    scf.if %2 {
      %cst_217 = arith.constant 0.000000e+00 : f32
      %487 = vector.broadcast %cst_217 : f32 to vector<16x32xf32>
      %c0_218 = arith.constant 0 : index
      %c0_219 = arith.constant 0 : index
      %c0_220 = arith.constant 0 : index
      %488 = vector.load %arg6[%c0_218, %c0_219, %c0_220] : memref<1x16x32xf32, #tpu.memory_space<vmem>>, vector<1x16x32xf32>
      %489 = vector.shape_cast %488 : vector<1x16x32xf32> to vector<16x32xf32>
      %490 = vector.shape_cast %487 : vector<16x32xf32> to vector<1x16x32xf32>
      tpu.vector_store %arg6[%c0_218, %c0_219, %c0_220], %490 {strides = array<i32>} : memref<1x16x32xf32, #tpu.memory_space<vmem>>, vector<1x16x32xf32>,
      %cst_221 = arith.constant 0.000000e+00 : f32
      %491 = vector.broadcast %cst_221 : f32 to vector<16x32xf32>
      %c0_222 = arith.constant 0 : index
      %c0_223 = arith.constant 0 : index
      %c0_224 = arith.constant 0 : index
      %492 = vector.load %arg7[%c0_222, %c0_223, %c0_224] : memref<1x16x32xf32, #tpu.memory_space<vmem>>, vector<1x16x32xf32>
      %493 = vector.shape_cast %492 : vector<1x16x32xf32> to vector<16x32xf32>
      %494 = vector.shape_cast %491 : vector<16x32xf32> to vector<1x16x32xf32>
      tpu.vector_store %arg7[%c0_222, %c0_223, %c0_224], %494 {strides = array<i32>} : memref<1x16x32xf32, #tpu.memory_space<vmem>>, vector<1x16x32xf32>,
    } else {
    }
    %c0 = arith.constant 0 : index
    %c0_1 = arith.constant 0 : index
    %c0_2 = arith.constant 0 : index
    %c0_3 = arith.constant 0 : index
    %3 = vector.load %arg2[%c0, %c0_1, %c0_2, %c0_3] : memref<1x1x128x13xbf16, #tpu.memory_space<vmem>>, vector<1x1x128x13xbf16>
    %4 = vector.shape_cast %3 : vector<1x1x128x13xbf16> to vector<128x13xbf16>
    %c0_4 = arith.constant 0 : index
    %c0_5 = arith.constant 0 : index
    %5 = vector.load %arg3[%c0_4, %c0_5] : memref<13x128xbf16, #tpu.memory_space<vmem>>, vector<13x128xbf16>
    %cst = arith.constant dense<0.000000e+00> : vector<128x128xf32>
    %6 = tpu.matmul %4, %5, %cst {dimension_numbers = #tpu.dot_dimension_numbers<[1], [0], [0], [1], [0, 0, 1, 1], [], []>} : vector<128x13xbf16>, vector<13x128xbf16>, vector<128x128xf32> -> vector<128x128xf32>
    %c0_6 = arith.constant 0 : index
    %c0_7 = arith.constant 0 : index
    %7 = vector.load %arg8[%c0_6, %c0_7] : memref<128x128xf32, #tpu.memory_space<vmem>>, vector<128x128xf32>
    tpu.vector_store %arg8[%c0_6, %c0_7], %6 {strides = array<i32>} : memref<128x128xf32, #tpu.memory_space<vmem>>, vector<128x128xf32>,
    %8 = tpu.iota {dimensions = array<i32: 0>} : vector<16x1xi32>
    %c16_i32 = arith.constant 16 : i32
    %c0_i32_8 = arith.constant 0 : i32
    %9 = arith.cmpi eq, %c16_i32, %c0_i32_8 : i32
    %c1_i32 = arith.constant 1 : i32
    %10 = arith.select %9, %c1_i32, %c16_i32 : i32
    %11 = vector.broadcast %10 : i32 to vector<16x1xi32>
    %12 = arith.remsi %8, %11 : vector<16x1xi32>
    %c0_i32_9 = arith.constant 0 : i32
    %13 = vector.broadcast %c0_i32_9 : i32 to vector<16x1xi32>
    %14 = arith.cmpi ne, %12, %13 : vector<16x1xi32>
    %c0_i32_10 = arith.constant 0 : i32
    %15 = vector.broadcast %c0_i32_10 : i32 to vector<16x1xi32>
    %16 = arith.cmpi slt, %12, %15 : vector<16x1xi32>
    %c0_i32_11 = arith.constant 0 : i32
    %17 = arith.cmpi slt, %10, %c0_i32_11 : i32
    %18 = vector.broadcast %17 : i1 to vector<16x1xi1>
    %19 = vector.broadcast %18 : vector<16x1xi1> to vector<16x1xi1>
    %20 = arith.xori %16, %19 : vector<16x1xi1>
    %21 = arith.andi %20, %14 : vector<16x1xi1>
    %22 = vector.broadcast %10 : i32 to vector<16x1xi32>
    %23 = arith.addi %12, %22 : vector<16x1xi32>
    %24 = arith.select %21, %23, %12 : vector<16x1xi1>, vector<16x1xi32>
    %c1_i32_12 = arith.constant 1 : i32
    %25 = vector.broadcast %c1_i32_12 : i32 to vector<16x1xi32>
    %26 = arith.cmpi sge, %24, %25 : vector<16x1xi32>
    %c15_i32 = arith.constant 15 : i32
    %27 = vector.broadcast %c15_i32 : i32 to vector<16x1xi32>
    %28 = arith.cmpi slt, %24, %27 : vector<16x1xi32>
    %c0_13 = arith.constant 0 : index
    %c0_14 = arith.constant 0 : index
    %c0_15 = arith.constant 0 : index
    %29 = vector.load %arg6[%c0_13, %c0_14, %c0_15] : memref<1x16x32xf32, #tpu.memory_space<vmem>>, vector<1x16x32xf32>
    %30 = vector.shape_cast %29 : vector<1x16x32xf32> to vector<16x32xf32>
    %c0_16 = arith.constant 0 : index
    %c0_17 = arith.constant 0 : index
    %c0_18 = arith.constant 0 : index
    %31 = vector.load %arg7[%c0_16, %c0_17, %c0_18] : memref<1x16x32xf32, #tpu.memory_space<vmem>>, vector<1x16x32xf32>
    %32 = vector.shape_cast %31 : vector<1x16x32xf32> to vector<16x32xf32>
    %c0_i32_19 = arith.constant 0 : i32
    %33 = arith.truncf %30 : vector<16x32xf32> to vector<16x32xbf16>
    %c16_i32_20 = arith.constant 16 : i32
    %34 = arith.muli %c0_i32_19, %c16_i32_20 : i32
    %35 = tpu.assume_multiple %34, 8 : i32
    %36 = arith.index_cast %35 : i32 to index
    %c0_21 = arith.constant 0 : index
    %37 = vector.load %arg8[%36, %c0_21] : memref<128x128xf32, #tpu.memory_space<vmem>>, vector<16x128xf32>
    %c0_22 = arith.constant 0 : index
    %c0_23 = arith.constant 0 : index
    %c0_24 = arith.constant 0 : index
    %38 = vector.load %arg4[%c0_22, %c0_23, %c0_24] : memref<3x32x128xbf16, #tpu.memory_space<vmem>>, vector<1x32x128xbf16>
    %39 = vector.shape_cast %38 : vector<1x32x128xbf16> to vector<32x128xbf16>
    %cst_25 = arith.constant dense<0.000000e+00> : vector<16x128xf32>
    %40 = tpu.matmul %33, %39, %cst_25 {dimension_numbers = #tpu.dot_dimension_numbers<[1], [0], [0], [1], [0, 0, 1, 1], [], []>} : vector<16x32xbf16>, vector<32x128xbf16>, vector<16x128xf32> -> vector<16x128xf32>
    %c1_i32_26 = arith.constant 1 : i32
    %41 = tpu.dynamic_rotate %40 by %c1_i32_26 dim 0 : vector<16x128xf32>, i32 -> vector<16x128xf32>
    %cst_27 = arith.constant 0.000000e+00 : f32
    %42 = vector.shape_cast %26 : vector<16x1xi1> to vector<16x1xi1>
    %43 = vector.broadcast %42 : vector<16x1xi1> to vector<16x128xi1>
    %44 = vector.broadcast %cst_27 : f32 to vector<16x128xf32>
    %45 = arith.select %43, %41, %44 : vector<16x128xi1>, vector<16x128xf32>
    %46 = arith.addf %37, %45 : vector<16x128xf32>
    %c1 = arith.constant 1 : index
    %c0_28 = arith.constant 0 : index
    %c0_29 = arith.constant 0 : index
    %47 = vector.load %arg4[%c1, %c0_28, %c0_29] : memref<3x32x128xbf16, #tpu.memory_space<vmem>>, vector<1x32x128xbf16>
    %48 = vector.shape_cast %47 : vector<1x32x128xbf16> to vector<32x128xbf16>
    %cst_30 = arith.constant dense<0.000000e+00> : vector<16x128xf32>
    %49 = tpu.matmul %33, %48, %cst_30 {dimension_numbers = #tpu.dot_dimension_numbers<[1], [0], [0], [1], [0, 0, 1, 1], [], []>} : vector<16x32xbf16>, vector<32x128xbf16>, vector<16x128xf32> -> vector<16x128xf32>
    %50 = arith.addf %46, %49 : vector<16x128xf32>
    %c2 = arith.constant 2 : index
    %c0_31 = arith.constant 0 : index
    %c0_32 = arith.constant 0 : index
    %51 = vector.load %arg4[%c2, %c0_31, %c0_32] : memref<3x32x128xbf16, #tpu.memory_space<vmem>>, vector<1x32x128xbf16>
    %52 = vector.shape_cast %51 : vector<1x32x128xbf16> to vector<32x128xbf16>
    %cst_33 = arith.constant dense<0.000000e+00> : vector<16x128xf32>
    %53 = tpu.matmul %33, %52, %cst_33 {dimension_numbers = #tpu.dot_dimension_numbers<[1], [0], [0], [1], [0, 0, 1, 1], [], []>} : vector<16x32xbf16>, vector<32x128xbf16>, vector<16x128xf32> -> vector<16x128xf32>
    %c15_i32_34 = arith.constant 15 : i32
    %54 = tpu.dynamic_rotate %53 by %c15_i32_34 dim 0 : vector<16x128xf32>, i32 -> vector<16x128xf32>
    %cst_35 = arith.constant 0.000000e+00 : f32
    %55 = vector.shape_cast %28 : vector<16x1xi1> to vector<16x1xi1>
    %56 = vector.broadcast %55 : vector<16x1xi1> to vector<16x128xi1>
    %57 = vector.broadcast %cst_35 : f32 to vector<16x128xf32>
    %58 = arith.select %56, %54, %57 : vector<16x128xi1>, vector<16x128xf32>
    %59 = arith.addf %50, %58 : vector<16x128xf32>
    %60 = vector.extract_strided_slice %59 {offsets = [0, 0], sizes = [16, 32], strides = [1, 1]} : vector<16x128xf32> to vector<16x32xf32>
    %61 = arith.negf %60 : vector<16x32xf32>
    %62 = math.exp %61 : vector<16x32xf32>
    %cst_36 = arith.constant 1.000000e+00 : f32
    %63 = vector.broadcast %cst_36 : f32 to vector<16x32xf32>
    %64 = arith.addf %63, %62 : vector<16x32xf32>
    %65 = arith.divf %63, %64 : vector<16x32xf32>
    %66 = vector.extract_strided_slice %59 {offsets = [0, 32], sizes = [16, 32], strides = [1, 1]} : vector<16x128xf32> to vector<16x32xf32>
    %67 = arith.negf %66 : vector<16x32xf32>
    %68 = math.exp %67 : vector<16x32xf32>
    %cst_37 = arith.constant 1.000000e+00 : f32
    %69 = vector.broadcast %cst_37 : f32 to vector<16x32xf32>
    %70 = arith.addf %69, %68 : vector<16x32xf32>
    %71 = arith.divf %69, %70 : vector<16x32xf32>
    %72 = vector.extract_strided_slice %59 {offsets = [0, 64], sizes = [16, 32], strides = [1, 1]} : vector<16x128xf32> to vector<16x32xf32>
    %73 = arith.negf %72 : vector<16x32xf32>
    %74 = math.exp %73 : vector<16x32xf32>
    %cst_38 = arith.constant 1.000000e+00 : f32
    %75 = vector.broadcast %cst_38 : f32 to vector<16x32xf32>
    %76 = arith.addf %75, %74 : vector<16x32xf32>
    %77 = arith.divf %75, %76 : vector<16x32xf32>
    %78 = vector.extract_strided_slice %59 {offsets = [0, 96], sizes = [16, 32], strides = [1, 1]} : vector<16x128xf32> to vector<16x32xf32>
    %79 = math.tanh %78 : vector<16x32xf32>
    %80 = arith.mulf %71, %32 : vector<16x32xf32>
    %81 = arith.mulf %65, %79 : vector<16x32xf32>
    %82 = arith.addf %80, %81 : vector<16x32xf32>
    %83 = math.tanh %82 : vector<16x32xf32>
    %84 = arith.mulf %77, %83 : vector<16x32xf32>
    %c0_39 = arith.constant 0 : index
    %c0_40 = arith.constant 0 : index
    %85 = arith.index_cast %35 : i32 to index
    %c0_41 = arith.constant 0 : index
    %86 = vector.load %arg5[%c0_39, %c0_40, %85, %c0_41] : memref<1x1x128x32xf32, #tpu.memory_space<vmem>>, vector<1x1x16x32xf32>
    %87 = vector.shape_cast %86 : vector<1x1x16x32xf32> to vector<16x32xf32>
    %88 = vector.shape_cast %84 : vector<16x32xf32> to vector<1x1x16x32xf32>
    tpu.vector_store %arg5[%c0_39, %c0_40, %85, %c0_41], %88 {strides = array<i32>} : memref<1x1x128x32xf32, #tpu.memory_space<vmem>>, vector<1x1x16x32xf32>,
    %c1_i32_42 = arith.constant 1 : i32
    %89 = arith.truncf %84 : vector<16x32xf32> to vector<16x32xbf16>
    %c16_i32_43 = arith.constant 16 : i32
    %90 = arith.muli %c1_i32_42, %c16_i32_43 : i32
    %91 = tpu.assume_multiple %90, 8 : i32
    %92 = arith.index_cast %91 : i32 to index
    %c0_44 = arith.constant 0 : index
    %93 = vector.load %arg8[%92, %c0_44] : memref<128x128xf32, #tpu.memory_space<vmem>>, vector<16x128xf32>
    %c0_45 = arith.constant 0 : index
    %c0_46 = arith.constant 0 : index
    %c0_47 = arith.constant 0 : index
    %94 = vector.load %arg4[%c0_45, %c0_46, %c0_47] : memref<3x32x128xbf16, #tpu.memory_space<vmem>>, vector<1x32x128xbf16>
    %95 = vector.shape_cast %94 : vector<1x32x128xbf16> to vector<32x128xbf16>
    %cst_48 = arith.constant dense<0.000000e+00> : vector<16x128xf32>
    %96 = tpu.matmul %89, %95, %cst_48 {dimension_numbers = #tpu.dot_dimension_numbers<[1], [0], [0], [1], [0, 0, 1, 1], [], []>} : vector<16x32xbf16>, vector<32x128xbf16>, vector<16x128xf32> -> vector<16x128xf32>
    %c1_i32_49 = arith.constant 1 : i32
    %97 = tpu.dynamic_rotate %96 by %c1_i32_49 dim 0 : vector<16x128xf32>, i32 -> vector<16x128xf32>
    %cst_50 = arith.constant 0.000000e+00 : f32
    %98 = vector.shape_cast %26 : vector<16x1xi1> to vector<16x1xi1>
    %99 = vector.broadcast %98 : vector<16x1xi1> to vector<16x128xi1>
    %100 = vector.broadcast %cst_50 : f32 to vector<16x128xf32>
    %101 = arith.select %99, %97, %100 : vector<16x128xi1>, vector<16x128xf32>
    %102 = arith.addf %93, %101 : vector<16x128xf32>
    %c1_51 = arith.constant 1 : index
    %c0_52 = arith.constant 0 : index
    %c0_53 = arith.constant 0 : index
    %103 = vector.load %arg4[%c1_51, %c0_52, %c0_53] : memref<3x32x128xbf16, #tpu.memory_space<vmem>>, vector<1x32x128xbf16>
    %104 = vector.shape_cast %103 : vector<1x32x128xbf16> to vector<32x128xbf16>
    %cst_54 = arith.constant dense<0.000000e+00> : vector<16x128xf32>
    %105 = tpu.matmul %89, %104, %cst_54 {dimension_numbers = #tpu.dot_dimension_numbers<[1], [0], [0], [1], [0, 0, 1, 1], [], []>} : vector<16x32xbf16>, vector<32x128xbf16>, vector<16x128xf32> -> vector<16x128xf32>
    %106 = arith.addf %102, %105 : vector<16x128xf32>
    %c2_55 = arith.constant 2 : index
    %c0_56 = arith.constant 0 : index
    %c0_57 = arith.constant 0 : index
    %107 = vector.load %arg4[%c2_55, %c0_56, %c0_57] : memref<3x32x128xbf16, #tpu.memory_space<vmem>>, vector<1x32x128xbf16>
    %108 = vector.shape_cast %107 : vector<1x32x128xbf16> to vector<32x128xbf16>
    %cst_58 = arith.constant dense<0.000000e+00> : vector<16x128xf32>
    %109 = tpu.matmul %89, %108, %cst_58 {dimension_numbers = #tpu.dot_dimension_numbers<[1], [0], [0], [1], [0, 0, 1, 1], [], []>} : vector<16x32xbf16>, vector<32x128xbf16>, vector<16x128xf32> -> vector<16x128xf32>
    %c15_i32_59 = arith.constant 15 : i32
    %110 = tpu.dynamic_rotate %109 by %c15_i32_59 dim 0 : vector<16x128xf32>, i32 -> vector<16x128xf32>
    %cst_60 = arith.constant 0.000000e+00 : f32
    %111 = vector.shape_cast %28 : vector<16x1xi1> to vector<16x1xi1>
    %112 = vector.broadcast %111 : vector<16x1xi1> to vector<16x128xi1>
    %113 = vector.broadcast %cst_60 : f32 to vector<16x128xf32>
    %114 = arith.select %112, %110, %113 : vector<16x128xi1>, vector<16x128xf32>
    %115 = arith.addf %106, %114 : vector<16x128xf32>
    %116 = vector.extract_strided_slice %115 {offsets = [0, 0], sizes = [16, 32], strides = [1, 1]} : vector<16x128xf32> to vector<16x32xf32>
    %117 = arith.negf %116 : vector<16x32xf32>
    %118 = math.exp %117 : vector<16x32xf32>
    %cst_61 = arith.constant 1.000000e+00 : f32
    %119 = vector.broadcast %cst_61 : f32 to vector<16x32xf32>
    %120 = arith.addf %119, %118 : vector<16x32xf32>
    %121 = arith.divf %119, %120 : vector<16x32xf32>
    %122 = vector.extract_strided_slice %115 {offsets = [0, 32], sizes = [16, 32], strides = [1, 1]} : vector<16x128xf32> to vector<16x32xf32>
    %123 = arith.negf %122 : vector<16x32xf32>
    %124 = math.exp %123 : vector<16x32xf32>
    %cst_62 = arith.constant 1.000000e+00 : f32
    %125 = vector.broadcast %cst_62 : f32 to vector<16x32xf32>
    %126 = arith.addf %125, %124 : vector<16x32xf32>
    %127 = arith.divf %125, %126 : vector<16x32xf32>
    %128 = vector.extract_strided_slice %115 {offsets = [0, 64], sizes = [16, 32], strides = [1, 1]} : vector<16x128xf32> to vector<16x32xf32>
    %129 = arith.negf %128 : vector<16x32xf32>
    %130 = math.exp %129 : vector<16x32xf32>
    %cst_63 = arith.constant 1.000000e+00 : f32
    %131 = vector.broadcast %cst_63 : f32 to vector<16x32xf32>
    %132 = arith.addf %131, %130 : vector<16x32xf32>
    %133 = arith.divf %131, %132 : vector<16x32xf32>
    %134 = vector.extract_strided_slice %115 {offsets = [0, 96], sizes = [16, 32], strides = [1, 1]} : vector<16x128xf32> to vector<16x32xf32>
    %135 = math.tanh %134 : vector<16x32xf32>
    %136 = arith.mulf %127, %82 : vector<16x32xf32>
    %137 = arith.mulf %121, %135 : vector<16x32xf32>
    %138 = arith.addf %136, %137 : vector<16x32xf32>
    %139 = math.tanh %138 : vector<16x32xf32>
    %140 = arith.mulf %133, %139 : vector<16x32xf32>
    %c0_64 = arith.constant 0 : index
    %c0_65 = arith.constant 0 : index
    %141 = arith.index_cast %91 : i32 to index
    %c0_66 = arith.constant 0 : index
    %142 = vector.load %arg5[%c0_64, %c0_65, %141, %c0_66] : memref<1x1x128x32xf32, #tpu.memory_space<vmem>>, vector<1x1x16x32xf32>
    %143 = vector.shape_cast %142 : vector<1x1x16x32xf32> to vector<16x32xf32>
    %144 = vector.shape_cast %140 : vector<16x32xf32> to vector<1x1x16x32xf32>
    tpu.vector_store %arg5[%c0_64, %c0_65, %141, %c0_66], %144 {strides = array<i32>} : memref<1x1x128x32xf32, #tpu.memory_space<vmem>>, vector<1x1x16x32xf32>,
    %c2_i32 = arith.constant 2 : i32
    %145 = arith.truncf %140 : vector<16x32xf32> to vector<16x32xbf16>
    %c16_i32_67 = arith.constant 16 : i32
    %146 = arith.muli %c2_i32, %c16_i32_67 : i32
    %147 = tpu.assume_multiple %146, 8 : i32
    %148 = arith.index_cast %147 : i32 to index
    %c0_68 = arith.constant 0 : index
    %149 = vector.load %arg8[%148, %c0_68] : memref<128x128xf32, #tpu.memory_space<vmem>>, vector<16x128xf32>
    %c0_69 = arith.constant 0 : index
    %c0_70 = arith.constant 0 : index
    %c0_71 = arith.constant 0 : index
    %150 = vector.load %arg4[%c0_69, %c0_70, %c0_71] : memref<3x32x128xbf16, #tpu.memory_space<vmem>>, vector<1x32x128xbf16>
    %151 = vector.shape_cast %150 : vector<1x32x128xbf16> to vector<32x128xbf16>
    %cst_72 = arith.constant dense<0.000000e+00> : vector<16x128xf32>
    %152 = tpu.matmul %145, %151, %cst_72 {dimension_numbers = #tpu.dot_dimension_numbers<[1], [0], [0], [1], [0, 0, 1, 1], [], []>} : vector<16x32xbf16>, vector<32x128xbf16>, vector<16x128xf32> -> vector<16x128xf32>
    %c1_i32_73 = arith.constant 1 : i32
    %153 = tpu.dynamic_rotate %152 by %c1_i32_73 dim 0 : vector<16x128xf32>, i32 -> vector<16x128xf32>
    %cst_74 = arith.constant 0.000000e+00 : f32
    %154 = vector.shape_cast %26 : vector<16x1xi1> to vector<16x1xi1>
    %155 = vector.broadcast %154 : vector<16x1xi1> to vector<16x128xi1>
    %156 = vector.broadcast %cst_74 : f32 to vector<16x128xf32>
    %157 = arith.select %155, %153, %156 : vector<16x128xi1>, vector<16x128xf32>
    %158 = arith.addf %149, %157 : vector<16x128xf32>
    %c1_75 = arith.constant 1 : index
    %c0_76 = arith.constant 0 : index
    %c0_77 = arith.constant 0 : index
    %159 = vector.load %arg4[%c1_75, %c0_76, %c0_77] : memref<3x32x128xbf16, #tpu.memory_space<vmem>>, vector<1x32x128xbf16>
    %160 = vector.shape_cast %159 : vector<1x32x128xbf16> to vector<32x128xbf16>
    %cst_78 = arith.constant dense<0.000000e+00> : vector<16x128xf32>
    %161 = tpu.matmul %145, %160, %cst_78 {dimension_numbers = #tpu.dot_dimension_numbers<[1], [0], [0], [1], [0, 0, 1, 1], [], []>} : vector<16x32xbf16>, vector<32x128xbf16>, vector<16x128xf32> -> vector<16x128xf32>
    %162 = arith.addf %158, %161 : vector<16x128xf32>
    %c2_79 = arith.constant 2 : index
    %c0_80 = arith.constant 0 : index
    %c0_81 = arith.constant 0 : index
    %163 = vector.load %arg4[%c2_79, %c0_80, %c0_81] : memref<3x32x128xbf16, #tpu.memory_space<vmem>>, vector<1x32x128xbf16>
    %164 = vector.shape_cast %163 : vector<1x32x128xbf16> to vector<32x128xbf16>
    %cst_82 = arith.constant dense<0.000000e+00> : vector<16x128xf32>
    %165 = tpu.matmul %145, %164, %cst_82 {dimension_numbers = #tpu.dot_dimension_numbers<[1], [0], [0], [1], [0, 0, 1, 1], [], []>} : vector<16x32xbf16>, vector<32x128xbf16>, vector<16x128xf32> -> vector<16x128xf32>
    %c15_i32_83 = arith.constant 15 : i32
    %166 = tpu.dynamic_rotate %165 by %c15_i32_83 dim 0 : vector<16x128xf32>, i32 -> vector<16x128xf32>
    %cst_84 = arith.constant 0.000000e+00 : f32
    %167 = vector.shape_cast %28 : vector<16x1xi1> to vector<16x1xi1>
    %168 = vector.broadcast %167 : vector<16x1xi1> to vector<16x128xi1>
    %169 = vector.broadcast %cst_84 : f32 to vector<16x128xf32>
    %170 = arith.select %168, %166, %169 : vector<16x128xi1>, vector<16x128xf32>
    %171 = arith.addf %162, %170 : vector<16x128xf32>
    %172 = vector.extract_strided_slice %171 {offsets = [0, 0], sizes = [16, 32], strides = [1, 1]} : vector<16x128xf32> to vector<16x32xf32>
    %173 = arith.negf %172 : vector<16x32xf32>
    %174 = math.exp %173 : vector<16x32xf32>
    %cst_85 = arith.constant 1.000000e+00 : f32
    %175 = vector.broadcast %cst_85 : f32 to vector<16x32xf32>
    %176 = arith.addf %175, %174 : vector<16x32xf32>
    %177 = arith.divf %175, %176 : vector<16x32xf32>
    %178 = vector.extract_strided_slice %171 {offsets = [0, 32], sizes = [16, 32], strides = [1, 1]} : vector<16x128xf32> to vector<16x32xf32>
    %179 = arith.negf %178 : vector<16x32xf32>
    %180 = math.exp %179 : vector<16x32xf32>
    %cst_86 = arith.constant 1.000000e+00 : f32
    %181 = vector.broadcast %cst_86 : f32 to vector<16x32xf32>
    %182 = arith.addf %181, %180 : vector<16x32xf32>
    %183 = arith.divf %181, %182 : vector<16x32xf32>
    %184 = vector.extract_strided_slice %171 {offsets = [0, 64], sizes = [16, 32], strides = [1, 1]} : vector<16x128xf32> to vector<16x32xf32>
    %185 = arith.negf %184 : vector<16x32xf32>
    %186 = math.exp %185 : vector<16x32xf32>
    %cst_87 = arith.constant 1.000000e+00 : f32
    %187 = vector.broadcast %cst_87 : f32 to vector<16x32xf32>
    %188 = arith.addf %187, %186 : vector<16x32xf32>
    %189 = arith.divf %187, %188 : vector<16x32xf32>
    %190 = vector.extract_strided_slice %171 {offsets = [0, 96], sizes = [16, 32], strides = [1, 1]} : vector<16x128xf32> to vector<16x32xf32>
    %191 = math.tanh %190 : vector<16x32xf32>
    %192 = arith.mulf %183, %138 : vector<16x32xf32>
    %193 = arith.mulf %177, %191 : vector<16x32xf32>
    %194 = arith.addf %192, %193 : vector<16x32xf32>
    %195 = math.tanh %194 : vector<16x32xf32>
    %196 = arith.mulf %189, %195 : vector<16x32xf32>
    %c0_88 = arith.constant 0 : index
    %c0_89 = arith.constant 0 : index
    %197 = arith.index_cast %147 : i32 to index
    %c0_90 = arith.constant 0 : index
    %198 = vector.load %arg5[%c0_88, %c0_89, %197, %c0_90] : memref<1x1x128x32xf32, #tpu.memory_space<vmem>>, vector<1x1x16x32xf32>
    %199 = vector.shape_cast %198 : vector<1x1x16x32xf32> to vector<16x32xf32>
    %200 = vector.shape_cast %196 : vector<16x32xf32> to vector<1x1x16x32xf32>
    tpu.vector_store %arg5[%c0_88, %c0_89, %197, %c0_90], %200 {strides = array<i32>} : memref<1x1x128x32xf32, #tpu.memory_space<vmem>>, vector<1x1x16x32xf32>,
    %c3_i32 = arith.constant 3 : i32
    %201 = arith.truncf %196 : vector<16x32xf32> to vector<16x32xbf16>
    %c16_i32_91 = arith.constant 16 : i32
    %202 = arith.muli %c3_i32, %c16_i32_91 : i32
    %203 = tpu.assume_multiple %202, 8 : i32
    %204 = arith.index_cast %203 : i32 to index
    %c0_92 = arith.constant 0 : index
    %205 = vector.load %arg8[%204, %c0_92] : memref<128x128xf32, #tpu.memory_space<vmem>>, vector<16x128xf32>
    %c0_93 = arith.constant 0 : index
    %c0_94 = arith.constant 0 : index
    %c0_95 = arith.constant 0 : index
    %206 = vector.load %arg4[%c0_93, %c0_94, %c0_95] : memref<3x32x128xbf16, #tpu.memory_space<vmem>>, vector<1x32x128xbf16>
    %207 = vector.shape_cast %206 : vector<1x32x128xbf16> to vector<32x128xbf16>
    %cst_96 = arith.constant dense<0.000000e+00> : vector<16x128xf32>
    %208 = tpu.matmul %201, %207, %cst_96 {dimension_numbers = #tpu.dot_dimension_numbers<[1], [0], [0], [1], [0, 0, 1, 1], [], []>} : vector<16x32xbf16>, vector<32x128xbf16>, vector<16x128xf32> -> vector<16x128xf32>
    %c1_i32_97 = arith.constant 1 : i32
    %209 = tpu.dynamic_rotate %208 by %c1_i32_97 dim 0 : vector<16x128xf32>, i32 -> vector<16x128xf32>
    %cst_98 = arith.constant 0.000000e+00 : f32
    %210 = vector.shape_cast %26 : vector<16x1xi1> to vector<16x1xi1>
    %211 = vector.broadcast %210 : vector<16x1xi1> to vector<16x128xi1>
    %212 = vector.broadcast %cst_98 : f32 to vector<16x128xf32>
    %213 = arith.select %211, %209, %212 : vector<16x128xi1>, vector<16x128xf32>
    %214 = arith.addf %205, %213 : vector<16x128xf32>
    %c1_99 = arith.constant 1 : index
    %c0_100 = arith.constant 0 : index
    %c0_101 = arith.constant 0 : index
    %215 = vector.load %arg4[%c1_99, %c0_100, %c0_101] : memref<3x32x128xbf16, #tpu.memory_space<vmem>>, vector<1x32x128xbf16>
    %216 = vector.shape_cast %215 : vector<1x32x128xbf16> to vector<32x128xbf16>
    %cst_102 = arith.constant dense<0.000000e+00> : vector<16x128xf32>
    %217 = tpu.matmul %201, %216, %cst_102 {dimension_numbers = #tpu.dot_dimension_numbers<[1], [0], [0], [1], [0, 0, 1, 1], [], []>} : vector<16x32xbf16>, vector<32x128xbf16>, vector<16x128xf32> -> vector<16x128xf32>
    %218 = arith.addf %214, %217 : vector<16x128xf32>
    %c2_103 = arith.constant 2 : index
    %c0_104 = arith.constant 0 : index
    %c0_105 = arith.constant 0 : index
    %219 = vector.load %arg4[%c2_103, %c0_104, %c0_105] : memref<3x32x128xbf16, #tpu.memory_space<vmem>>, vector<1x32x128xbf16>
    %220 = vector.shape_cast %219 : vector<1x32x128xbf16> to vector<32x128xbf16>
    %cst_106 = arith.constant dense<0.000000e+00> : vector<16x128xf32>
    %221 = tpu.matmul %201, %220, %cst_106 {dimension_numbers = #tpu.dot_dimension_numbers<[1], [0], [0], [1], [0, 0, 1, 1], [], []>} : vector<16x32xbf16>, vector<32x128xbf16>, vector<16x128xf32> -> vector<16x128xf32>
    %c15_i32_107 = arith.constant 15 : i32
    %222 = tpu.dynamic_rotate %221 by %c15_i32_107 dim 0 : vector<16x128xf32>, i32 -> vector<16x128xf32>
    %cst_108 = arith.constant 0.000000e+00 : f32
    %223 = vector.shape_cast %28 : vector<16x1xi1> to vector<16x1xi1>
    %224 = vector.broadcast %223 : vector<16x1xi1> to vector<16x128xi1>
    %225 = vector.broadcast %cst_108 : f32 to vector<16x128xf32>
    %226 = arith.select %224, %222, %225 : vector<16x128xi1>, vector<16x128xf32>
    %227 = arith.addf %218, %226 : vector<16x128xf32>
    %228 = vector.extract_strided_slice %227 {offsets = [0, 0], sizes = [16, 32], strides = [1, 1]} : vector<16x128xf32> to vector<16x32xf32>
    %229 = arith.negf %228 : vector<16x32xf32>
    %230 = math.exp %229 : vector<16x32xf32>
    %cst_109 = arith.constant 1.000000e+00 : f32
    %231 = vector.broadcast %cst_109 : f32 to vector<16x32xf32>
    %232 = arith.addf %231, %230 : vector<16x32xf32>
    %233 = arith.divf %231, %232 : vector<16x32xf32>
    %234 = vector.extract_strided_slice %227 {offsets = [0, 32], sizes = [16, 32], strides = [1, 1]} : vector<16x128xf32> to vector<16x32xf32>
    %235 = arith.negf %234 : vector<16x32xf32>
    %236 = math.exp %235 : vector<16x32xf32>
    %cst_110 = arith.constant 1.000000e+00 : f32
    %237 = vector.broadcast %cst_110 : f32 to vector<16x32xf32>
    %238 = arith.addf %237, %236 : vector<16x32xf32>
    %239 = arith.divf %237, %238 : vector<16x32xf32>
    %240 = vector.extract_strided_slice %227 {offsets = [0, 64], sizes = [16, 32], strides = [1, 1]} : vector<16x128xf32> to vector<16x32xf32>
    %241 = arith.negf %240 : vector<16x32xf32>
    %242 = math.exp %241 : vector<16x32xf32>
    %cst_111 = arith.constant 1.000000e+00 : f32
    %243 = vector.broadcast %cst_111 : f32 to vector<16x32xf32>
    %244 = arith.addf %243, %242 : vector<16x32xf32>
    %245 = arith.divf %243, %244 : vector<16x32xf32>
    %246 = vector.extract_strided_slice %227 {offsets = [0, 96], sizes = [16, 32], strides = [1, 1]} : vector<16x128xf32> to vector<16x32xf32>
    %247 = math.tanh %246 : vector<16x32xf32>
    %248 = arith.mulf %239, %194 : vector<16x32xf32>
    %249 = arith.mulf %233, %247 : vector<16x32xf32>
    %250 = arith.addf %248, %249 : vector<16x32xf32>
    %251 = math.tanh %250 : vector<16x32xf32>
    %252 = arith.mulf %245, %251 : vector<16x32xf32>
    %c0_112 = arith.constant 0 : index
    %c0_113 = arith.constant 0 : index
    %253 = arith.index_cast %203 : i32 to index
    %c0_114 = arith.constant 0 : index
    %254 = vector.load %arg5[%c0_112, %c0_113, %253, %c0_114] : memref<1x1x128x32xf32, #tpu.memory_space<vmem>>, vector<1x1x16x32xf32>
    %255 = vector.shape_cast %254 : vector<1x1x16x32xf32> to vector<16x32xf32>
    %256 = vector.shape_cast %252 : vector<16x32xf32> to vector<1x1x16x32xf32>
    tpu.vector_store %arg5[%c0_112, %c0_113, %253, %c0_114], %256 {strides = array<i32>} : memref<1x1x128x32xf32, #tpu.memory_space<vmem>>, vector<1x1x16x32xf32>,
    %c4_i32 = arith.constant 4 : i32
    %257 = arith.truncf %252 : vector<16x32xf32> to vector<16x32xbf16>
    %c16_i32_115 = arith.constant 16 : i32
    %258 = arith.muli %c4_i32, %c16_i32_115 : i32
    %259 = tpu.assume_multiple %258, 8 : i32
    %260 = arith.index_cast %259 : i32 to index
    %c0_116 = arith.constant 0 : index
    %261 = vector.load %arg8[%260, %c0_116] : memref<128x128xf32, #tpu.memory_space<vmem>>, vector<16x128xf32>
    %c0_117 = arith.constant 0 : index
    %c0_118 = arith.constant 0 : index
    %c0_119 = arith.constant 0 : index
    %262 = vector.load %arg4[%c0_117, %c0_118, %c0_119] : memref<3x32x128xbf16, #tpu.memory_space<vmem>>, vector<1x32x128xbf16>
    %263 = vector.shape_cast %262 : vector<1x32x128xbf16> to vector<32x128xbf16>
    %cst_120 = arith.constant dense<0.000000e+00> : vector<16x128xf32>
    %264 = tpu.matmul %257, %263, %cst_120 {dimension_numbers = #tpu.dot_dimension_numbers<[1], [0], [0], [1], [0, 0, 1, 1], [], []>} : vector<16x32xbf16>, vector<32x128xbf16>, vector<16x128xf32> -> vector<16x128xf32>
    %c1_i32_121 = arith.constant 1 : i32
    %265 = tpu.dynamic_rotate %264 by %c1_i32_121 dim 0 : vector<16x128xf32>, i32 -> vector<16x128xf32>
    %cst_122 = arith.constant 0.000000e+00 : f32
    %266 = vector.shape_cast %26 : vector<16x1xi1> to vector<16x1xi1>
    %267 = vector.broadcast %266 : vector<16x1xi1> to vector<16x128xi1>
    %268 = vector.broadcast %cst_122 : f32 to vector<16x128xf32>
    %269 = arith.select %267, %265, %268 : vector<16x128xi1>, vector<16x128xf32>
    %270 = arith.addf %261, %269 : vector<16x128xf32>
    %c1_123 = arith.constant 1 : index
    %c0_124 = arith.constant 0 : index
    %c0_125 = arith.constant 0 : index
    %271 = vector.load %arg4[%c1_123, %c0_124, %c0_125] : memref<3x32x128xbf16, #tpu.memory_space<vmem>>, vector<1x32x128xbf16>
    %272 = vector.shape_cast %271 : vector<1x32x128xbf16> to vector<32x128xbf16>
    %cst_126 = arith.constant dense<0.000000e+00> : vector<16x128xf32>
    %273 = tpu.matmul %257, %272, %cst_126 {dimension_numbers = #tpu.dot_dimension_numbers<[1], [0], [0], [1], [0, 0, 1, 1], [], []>} : vector<16x32xbf16>, vector<32x128xbf16>, vector<16x128xf32> -> vector<16x128xf32>
    %274 = arith.addf %270, %273 : vector<16x128xf32>
    %c2_127 = arith.constant 2 : index
    %c0_128 = arith.constant 0 : index
    %c0_129 = arith.constant 0 : index
    %275 = vector.load %arg4[%c2_127, %c0_128, %c0_129] : memref<3x32x128xbf16, #tpu.memory_space<vmem>>, vector<1x32x128xbf16>
    %276 = vector.shape_cast %275 : vector<1x32x128xbf16> to vector<32x128xbf16>
    %cst_130 = arith.constant dense<0.000000e+00> : vector<16x128xf32>
    %277 = tpu.matmul %257, %276, %cst_130 {dimension_numbers = #tpu.dot_dimension_numbers<[1], [0], [0], [1], [0, 0, 1, 1], [], []>} : vector<16x32xbf16>, vector<32x128xbf16>, vector<16x128xf32> -> vector<16x128xf32>
    %c15_i32_131 = arith.constant 15 : i32
    %278 = tpu.dynamic_rotate %277 by %c15_i32_131 dim 0 : vector<16x128xf32>, i32 -> vector<16x128xf32>
    %cst_132 = arith.constant 0.000000e+00 : f32
    %279 = vector.shape_cast %28 : vector<16x1xi1> to vector<16x1xi1>
    %280 = vector.broadcast %279 : vector<16x1xi1> to vector<16x128xi1>
    %281 = vector.broadcast %cst_132 : f32 to vector<16x128xf32>
    %282 = arith.select %280, %278, %281 : vector<16x128xi1>, vector<16x128xf32>
    %283 = arith.addf %274, %282 : vector<16x128xf32>
    %284 = vector.extract_strided_slice %283 {offsets = [0, 0], sizes = [16, 32], strides = [1, 1]} : vector<16x128xf32> to vector<16x32xf32>
    %285 = arith.negf %284 : vector<16x32xf32>
    %286 = math.exp %285 : vector<16x32xf32>
    %cst_133 = arith.constant 1.000000e+00 : f32
    %287 = vector.broadcast %cst_133 : f32 to vector<16x32xf32>
    %288 = arith.addf %287, %286 : vector<16x32xf32>
    %289 = arith.divf %287, %288 : vector<16x32xf32>
    %290 = vector.extract_strided_slice %283 {offsets = [0, 32], sizes = [16, 32], strides = [1, 1]} : vector<16x128xf32> to vector<16x32xf32>
    %291 = arith.negf %290 : vector<16x32xf32>
    %292 = math.exp %291 : vector<16x32xf32>
    %cst_134 = arith.constant 1.000000e+00 : f32
    %293 = vector.broadcast %cst_134 : f32 to vector<16x32xf32>
    %294 = arith.addf %293, %292 : vector<16x32xf32>
    %295 = arith.divf %293, %294 : vector<16x32xf32>
    %296 = vector.extract_strided_slice %283 {offsets = [0, 64], sizes = [16, 32], strides = [1, 1]} : vector<16x128xf32> to vector<16x32xf32>
    %297 = arith.negf %296 : vector<16x32xf32>
    %298 = math.exp %297 : vector<16x32xf32>
    %cst_135 = arith.constant 1.000000e+00 : f32
    %299 = vector.broadcast %cst_135 : f32 to vector<16x32xf32>
    %300 = arith.addf %299, %298 : vector<16x32xf32>
    %301 = arith.divf %299, %300 : vector<16x32xf32>
    %302 = vector.extract_strided_slice %283 {offsets = [0, 96], sizes = [16, 32], strides = [1, 1]} : vector<16x128xf32> to vector<16x32xf32>
    %303 = math.tanh %302 : vector<16x32xf32>
    %304 = arith.mulf %295, %250 : vector<16x32xf32>
    %305 = arith.mulf %289, %303 : vector<16x32xf32>
    %306 = arith.addf %304, %305 : vector<16x32xf32>
    %307 = math.tanh %306 : vector<16x32xf32>
    %308 = arith.mulf %301, %307 : vector<16x32xf32>
    %c0_136 = arith.constant 0 : index
    %c0_137 = arith.constant 0 : index
    %309 = arith.index_cast %259 : i32 to index
    %c0_138 = arith.constant 0 : index
    %310 = vector.load %arg5[%c0_136, %c0_137, %309, %c0_138] : memref<1x1x128x32xf32, #tpu.memory_space<vmem>>, vector<1x1x16x32xf32>
    %311 = vector.shape_cast %310 : vector<1x1x16x32xf32> to vector<16x32xf32>
    %312 = vector.shape_cast %308 : vector<16x32xf32> to vector<1x1x16x32xf32>
    tpu.vector_store %arg5[%c0_136, %c0_137, %309, %c0_138], %312 {strides = array<i32>} : memref<1x1x128x32xf32, #tpu.memory_space<vmem>>, vector<1x1x16x32xf32>,
    %c5_i32 = arith.constant 5 : i32
    %313 = arith.truncf %308 : vector<16x32xf32> to vector<16x32xbf16>
    %c16_i32_139 = arith.constant 16 : i32
    %314 = arith.muli %c5_i32, %c16_i32_139 : i32
    %315 = tpu.assume_multiple %314, 8 : i32
    %316 = arith.index_cast %315 : i32 to index
    %c0_140 = arith.constant 0 : index
    %317 = vector.load %arg8[%316, %c0_140] : memref<128x128xf32, #tpu.memory_space<vmem>>, vector<16x128xf32>
    %c0_141 = arith.constant 0 : index
    %c0_142 = arith.constant 0 : index
    %c0_143 = arith.constant 0 : index
    %318 = vector.load %arg4[%c0_141, %c0_142, %c0_143] : memref<3x32x128xbf16, #tpu.memory_space<vmem>>, vector<1x32x128xbf16>
    %319 = vector.shape_cast %318 : vector<1x32x128xbf16> to vector<32x128xbf16>
    %cst_144 = arith.constant dense<0.000000e+00> : vector<16x128xf32>
    %320 = tpu.matmul %313, %319, %cst_144 {dimension_numbers = #tpu.dot_dimension_numbers<[1], [0], [0], [1], [0, 0, 1, 1], [], []>} : vector<16x32xbf16>, vector<32x128xbf16>, vector<16x128xf32> -> vector<16x128xf32>
    %c1_i32_145 = arith.constant 1 : i32
    %321 = tpu.dynamic_rotate %320 by %c1_i32_145 dim 0 : vector<16x128xf32>, i32 -> vector<16x128xf32>
    %cst_146 = arith.constant 0.000000e+00 : f32
    %322 = vector.shape_cast %26 : vector<16x1xi1> to vector<16x1xi1>
    %323 = vector.broadcast %322 : vector<16x1xi1> to vector<16x128xi1>
    %324 = vector.broadcast %cst_146 : f32 to vector<16x128xf32>
    %325 = arith.select %323, %321, %324 : vector<16x128xi1>, vector<16x128xf32>
    %326 = arith.addf %317, %325 : vector<16x128xf32>
    %c1_147 = arith.constant 1 : index
    %c0_148 = arith.constant 0 : index
    %c0_149 = arith.constant 0 : index
    %327 = vector.load %arg4[%c1_147, %c0_148, %c0_149] : memref<3x32x128xbf16, #tpu.memory_space<vmem>>, vector<1x32x128xbf16>
    %328 = vector.shape_cast %327 : vector<1x32x128xbf16> to vector<32x128xbf16>
    %cst_150 = arith.constant dense<0.000000e+00> : vector<16x128xf32>
    %329 = tpu.matmul %313, %328, %cst_150 {dimension_numbers = #tpu.dot_dimension_numbers<[1], [0], [0], [1], [0, 0, 1, 1], [], []>} : vector<16x32xbf16>, vector<32x128xbf16>, vector<16x128xf32> -> vector<16x128xf32>
    %330 = arith.addf %326, %329 : vector<16x128xf32>
    %c2_151 = arith.constant 2 : index
    %c0_152 = arith.constant 0 : index
    %c0_153 = arith.constant 0 : index
    %331 = vector.load %arg4[%c2_151, %c0_152, %c0_153] : memref<3x32x128xbf16, #tpu.memory_space<vmem>>, vector<1x32x128xbf16>
    %332 = vector.shape_cast %331 : vector<1x32x128xbf16> to vector<32x128xbf16>
    %cst_154 = arith.constant dense<0.000000e+00> : vector<16x128xf32>
    %333 = tpu.matmul %313, %332, %cst_154 {dimension_numbers = #tpu.dot_dimension_numbers<[1], [0], [0], [1], [0, 0, 1, 1], [], []>} : vector<16x32xbf16>, vector<32x128xbf16>, vector<16x128xf32> -> vector<16x128xf32>
    %c15_i32_155 = arith.constant 15 : i32
    %334 = tpu.dynamic_rotate %333 by %c15_i32_155 dim 0 : vector<16x128xf32>, i32 -> vector<16x128xf32>
    %cst_156 = arith.constant 0.000000e+00 : f32
    %335 = vector.shape_cast %28 : vector<16x1xi1> to vector<16x1xi1>
    %336 = vector.broadcast %335 : vector<16x1xi1> to vector<16x128xi1>
    %337 = vector.broadcast %cst_156 : f32 to vector<16x128xf32>
    %338 = arith.select %336, %334, %337 : vector<16x128xi1>, vector<16x128xf32>
    %339 = arith.addf %330, %338 : vector<16x128xf32>
    %340 = vector.extract_strided_slice %339 {offsets = [0, 0], sizes = [16, 32], strides = [1, 1]} : vector<16x128xf32> to vector<16x32xf32>
    %341 = arith.negf %340 : vector<16x32xf32>
    %342 = math.exp %341 : vector<16x32xf32>
    %cst_157 = arith.constant 1.000000e+00 : f32
    %343 = vector.broadcast %cst_157 : f32 to vector<16x32xf32>
    %344 = arith.addf %343, %342 : vector<16x32xf32>
    %345 = arith.divf %343, %344 : vector<16x32xf32>
    %346 = vector.extract_strided_slice %339 {offsets = [0, 32], sizes = [16, 32], strides = [1, 1]} : vector<16x128xf32> to vector<16x32xf32>
    %347 = arith.negf %346 : vector<16x32xf32>
    %348 = math.exp %347 : vector<16x32xf32>
    %cst_158 = arith.constant 1.000000e+00 : f32
    %349 = vector.broadcast %cst_158 : f32 to vector<16x32xf32>
    %350 = arith.addf %349, %348 : vector<16x32xf32>
    %351 = arith.divf %349, %350 : vector<16x32xf32>
    %352 = vector.extract_strided_slice %339 {offsets = [0, 64], sizes = [16, 32], strides = [1, 1]} : vector<16x128xf32> to vector<16x32xf32>
    %353 = arith.negf %352 : vector<16x32xf32>
    %354 = math.exp %353 : vector<16x32xf32>
    %cst_159 = arith.constant 1.000000e+00 : f32
    %355 = vector.broadcast %cst_159 : f32 to vector<16x32xf32>
    %356 = arith.addf %355, %354 : vector<16x32xf32>
    %357 = arith.divf %355, %356 : vector<16x32xf32>
    %358 = vector.extract_strided_slice %339 {offsets = [0, 96], sizes = [16, 32], strides = [1, 1]} : vector<16x128xf32> to vector<16x32xf32>
    %359 = math.tanh %358 : vector<16x32xf32>
    %360 = arith.mulf %351, %306 : vector<16x32xf32>
    %361 = arith.mulf %345, %359 : vector<16x32xf32>
    %362 = arith.addf %360, %361 : vector<16x32xf32>
    %363 = math.tanh %362 : vector<16x32xf32>
    %364 = arith.mulf %357, %363 : vector<16x32xf32>
    %c0_160 = arith.constant 0 : index
    %c0_161 = arith.constant 0 : index
    %365 = arith.index_cast %315 : i32 to index
    %c0_162 = arith.constant 0 : index
    %366 = vector.load %arg5[%c0_160, %c0_161, %365, %c0_162] : memref<1x1x128x32xf32, #tpu.memory_space<vmem>>, vector<1x1x16x32xf32>
    %367 = vector.shape_cast %366 : vector<1x1x16x32xf32> to vector<16x32xf32>
    %368 = vector.shape_cast %364 : vector<16x32xf32> to vector<1x1x16x32xf32>
    tpu.vector_store %arg5[%c0_160, %c0_161, %365, %c0_162], %368 {strides = array<i32>} : memref<1x1x128x32xf32, #tpu.memory_space<vmem>>, vector<1x1x16x32xf32>,
    %c6_i32 = arith.constant 6 : i32
    %369 = arith.truncf %364 : vector<16x32xf32> to vector<16x32xbf16>
    %c16_i32_163 = arith.constant 16 : i32
    %370 = arith.muli %c6_i32, %c16_i32_163 : i32
    %371 = tpu.assume_multiple %370, 8 : i32
    %372 = arith.index_cast %371 : i32 to index
    %c0_164 = arith.constant 0 : index
    %373 = vector.load %arg8[%372, %c0_164] : memref<128x128xf32, #tpu.memory_space<vmem>>, vector<16x128xf32>
    %c0_165 = arith.constant 0 : index
    %c0_166 = arith.constant 0 : index
    %c0_167 = arith.constant 0 : index
    %374 = vector.load %arg4[%c0_165, %c0_166, %c0_167] : memref<3x32x128xbf16, #tpu.memory_space<vmem>>, vector<1x32x128xbf16>
    %375 = vector.shape_cast %374 : vector<1x32x128xbf16> to vector<32x128xbf16>
    %cst_168 = arith.constant dense<0.000000e+00> : vector<16x128xf32>
    %376 = tpu.matmul %369, %375, %cst_168 {dimension_numbers = #tpu.dot_dimension_numbers<[1], [0], [0], [1], [0, 0, 1, 1], [], []>} : vector<16x32xbf16>, vector<32x128xbf16>, vector<16x128xf32> -> vector<16x128xf32>
    %c1_i32_169 = arith.constant 1 : i32
    %377 = tpu.dynamic_rotate %376 by %c1_i32_169 dim 0 : vector<16x128xf32>, i32 -> vector<16x128xf32>
    %cst_170 = arith.constant 0.000000e+00 : f32
    %378 = vector.shape_cast %26 : vector<16x1xi1> to vector<16x1xi1>
    %379 = vector.broadcast %378 : vector<16x1xi1> to vector<16x128xi1>
    %380 = vector.broadcast %cst_170 : f32 to vector<16x128xf32>
    %381 = arith.select %379, %377, %380 : vector<16x128xi1>, vector<16x128xf32>
    %382 = arith.addf %373, %381 : vector<16x128xf32>
    %c1_171 = arith.constant 1 : index
    %c0_172 = arith.constant 0 : index
    %c0_173 = arith.constant 0 : index
    %383 = vector.load %arg4[%c1_171, %c0_172, %c0_173] : memref<3x32x128xbf16, #tpu.memory_space<vmem>>, vector<1x32x128xbf16>
    %384 = vector.shape_cast %383 : vector<1x32x128xbf16> to vector<32x128xbf16>
    %cst_174 = arith.constant dense<0.000000e+00> : vector<16x128xf32>
    %385 = tpu.matmul %369, %384, %cst_174 {dimension_numbers = #tpu.dot_dimension_numbers<[1], [0], [0], [1], [0, 0, 1, 1], [], []>} : vector<16x32xbf16>, vector<32x128xbf16>, vector<16x128xf32> -> vector<16x128xf32>
    %386 = arith.addf %382, %385 : vector<16x128xf32>
    %c2_175 = arith.constant 2 : index
    %c0_176 = arith.constant 0 : index
    %c0_177 = arith.constant 0 : index
    %387 = vector.load %arg4[%c2_175, %c0_176, %c0_177] : memref<3x32x128xbf16, #tpu.memory_space<vmem>>, vector<1x32x128xbf16>
    %388 = vector.shape_cast %387 : vector<1x32x128xbf16> to vector<32x128xbf16>
    %cst_178 = arith.constant dense<0.000000e+00> : vector<16x128xf32>
    %389 = tpu.matmul %369, %388, %cst_178 {dimension_numbers = #tpu.dot_dimension_numbers<[1], [0], [0], [1], [0, 0, 1, 1], [], []>} : vector<16x32xbf16>, vector<32x128xbf16>, vector<16x128xf32> -> vector<16x128xf32>
    %c15_i32_179 = arith.constant 15 : i32
    %390 = tpu.dynamic_rotate %389 by %c15_i32_179 dim 0 : vector<16x128xf32>, i32 -> vector<16x128xf32>
    %cst_180 = arith.constant 0.000000e+00 : f32
    %391 = vector.shape_cast %28 : vector<16x1xi1> to vector<16x1xi1>
    %392 = vector.broadcast %391 : vector<16x1xi1> to vector<16x128xi1>
    %393 = vector.broadcast %cst_180 : f32 to vector<16x128xf32>
    %394 = arith.select %392, %390, %393 : vector<16x128xi1>, vector<16x128xf32>
    %395 = arith.addf %386, %394 : vector<16x128xf32>
    %396 = vector.extract_strided_slice %395 {offsets = [0, 0], sizes = [16, 32], strides = [1, 1]} : vector<16x128xf32> to vector<16x32xf32>
    %397 = arith.negf %396 : vector<16x32xf32>
    %398 = math.exp %397 : vector<16x32xf32>
    %cst_181 = arith.constant 1.000000e+00 : f32
    %399 = vector.broadcast %cst_181 : f32 to vector<16x32xf32>
    %400 = arith.addf %399, %398 : vector<16x32xf32>
    %401 = arith.divf %399, %400 : vector<16x32xf32>
    %402 = vector.extract_strided_slice %395 {offsets = [0, 32], sizes = [16, 32], strides = [1, 1]} : vector<16x128xf32> to vector<16x32xf32>
    %403 = arith.negf %402 : vector<16x32xf32>
    %404 = math.exp %403 : vector<16x32xf32>
    %cst_182 = arith.constant 1.000000e+00 : f32
    %405 = vector.broadcast %cst_182 : f32 to vector<16x32xf32>
    %406 = arith.addf %405, %404 : vector<16x32xf32>
    %407 = arith.divf %405, %406 : vector<16x32xf32>
    %408 = vector.extract_strided_slice %395 {offsets = [0, 64], sizes = [16, 32], strides = [1, 1]} : vector<16x128xf32> to vector<16x32xf32>
    %409 = arith.negf %408 : vector<16x32xf32>
    %410 = math.exp %409 : vector<16x32xf32>
    %cst_183 = arith.constant 1.000000e+00 : f32
    %411 = vector.broadcast %cst_183 : f32 to vector<16x32xf32>
    %412 = arith.addf %411, %410 : vector<16x32xf32>
    %413 = arith.divf %411, %412 : vector<16x32xf32>
    %414 = vector.extract_strided_slice %395 {offsets = [0, 96], sizes = [16, 32], strides = [1, 1]} : vector<16x128xf32> to vector<16x32xf32>
    %415 = math.tanh %414 : vector<16x32xf32>
    %416 = arith.mulf %407, %362 : vector<16x32xf32>
    %417 = arith.mulf %401, %415 : vector<16x32xf32>
    %418 = arith.addf %416, %417 : vector<16x32xf32>
    %419 = math.tanh %418 : vector<16x32xf32>
    %420 = arith.mulf %413, %419 : vector<16x32xf32>
    %c0_184 = arith.constant 0 : index
    %c0_185 = arith.constant 0 : index
    %421 = arith.index_cast %371 : i32 to index
    %c0_186 = arith.constant 0 : index
    %422 = vector.load %arg5[%c0_184, %c0_185, %421, %c0_186] : memref<1x1x128x32xf32, #tpu.memory_space<vmem>>, vector<1x1x16x32xf32>
    %423 = vector.shape_cast %422 : vector<1x1x16x32xf32> to vector<16x32xf32>
    %424 = vector.shape_cast %420 : vector<16x32xf32> to vector<1x1x16x32xf32>
    tpu.vector_store %arg5[%c0_184, %c0_185, %421, %c0_186], %424 {strides = array<i32>} : memref<1x1x128x32xf32, #tpu.memory_space<vmem>>, vector<1x1x16x32xf32>,
    %c7_i32 = arith.constant 7 : i32
    %425 = arith.truncf %420 : vector<16x32xf32> to vector<16x32xbf16>
    %c16_i32_187 = arith.constant 16 : i32
    %426 = arith.muli %c7_i32, %c16_i32_187 : i32
    %427 = tpu.assume_multiple %426, 8 : i32
    %428 = arith.index_cast %427 : i32 to index
    %c0_188 = arith.constant 0 : index
    %429 = vector.load %arg8[%428, %c0_188] : memref<128x128xf32, #tpu.memory_space<vmem>>, vector<16x128xf32>
    %c0_189 = arith.constant 0 : index
    %c0_190 = arith.constant 0 : index
    %c0_191 = arith.constant 0 : index
    %430 = vector.load %arg4[%c0_189, %c0_190, %c0_191] : memref<3x32x128xbf16, #tpu.memory_space<vmem>>, vector<1x32x128xbf16>
    %431 = vector.shape_cast %430 : vector<1x32x128xbf16> to vector<32x128xbf16>
    %cst_192 = arith.constant dense<0.000000e+00> : vector<16x128xf32>
    %432 = tpu.matmul %425, %431, %cst_192 {dimension_numbers = #tpu.dot_dimension_numbers<[1], [0], [0], [1], [0, 0, 1, 1], [], []>} : vector<16x32xbf16>, vector<32x128xbf16>, vector<16x128xf32> -> vector<16x128xf32>
    %c1_i32_193 = arith.constant 1 : i32
    %433 = tpu.dynamic_rotate %432 by %c1_i32_193 dim 0 : vector<16x128xf32>, i32 -> vector<16x128xf32>
    %cst_194 = arith.constant 0.000000e+00 : f32
    %434 = vector.shape_cast %26 : vector<16x1xi1> to vector<16x1xi1>
    %435 = vector.broadcast %434 : vector<16x1xi1> to vector<16x128xi1>
    %436 = vector.broadcast %cst_194 : f32 to vector<16x128xf32>
    %437 = arith.select %435, %433, %436 : vector<16x128xi1>, vector<16x128xf32>
    %438 = arith.addf %429, %437 : vector<16x128xf32>
    %c1_195 = arith.constant 1 : index
    %c0_196 = arith.constant 0 : index
    %c0_197 = arith.constant 0 : index
    %439 = vector.load %arg4[%c1_195, %c0_196, %c0_197] : memref<3x32x128xbf16, #tpu.memory_space<vmem>>, vector<1x32x128xbf16>
    %440 = vector.shape_cast %439 : vector<1x32x128xbf16> to vector<32x128xbf16>
    %cst_198 = arith.constant dense<0.000000e+00> : vector<16x128xf32>
    %441 = tpu.matmul %425, %440, %cst_198 {dimension_numbers = #tpu.dot_dimension_numbers<[1], [0], [0], [1], [0, 0, 1, 1], [], []>} : vector<16x32xbf16>, vector<32x128xbf16>, vector<16x128xf32> -> vector<16x128xf32>
    %442 = arith.addf %438, %441 : vector<16x128xf32>
    %c2_199 = arith.constant 2 : index
    %c0_200 = arith.constant 0 : index
    %c0_201 = arith.constant 0 : index
    %443 = vector.load %arg4[%c2_199, %c0_200, %c0_201] : memref<3x32x128xbf16, #tpu.memory_space<vmem>>, vector<1x32x128xbf16>
    %444 = vector.shape_cast %443 : vector<1x32x128xbf16> to vector<32x128xbf16>
    %cst_202 = arith.constant dense<0.000000e+00> : vector<16x128xf32>
    %445 = tpu.matmul %425, %444, %cst_202 {dimension_numbers = #tpu.dot_dimension_numbers<[1], [0], [0], [1], [0, 0, 1, 1], [], []>} : vector<16x32xbf16>, vector<32x128xbf16>, vector<16x128xf32> -> vector<16x128xf32>
    %c15_i32_203 = arith.constant 15 : i32
    %446 = tpu.dynamic_rotate %445 by %c15_i32_203 dim 0 : vector<16x128xf32>, i32 -> vector<16x128xf32>
    %cst_204 = arith.constant 0.000000e+00 : f32
    %447 = vector.shape_cast %28 : vector<16x1xi1> to vector<16x1xi1>
    %448 = vector.broadcast %447 : vector<16x1xi1> to vector<16x128xi1>
    %449 = vector.broadcast %cst_204 : f32 to vector<16x128xf32>
    %450 = arith.select %448, %446, %449 : vector<16x128xi1>, vector<16x128xf32>
    %451 = arith.addf %442, %450 : vector<16x128xf32>
    %452 = vector.extract_strided_slice %451 {offsets = [0, 0], sizes = [16, 32], strides = [1, 1]} : vector<16x128xf32> to vector<16x32xf32>
    %453 = arith.negf %452 : vector<16x32xf32>
    %454 = math.exp %453 : vector<16x32xf32>
    %cst_205 = arith.constant 1.000000e+00 : f32
    %455 = vector.broadcast %cst_205 : f32 to vector<16x32xf32>
    %456 = arith.addf %455, %454 : vector<16x32xf32>
    %457 = arith.divf %455, %456 : vector<16x32xf32>
    %458 = vector.extract_strided_slice %451 {offsets = [0, 32], sizes = [16, 32], strides = [1, 1]} : vector<16x128xf32> to vector<16x32xf32>
    %459 = arith.negf %458 : vector<16x32xf32>
    %460 = math.exp %459 : vector<16x32xf32>
    %cst_206 = arith.constant 1.000000e+00 : f32
    %461 = vector.broadcast %cst_206 : f32 to vector<16x32xf32>
    %462 = arith.addf %461, %460 : vector<16x32xf32>
    %463 = arith.divf %461, %462 : vector<16x32xf32>
    %464 = vector.extract_strided_slice %451 {offsets = [0, 64], sizes = [16, 32], strides = [1, 1]} : vector<16x128xf32> to vector<16x32xf32>
    %465 = arith.negf %464 : vector<16x32xf32>
    %466 = math.exp %465 : vector<16x32xf32>
    %cst_207 = arith.constant 1.000000e+00 : f32
    %467 = vector.broadcast %cst_207 : f32 to vector<16x32xf32>
    %468 = arith.addf %467, %466 : vector<16x32xf32>
    %469 = arith.divf %467, %468 : vector<16x32xf32>
    %470 = vector.extract_strided_slice %451 {offsets = [0, 96], sizes = [16, 32], strides = [1, 1]} : vector<16x128xf32> to vector<16x32xf32>
    %471 = math.tanh %470 : vector<16x32xf32>
    %472 = arith.mulf %463, %418 : vector<16x32xf32>
    %473 = arith.mulf %457, %471 : vector<16x32xf32>
    %474 = arith.addf %472, %473 : vector<16x32xf32>
    %475 = math.tanh %474 : vector<16x32xf32>
    %476 = arith.mulf %469, %475 : vector<16x32xf32>
    %c0_208 = arith.constant 0 : index
    %c0_209 = arith.constant 0 : index
    %477 = arith.index_cast %427 : i32 to index
    %c0_210 = arith.constant 0 : index
    %478 = vector.load %arg5[%c0_208, %c0_209, %477, %c0_210] : memref<1x1x128x32xf32, #tpu.memory_space<vmem>>, vector<1x1x16x32xf32>
    %479 = vector.shape_cast %478 : vector<1x1x16x32xf32> to vector<16x32xf32>
    %480 = vector.shape_cast %476 : vector<16x32xf32> to vector<1x1x16x32xf32>
    tpu.vector_store %arg5[%c0_208, %c0_209, %477, %c0_210], %480 {strides = array<i32>} : memref<1x1x128x32xf32, #tpu.memory_space<vmem>>, vector<1x1x16x32xf32>,
    %c8_i32 = arith.constant 8 : i32
    %c0_211 = arith.constant 0 : index
    %c0_212 = arith.constant 0 : index
    %c0_213 = arith.constant 0 : index
    %481 = vector.load %arg6[%c0_211, %c0_212, %c0_213] : memref<1x16x32xf32, #tpu.memory_space<vmem>>, vector<1x16x32xf32>
    %482 = vector.shape_cast %481 : vector<1x16x32xf32> to vector<16x32xf32>
    %483 = vector.shape_cast %476 : vector<16x32xf32> to vector<1x16x32xf32>
    tpu.vector_store %arg6[%c0_211, %c0_212, %c0_213], %483 {strides = array<i32>} : memref<1x16x32xf32, #tpu.memory_space<vmem>>, vector<1x16x32xf32>,
    %c0_214 = arith.constant 0 : index
    %c0_215 = arith.constant 0 : index
    %c0_216 = arith.constant 0 : index
    %484 = vector.load %arg7[%c0_214, %c0_215, %c0_216] : memref<1x16x32xf32, #tpu.memory_space<vmem>>, vector<1x16x32xf32>
    %485 = vector.shape_cast %484 : vector<1x16x32xf32> to vector<16x32xf32>
    %486 = vector.shape_cast %474 : vector<16x32xf32> to vector<1x16x32xf32>
    tpu.vector_store %arg7[%c0_214, %c0_215, %c0_216], %486 {strides = array<i32>} : memref<1x16x32xf32, #tpu.memory_space<vmem>>, vector<1x16x32xf32>,
    return
  }
  func.func @transform_0(%arg0: i32, %arg1: i32) -> (i32, i32, i32, i32) {
    %c0_i32 = arith.constant 0 : i32
    %c0_i32_0 = arith.constant 0 : i32
    %c0_i32_1 = arith.constant 0 : i32
    return %arg0, %arg1, %c0_i32, %c0_i32_0 : i32, i32, i32, i32
  }
  func.func @transform_1(%arg0: i32, %arg1: i32) -> (i32, i32) {
    %c0_i32 = arith.constant 0 : i32
    %c0_i32_0 = arith.constant 0 : i32
    %c0_i32_1 = arith.constant 0 : i32
    return %c0_i32, %c0_i32_0 : i32, i32
  }
  func.func @transform_2(%arg0: i32, %arg1: i32) -> (i32, i32, i32) {
    %c0_i32 = arith.constant 0 : i32
    %c0_i32_0 = arith.constant 0 : i32
    %c0_i32_1 = arith.constant 0 : i32
    %c0_i32_2 = arith.constant 0 : i32
    return %c0_i32, %c0_i32_0, %c0_i32_1 : i32, i32, i32
  }
  func.func @transform_3(%arg0: i32, %arg1: i32) -> (i32, i32, i32, i32) {
    %c0_i32 = arith.constant 0 : i32
    %c0_i32_0 = arith.constant 0 : i32
    %c0_i32_1 = arith.constant 0 : i32
    return %arg0, %arg1, %c0_i32, %c0_i32_0 : i32, i32, i32, i32
  }
  func.func @transform_4(%arg0: i32, %arg1: i32) -> (i32, i32, i32) {
    %c0_i32 = arith.constant 0 : i32
    %c0_i32_0 = arith.constant 0 : i32
    %c0_i32_1 = arith.constant 0 : i32
    return %arg0, %c0_i32, %c0_i32_0 : i32, i32, i32
  }
  func.func @transform_5(%arg0: i32, %arg1: i32) -> (i32, i32, i32) {
    %c0_i32 = arith.constant 0 : i32
    %c0_i32_0 = arith.constant 0 : i32
    %c0_i32_1 = arith.constant 0 : i32
    return %arg0, %c0_i32, %c0_i32_0 : i32, i32, i32
  }
}

</mosaic_0001>

<llo_original>
// kernel: tpu_custom_call.1
$region0: #{tpu_custom_call.1}
  #allocation0 [shape = 'u32[]', space=smem, size = 0x4, offset = 0x4, fixed_abs, tag = 'smem constant byte address 0x4 - core index']
  #allocation1 [shape = 'u32[144,128]{1,0:T(1,128)}', space=vmem, size = 0x12000, scoped, tag = 'internal scratch']
  #allocation2 [shape = 'f32[128,128]{1,0:T(8,128)}', space=vmem, size = 0x10000, scoped, tag = 'scratch operand']
  %s0 = inlined_call_operand.vmem [shape: bf16[2,1,128,13], index: 0, kind: input, shape index: {}]
  %s1 = inlined_call_operand.vmem [shape: bf16[13,128], index: 1, kind: input, shape index: {}]
  %s2 = inlined_call_operand.vmem [shape: bf16[3,32,128], index: 2, kind: input, shape index: {}]
  %s3 = inlined_call_operand.vmem [shape: f32[2,1,128,32], index: 3, kind: output, shape index: {0}]
  %s4 = inlined_call_operand.hbm [shape: f32[2,16,32], index: 4, kind: output, shape index: {1}]
  %s5 = inlined_call_operand.hbm [shape: f32[2,16,32], index: 5, kind: output, shape index: {2}]
  %6 = xla_tuple %s3, %s4, %s5
  %s7 = sld [smem:[#allocation0]]
  $region65: #{tpu_custom_call.1} parent=0
    _
  %s9 = ssub.s32 1, %s7
  %s10 = scalar_select 0, %s9, %s7
  $region1: #{tpu_custom_call.1} parent=0
    #allocation3 [shape = 'u8[16384]{0}', space=vmem, size = 0x4000, scoped, tag = 'output window, operand 1']
    #allocation4 [shape = 's32[2]{0}', space=sflag, size = 0x8, scoped, tag = 'scoped memory for tpu_custom_call.1']
    #allocation5 [shape = 'u8[16384]{0}', space=vmem, size = 0x4000, scoped, tag = 'output window, operand 2']
    #allocation6 [shape = 's32[2]{0}', space=sflag, size = 0x8, scoped, tag = 'scoped memory for tpu_custom_call.1']
    %11 = vsyncpa [#allocation4], 0
    %s12 = scalar_lea.sflag [#allocation4], 1
    %13 = vsyncpa %s12, 0
    %14 = vsyncpa [#allocation6], 0
    %s15 = scalar_lea.sflag [#allocation6], 1
    %16 = vsyncpa %s15, 0
    loop: start=0, step=1, limit=4
    $region2: #{tpu_custom_call.1} parent=1 // loop_pre_header
      _
    $region3: #{tpu_custom_call.1} parent=1 // loop_header
      %s18 = sphi 0, %s22
      %p19 = scmp.ge.s32.totalorder %s18, 4
      %s25 = sphi 0, %s37
      %s26 = sphi 0, %s33
      %s27 = sphi 0, %s25
      %s28 = sphi 0, %s26
      %s29 = sphi 0, %s27
      %s30 = sphi 0, %s28
      %s42 = sphi 0, %s44
      %s45 = sphi 0, %s42
      %s46 = sphi 0, %s45
      %s62 = sphi 0, %s46
      %s66 = sphi 0, %s66
      %s68 = sphi 0, %s66
      %s69 = sphi 0, %s68
      %s83 = sphi 0, %s69
      %s87 = sphi 0, %s87
      %s89 = sphi 0, %s87
      %s90 = sphi 0, %s89
      %s104 = sphi 0, %s90
      %s112 = sphi 0, %s114
      %s115 = sphi 0, %s112
      %s116 = sphi 0, %s115
      %s132 = sphi 0, %s116
      %s138 = sphi 0, %s140
      %s141 = sphi 0, %s138
      %s142 = sphi 0, %s141
      %s158 = sphi 0, %s142
      %s164 = sphi 0, %s166
      %s167 = sphi 0, %s164
      %s168 = sphi 0, %s167
      %s184 = sphi 0, %s168
    $region4: #{tpu_custom_call.1} parent=1 // loop_header_branch
      %21 = sbr.rel (%p19) target = $region8
    $region5: #{tpu_custom_call.1} parent=1 // loop_body
      %s23 = ssub.s32 %s18, 1
      %s24 = ssub.s32 %s18, 2
      %s31 = sadd.s32 1, %s26
      %p32 = scmp.ge.s32.totalorder %s31, 1
      %s33 = scalar_select %p32, 0, %s31
      %s34 = sadd.s32 1, %s25
      %s35 = scalar_select %p32, %s34, %s25
      %p36 = scmp.ge.s32.totalorder %s35, 2
      %s37 = scalar_select %p36, 0, %s35
      %s38 = ssub.s32 %s25, %s37
      %s39 = ssub.s32 %s26, %s33
      %s40 = sor.u32 %s38, %s39
      %p41 = scmp.eq.s32.totalorder %s40, 0
      %s43 = sadd.s32 %s42, 1
      %s44 = scalar_select %p41, %s42, %s43
      %p47 = pneg %p41
      %p48 = scmp.eq.s32.totalorder %s18, 1
      %p49 = por %p47, %p48
      %p50 = scmp.ne.s32.totalorder %s42, %s45
      %p51 = scmp.eq.s32.totalorder %s18, 0
      %p52 = por %p50, %p51
      %p53 = scmp.ne.s32.totalorder %s42, %s45
      %p54 = scmp.eq.s32.totalorder %s23, 1
      %p55 = por %p53, %p54
      %p56 = scmp.ne.s32.totalorder %s45, %s46
      %p57 = scmp.eq.s32.totalorder %s23, 0
      %p58 = por %p56, %p57
      %p59 = scmp.ne.s32.totalorder %s45, %s46
      %p60 = scmp.eq.s32.totalorder %s24, 1
      %p61 = por %p59, %p60
      %p63 = scmp.ne.s32.totalorder %s46, %s62
      %p64 = scmp.eq.s32.totalorder %s24, 0
      %p65 = por %p63, %p64
      %s67 = sadd.s32 %s66, 1
      %p70 = scmp.eq.s32.totalorder %s18, 1
      %p71 = scmp.ne.s32.totalorder %s66, %s68
      %p72 = scmp.eq.s32.totalorder %s18, 0
      %p73 = por %p71, %p72
      %p74 = scmp.ne.s32.totalorder %s66, %s68
      %p75 = scmp.eq.s32.totalorder %s23, 1
      %p76 = por %p74, %p75
      %p77 = scmp.ne.s32.totalorder %s68, %s69
      %p78 = scmp.eq.s32.totalorder %s23, 0
      %p79 = por %p77, %p78
      %p80 = scmp.ne.s32.totalorder %s68, %s69
      %p81 = scmp.eq.s32.totalorder %s24, 1
      %p82 = por %p80, %p81
      %p84 = scmp.ne.s32.totalorder %s69, %s83
      %p85 = scmp.eq.s32.totalorder %s24, 0
      %p86 = por %p84, %p85
      %s88 = sadd.s32 %s87, 1
      %p91 = scmp.eq.s32.totalorder %s18, 1
      %p92 = scmp.ne.s32.totalorder %s87, %s89
      %p93 = scmp.eq.s32.totalorder %s18, 0
      %p94 = por %p92, %p93
      %p95 = scmp.ne.s32.totalorder %s87, %s89
      %p96 = scmp.eq.s32.totalorder %s23, 1
      %p97 = por %p95, %p96
      %p98 = scmp.ne.s32.totalorder %s89, %s90
      %p99 = scmp.eq.s32.totalorder %s23, 0
      %p100 = por %p98, %p99
      %p101 = scmp.ne.s32.totalorder %s89, %s90
      %p102 = scmp.eq.s32.totalorder %s24, 1
      %p103 = por %p101, %p102
      %p105 = scmp.ne.s32.totalorder %s90, %s104
      %p106 = scmp.eq.s32.totalorder %s24, 0
      %p107 = por %p105, %p106
      %s108 = ssub.s32 %s25, %s37
      %s109 = ssub.s32 %s26, %s33
      %s110 = sor.u32 %s108, %s109
      %p111 = scmp.eq.s32.totalorder %s110, 0
      %s113 = sadd.s32 %s112, 1
      %s114 = scalar_select %p111, %s112, %s113
      %p117 = pneg %p111
      %p118 = scmp.eq.s32.totalorder %s18, 1
      %p119 = por %p117, %p118
      %p120 = scmp.ne.s32.totalorder %s112, %s115
      %p121 = scmp.eq.s32.totalorder %s18, 0
      %p122 = por %p120, %p121
      %p123 = scmp.ne.s32.totalorder %s112, %s115
      %p124 = scmp.eq.s32.totalorder %s23, 1
      %p125 = por %p123, %p124
      %p126 = scmp.ne.s32.totalorder %s115, %s116
      %p127 = scmp.eq.s32.totalorder %s23, 0
      %p128 = por %p126, %p127
      %p129 = scmp.ne.s32.totalorder %s115, %s116
      %p130 = scmp.eq.s32.totalorder %s24, 1
      %p131 = por %p129, %p130
      %p133 = scmp.ne.s32.totalorder %s116, %s132
      %p134 = scmp.eq.s32.totalorder %s24, 0
      %p135 = por %p133, %p134
      %s136 = ssub.s32 %s25, %s37
      %p137 = scmp.eq.s32.totalorder %s136, 0
      %s139 = sadd.s32 %s138, 1
      %s140 = scalar_select %p137, %s138, %s139
      %p143 = pneg %p137
      %p144 = scmp.eq.s32.totalorder %s18, 1
      %p145 = por %p143, %p144
      %p146 = scmp.ne.s32.totalorder %s138, %s141
      %p147 = scmp.eq.s32.totalorder %s18, 0
      %p148 = por %p146, %p147
      %p149 = scmp.ne.s32.totalorder %s138, %s141
      %p150 = scmp.eq.s32.totalorder %s23, 1
      %p151 = por %p149, %p150
      %p152 = scmp.ne.s32.totalorder %s141, %s142
      %p153 = scmp.eq.s32.totalorder %s23, 0
      %p154 = por %p152, %p153
      %p155 = scmp.ne.s32.totalorder %s141, %s142
      %p156 = scmp.eq.s32.totalorder %s24, 1
      %p157 = por %p155, %p156
      %p159 = scmp.ne.s32.totalorder %s142, %s158
      %p160 = scmp.eq.s32.totalorder %s24, 0
      %p161 = por %p159, %p160
      %s162 = ssub.s32 %s25, %s37
      %p163 = scmp.eq.s32.totalorder %s162, 0
      %s165 = sadd.s32 %s164, 1
      %s166 = scalar_select %p163, %s164, %s165
      %p169 = pneg %p163
      %p170 = scmp.eq.s32.totalorder %s18, 1
      %p171 = por %p169, %p170
      %p172 = scmp.ne.s32.totalorder %s164, %s167
      %p173 = scmp.eq.s32.totalorder %s18, 0
      %p174 = por %p172, %p173
      %p175 = scmp.ne.s32.totalorder %s164, %s167
      %p176 = scmp.eq.s32.totalorder %s23, 1
      %p177 = por %p175, %p176
      %p178 = scmp.ne.s32.totalorder %s167, %s168
      %p179 = scmp.eq.s32.totalorder %s23, 0
      %p180 = por %p178, %p179
      %p181 = scmp.ne.s32.totalorder %s167, %s168
      %p182 = scmp.eq.s32.totalorder %s24, 1
      %p183 = por %p181, %p182
      %p185 = scmp.ne.s32.totalorder %s168, %s184
      %p186 = scmp.eq.s32.totalorder %s24, 0
      %p187 = por %p185, %p186
      %p188 = scmp.le.s32.totalorder 1, %s18
      %p189 = scmp.lt.s32.totalorder %s18, 3
      %p190 = pnand %p188, %p189
      %p191 = pneg %p190
      // Predicated region
      $region9: #{tpu_custom_call.1} parent=5 // pred_check
        _
      $region10: #{tpu_custom_call.1} parent=5 // pred_check_branch
        %193 = sbr.rel (%p190) target = $region12
      $region11: #{tpu_custom_call.1} parent=5 // pred_region
        %s194 = ssub.s32 %s18, 1
        // Predicated region
        $region13: #{tpu_custom_call.1} parent=11 // pred_check
          %p195 = pneg %p79
        $region14: #{tpu_custom_call.1} parent=11 // pred_check_branch
          %197 = sbr.rel (%p195) target = $region16
        $region15: #{tpu_custom_call.1} parent=11 // pred_region
          _
        $region16: #{tpu_custom_call.1} parent=11 // pred_fallthru
          _
        // Predicated region
        $region17: #{tpu_custom_call.1} parent=11 // pred_check
          %p198 = pneg %p100
        $region18: #{tpu_custom_call.1} parent=11 // pred_check_branch
          %200 = sbr.rel (%p198) target = $region20
        $region19: #{tpu_custom_call.1} parent=11 // pred_region
          _
        $region20: #{tpu_custom_call.1} parent=11 // pred_fallthru
          _
      $region12: #{tpu_custom_call.1} parent=5 // pred_fallthru
        _
      %p201 = scmp.lt.s32.totalorder %s18, 2
      // Predicated region
      $region21: #{tpu_custom_call.1} parent=5 // pred_check
        %p202 = pneg %p201
      $region22: #{tpu_custom_call.1} parent=5 // pred_check_branch
        %204 = sbr.rel (%p202) target = $region24
      $region23: #{tpu_custom_call.1} parent=5 // pred_region
        // Predicated region
        $region25: #{tpu_custom_call.1} parent=23 // pred_check
          %p205 = pneg %p52
        $region26: #{tpu_custom_call.1} parent=23 // pred_check_branch
          %207 = sbr.rel (%p205) target = $region28
        $region27: #{tpu_custom_call.1} parent=23 // pred_region
          %p208 = scmp.lt.s32.totalorder %s25, 1
          %s209 = scalar_select %p208, %s25, 1
          %p210 = scmp.lt.s32.totalorder %s26, 0
          %s211 = scalar_select %p210, %s26, 0
          %s212 = smul.addr %s211, 16
          %s213 = smul.addr %s209, 16
          %s214 = sadd.s32 %s212, %s213
          %s215 = smul.addr %s214, 4
          %s216 = scalar_lea.vmem %s0, %s215
        $region28: #{tpu_custom_call.1} parent=23 // pred_fallthru
          _
      $region24: #{tpu_custom_call.1} parent=5 // pred_fallthru
        _
      %p217 = scmp.le.s32.totalorder 1, %s18
      %p218 = scmp.lt.s32.totalorder %s18, 3
      %p219 = pnand %p217, %p218
      %p220 = pneg %p219
      // Predicated region
      $region29: #{tpu_custom_call.1} parent=5 // pred_check
        _
      $region30: #{tpu_custom_call.1} parent=5 // pred_check_branch
        %222 = sbr.rel (%p219) target = $region32
      $region31: #{tpu_custom_call.1} parent=5 // pred_region
        %s223 = ssub.s32 %s18, 1
        %p224 = scmp.lt.s32.totalorder %s27, 1
        %s225 = scalar_select %p224, %s27, 1
        %p226 = scmp.lt.s32.totalorder %s28, 0
        %s227 = scalar_select %p226, %s28, 0
        %s228 = smul.addr %s227, 16
        %s229 = smul.addr %s225, 16
        %s230 = sadd.s32 %s228, %s229
        %s231 = smul.addr %s230, 4
        %s232 = scalar_lea.vmem %s0, %s231
        %p233 = pneg %p58
        %p234 = pneg %p55
        %p235 = pneg %p79
        %p236 = pneg %p76
        %p237 = pneg %p100
        %p238 = pneg %p97
        %p239 = pneg %p128
        %p240 = pneg %p125
        %p241 = scmp.lt.s32.totalorder %s27, 1
        %s242 = scalar_select %p241, %s27, 1
        %p243 = scmp.lt.s32.totalorder %s28, 0
        %s244 = scalar_select %p243, %s28, 0
        %s245 = smul.addr %s244, 16
        %s246 = smul.addr %s242, 16
        %s247 = sadd.s32 %s245, %s246
        %s248 = smul.addr %s247, 8
        %s249 = scalar_lea.vmem %s3, %s248
        %p250 = pneg %p154
        %p251 = pneg %p151
        %s252 = sand.u32 %s141, 1
        %s253 = scalar_lea.sflag [#allocation4], %s252
        %s254 = sand.u32 %s141, 1
        %s255 = smul.addr %s254, 16
        %s256 = scalar_lea.vmem [#allocation3], %s255
        %p257 = pneg %p180
        %p258 = pneg %p177
        %s259 = sand.u32 %s167, 1
        %s260 = scalar_lea.sflag [#allocation6], %s259
        %s261 = sand.u32 %s167, 1
        %s262 = smul.addr %s261, 16
        %s263 = scalar_lea.vmem [#allocation5], %s262
        %p264 = scmp.lt.s32.totalorder %s27, 1
        %s265 = scalar_select %p264, %s27, 1
        %p266 = scmp.lt.s32.totalorder %s28, 0
        %s267 = scalar_select %p266, %s28, 0
        %s268 = smul.addr %s267, 16
        %s269 = smul.addr %s265, 16
        %s270 = sadd.s32 %s268, %s269
        %s271 = smul.addr %s270, 4
        %s272 = scalar_lea.vmem %s0, %s271
        %p273 = scmp.lt.s32.totalorder %s27, 1
        %s274 = scalar_select %p273, %s27, 1
        %p275 = scmp.lt.s32.totalorder %s28, 0
        %s276 = scalar_select %p275, %s28, 0
        %s277 = smul.addr %s276, 16
        %s278 = smul.addr %s274, 16
        %s279 = sadd.s32 %s277, %s278
        %s280 = smul.addr %s279, 8
        %s281 = scalar_lea.vmem %s3, %s280
        %p283 = scmp.eq.s32.totalorder %s28, 0
        // Predicated region
        $region33: #{tpu_custom_call.1} parent=31 // pred_check
          %p284 = pneg %p283
        $region34: #{tpu_custom_call.1} parent=31 // pred_check_branch
          %286 = sbr.rel (%p284) target = $region36
        $region35: #{tpu_custom_call.1} parent=31 // pred_region
          %vm287 = vcmask 261120
          %288 = vst.msk [vmem:[%s256] sm:$0xff] %vm287, 0.0
          %289 = vst.msk [vmem:[%s256 + $0x8] sm:$0xff] %vm287, 0.0
          %290 = vst.msk [vmem:[%s263] sm:$0xff] %vm287, 0.0
          %291 = vst.msk [vmem:[%s263 + $0x8] sm:$0xff] %vm287, 0.0
        $region36: #{tpu_custom_call.1} parent=31 // pred_fallthru
          _
        %v292 = vld [vmem:[%s272] sm:$0xf]
        %v293 = vld [vmem:[%s272 + $0x4] sm:$0xf]
        %v294 = vld [vmem:[%s272 + $0x8] sm:$0xf]
        %v295 = vld [vmem:[%s272 + $0xc] sm:$0xf]
        %v296 = vld [vmem:[%s272 + $0x10] sm:$0xf]
        %v297 = vld [vmem:[%s272 + $0x14] sm:$0xf]
        %v298 = vld [vmem:[%s272 + $0x18] sm:$0xf]
        %v299 = vld [vmem:[%s272 + $0x1c] sm:$0xf]
        %v300 = vld [vmem:[%s272 + $0x20] sm:$0xf]
        %v301 = vld [vmem:[%s272 + $0x24] sm:$0xf]
        %v302 = vld [vmem:[%s272 + $0x28] sm:$0xf]
        %v303 = vld [vmem:[%s272 + $0x2c] sm:$0xf]
        %v304 = vld [vmem:[%s272 + $0x30] sm:$0xf]
        %v305 = vld [vmem:[%s272 + $0x34] sm:$0xf]
        %v306 = vld [vmem:[%s272 + $0x38] sm:$0xf]
        %v307 = vld [vmem:[%s272 + $0x3c] sm:$0xf]
        %v308 = vld [vmem:[%s1] sm:$0xf]
        %v309 = vld [vmem:[%s1 + $0x4] sm:$0x7]
        %v326 = vunpack.c.l.b16 %v292
        %v327 = vunpack.c.l.b16 %v293
        %v328 = vunpack.c.l.b16 %v294
        %v329 = vunpack.c.l.b16 %v295
        %v330 = vunpack.c.l.b16 %v296
        %v331 = vunpack.c.l.b16 %v297
        %v332 = vunpack.c.l.b16 %v298
        %v333 = vunpack.c.l.b16 %v299
        %v334 = vunpack.c.l.b16 %v300
        %v335 = vunpack.c.l.b16 %v301
        %v336 = vunpack.c.l.b16 %v302
        %v337 = vunpack.c.l.b16 %v303
        %v338 = vunpack.c.l.b16 %v304
        %v339 = vunpack.c.l.b16 %v305
        %v340 = vunpack.c.l.b16 %v306
        %v341 = vunpack.c.l.b16 %v307
        %v342 = vpack.c.b16 %v327, %v326
        %v343 = vpack.c.b16 %v329, %v328
        %v344 = vpack.c.b16 %v331, %v330
        %v345 = vpack.c.b16 %v333, %v332
        %v346 = vpack.c.b16 %v335, %v334
        %v347 = vpack.c.b16 %v337, %v336
        %v348 = vpack.c.b16 %v339, %v338
        %v349 = vpack.c.b16 %v341, %v340
        %v352 = vunpack.c.l.b16 %v308
        %v353 = vunpack.c.l.b16 %v309
        %v354 = vpack.c.b16 %v353, %v352
        %vm355 = vcmask 105472
        %v357 = vsel %vm355, %v342, 0
        %v360 = vsel %vm355, %v343, 0
        %v363 = vsel %vm355, %v344, 0
        %v366 = vsel %vm355, %v345, 0
        %v369 = vsel %vm355, %v346, 0
        %v372 = vsel %vm355, %v347, 0
        %v375 = vsel %vm355, %v348, 0
        %v378 = vsel %vm355, %v349, 0
        %vm380 = vcmask 1045504
        %vm381 = vcmask 1046528
        %v382 = vsel %vm380, 4294967295, 65535
        %v383 = vsel %vm381, %v382, 0
        %v385 = vand.u32 %v354, %v383
        %387 = vmatprep.subr.bf16.mxu0 0
        %388 = vmatpush1.bf16.msra.mxu0 %v385
        %389 = vmatprep.subr.bf16.mxu0 0
        %390 = vmatpush1.bf16.msra.mxu0 0
        %391 = vmatprep.subr.bf16.mxu0 0
        %392 = vmatpush1.bf16.msra.mxu0 0
        %393 = vmatprep.subr.bf16.mxu0 0
        %394 = vmatpush1.bf16.msra.mxu0 0
        %395 = vmatprep.subr.bf16.mxu0 0
        %396 = vmatpush1.bf16.msra.mxu0 0
        %397 = vmatprep.subr.bf16.mxu0 0
        %398 = vmatpush1.bf16.msra.mxu0 0
        %399 = vmatprep.subr.bf16.mxu0 0
        %400 = vmatpush1.bf16.msra.mxu0 0
        %401 = vmatprep.subr.bf16.mxu0 0
        %402 = vmatpush1.bf16.msra.mxu0 0
        %403 = vmatprep.subr.bf16.mxu0 0
        %404 = vmatpush1.bf16.msra.mxu0 0
        %405 = vmatprep.subr.bf16.mxu0 0
        %406 = vmatpush1.bf16.msra.mxu0 0
        %407 = vmatprep.subr.bf16.mxu0 0
        %408 = vmatpush1.bf16.msra.mxu0 0
        %409 = vmatprep.subr.bf16.mxu0 0
        %410 = vmatpush1.bf16.msra.mxu0 0
        %411 = vmatprep.subr.bf16.mxu0 0
        %412 = vmatpush1.bf16.msra.mxu0 0
        %413 = vmatprep.subr.bf16.mxu0 0
        %414 = vmatpush1.bf16.msra.mxu0 0
        %415 = vmatprep.subr.bf16.mxu0 0
        %416 = vmatpush1.bf16.msra.mxu0 0
        %417 = vmatprep.subr.bf16.mxu0 0
        %418 = vmatpush1.bf16.msra.mxu0 0
        %419 = vmatprep.mubr.bf16.mxu0 0
        %420 = vmatmul.mubr.bf16.gmra.mrb[0].mxu0 %v357
        %v421 = vpop.f32.mrb[0].mxu0
        %v422 = vadd.f32 0.0, %v421
        %v423 = vpop.f32.mrb[0].mxu0
        %v424 = vpop.f32.mrb[0].mxu0
        %v425 = vadd.f32 0.0, %v424
        %v426 = vpop.f32.mrb[0].mxu0
        %427 = vmatprep.mubr.bf16.mxu0 0
        %428 = vmatmul.mubr.bf16.gmra.mrb[0].mxu0 %v360
        %v429 = vpop.f32.mrb[0].mxu0
        %v430 = vadd.f32 0.0, %v429
        %v431 = vpop.f32.mrb[0].mxu0
        %v432 = vpop.f32.mrb[0].mxu0
        %v433 = vadd.f32 0.0, %v432
        %v434 = vpop.f32.mrb[0].mxu0
        %435 = vmatprep.mubr.bf16.mxu0 0
        %436 = vmatmul.mubr.bf16.gmra.mrb[0].mxu0 %v363
        %v437 = vpop.f32.mrb[0].mxu0
        %v438 = vadd.f32 0.0, %v437
        %v439 = vpop.f32.mrb[0].mxu0
        %v440 = vpop.f32.mrb[0].mxu0
        %v441 = vadd.f32 0.0, %v440
        %v442 = vpop.f32.mrb[0].mxu0
        %443 = vmatprep.mubr.bf16.mxu0 0
        %444 = vmatmul.mubr.bf16.gmra.mrb[0].mxu0 %v366
        %v445 = vpop.f32.mrb[0].mxu0
        %v446 = vadd.f32 0.0, %v445
        %v447 = vpop.f32.mrb[0].mxu0
        %v448 = vpop.f32.mrb[0].mxu0
        %v449 = vadd.f32 0.0, %v448
        %v450 = vpop.f32.mrb[0].mxu0
        %451 = vmatprep.mubr.bf16.mxu0 0
        %452 = vmatmul.mubr.bf16.gmra.mrb[0].mxu0 %v369
        %v453 = vpop.f32.mrb[0].mxu0
        %v454 = vadd.f32 0.0, %v453
        %v455 = vpop.f32.mrb[0].mxu0
        %v456 = vpop.f32.mrb[0].mxu0
        %v457 = vadd.f32 0.0, %v456
        %v458 = vpop.f32.mrb[0].mxu0
        %459 = vmatprep.mubr.bf16.mxu0 0
        %460 = vmatmul.mubr.bf16.gmra.mrb[0].mxu0 %v372
        %v461 = vpop.f32.mrb[0].mxu0
        %v462 = vadd.f32 0.0, %v461
        %v463 = vpop.f32.mrb[0].mxu0
        %v464 = vpop.f32.mrb[0].mxu0
        %v465 = vadd.f32 0.0, %v464
        %v466 = vpop.f32.mrb[0].mxu0
        %467 = vmatprep.mubr.bf16.mxu0 0
        %468 = vmatmul.mubr.bf16.gmra.mrb[0].mxu0 %v375
        %v469 = vpop.f32.mrb[0].mxu0
        %v470 = vadd.f32 0.0, %v469
        %v471 = vpop.f32.mrb[0].mxu0
        %v472 = vpop.f32.mrb[0].mxu0
        %v473 = vadd.f32 0.0, %v472
        %v474 = vpop.f32.mrb[0].mxu0
        %475 = vmatprep.mubr.bf16.mxu0 0
        %476 = vmatmul.mubr.bf16.gmra.mrb[0].mxu0 %v378
        %v477 = vpop.f32.mrb[0].mxu0
        %v478 = vadd.f32 0.0, %v477
        %v479 = vpop.f32.mrb[0].mxu0
        %v480 = vpop.f32.mrb[0].mxu0
        %v481 = vadd.f32 0.0, %v480
        %v482 = vpop.f32.mrb[0].mxu0
        %483 = vdwg.mxu0
        %484 = vst [vmem:[#allocation2] sm:$0xff] %v422
        %485 = vst [vmem:[#allocation2 + $0x8] sm:$0xff] %v425
        %486 = vst [vmem:[#allocation2 + $0x10] sm:$0xff] %v430
        %487 = vst [vmem:[#allocation2 + $0x18] sm:$0xff] %v433
        %488 = vst [vmem:[#allocation2 + $0x20] sm:$0xff] %v438
        %489 = vst [vmem:[#allocation2 + $0x28] sm:$0xff] %v441
        %490 = vst [vmem:[#allocation2 + $0x30] sm:$0xff] %v446
        %491 = vst [vmem:[#allocation2 + $0x38] sm:$0xff] %v449
        %492 = vst [vmem:[#allocation2 + $0x40] sm:$0xff] %v454
        %493 = vst [vmem:[#allocation2 + $0x48] sm:$0xff] %v457
        %494 = vst [vmem:[#allocation2 + $0x50] sm:$0xff] %v462
        %495 = vst [vmem:[#allocation2 + $0x58] sm:$0xff] %v465
        %496 = vst [vmem:[#allocation2 + $0x60] sm:$0xff] %v470
        %497 = vst [vmem:[#allocation2 + $0x68] sm:$0xff] %v473
        %498 = vst [vmem:[#allocation2 + $0x70] sm:$0xff] %v478
        %499 = vst [vmem:[#allocation2 + $0x78] sm:$0xff] %v481
        %v500 = vlaneseq
        %v501 = vshrl.u32 %v500, 7
        %v502 = vadd.s32 %v501, 8
        %vm503 = vcmp.lt.s32.totalorder %v501, 0
        %v504 = vsub.s32 0, %v501
        %v505 = vsel %vm503, %v504, %v501
        %v506 = vshrl.u32 %v505, 4
        %v507 = vand.u32 %v505, 15
        %v508 = vsub.s32 0, %v507
        %v509 = vsel %vm503, %v508, %v507
        %vm510 = vcmp.lt.s32.totalorder %v502, 0
        %v511 = vsub.s32 0, %v502
        %v512 = vsel %vm510, %v511, %v502
        %v513 = vshrl.u32 %v512, 4
        %v514 = vand.u32 %v512, 15
        %v515 = vsub.s32 0, %v514
        %v516 = vsel %vm510, %v515, %v514
        %vm517 = vcmp.ne.s32.totalorder %v509, 0
        %vm518 = vcmp.ne.s32.totalorder %v516, 0
        %vm519 = vcmp.lt.s32.totalorder %v509, 0
        %vm520 = vcmp.lt.s32.totalorder %v516, 0
        %vm521 = vmand %vm519, %vm517
        %vm522 = vmand %vm520, %vm518
        %v523 = vadd.s32 %v509, 16
        %v524 = vadd.s32 %v516, 16
        %v525 = vsel %vm521, %v523, %v509
        %v526 = vsel %vm522, %v524, %v516
        %vm527 = vcmp.ge.s32.totalorder %v525, 1
        %vm528 = vcmp.ge.s32.totalorder %v526, 1
        %vm529 = vcmp.lt.s32.totalorder %v525, 15
        %vm530 = vcmp.lt.s32.totalorder %v526, 15
        %v531 = vld [vmem:[%s256] sm:$0xff]
        %v532 = vld [vmem:[%s256 + $0x8] sm:$0xff]
        %v533 = vld [vmem:[%s263] sm:$0xff]
        %v534 = vld [vmem:[%s263 + $0x8] sm:$0xff]
        %v535 = vpack.c.bf16 %v532, %v531
        %v536 = vld [vmem:[#allocation2] sm:$0xff]
        %v537 = vld [vmem:[#allocation2 + $0x8] sm:$0xff]
        %v538 = vld [vmem:[%s2] sm:$0xf]
        %v539 = vld [vmem:[%s2 + $0x4] sm:$0xf]
        %v540 = vld [vmem:[%s2 + $0x8] sm:$0xf]
        %v541 = vld [vmem:[%s2 + $0xc] sm:$0xf]
        %v546 = vunpack.c.l.b16 %v538
        %v547 = vunpack.c.l.b16 %v539
        %v548 = vunpack.c.l.b16 %v540
        %v549 = vunpack.c.l.b16 %v541
        %v550 = vpack.c.b16 %v547, %v546
        %v551 = vpack.c.b16 %v549, %v548
        %vm554 = vcmask 261120
        %v556 = vsel %vm554, %v535, 0
        %558 = vmatprep.subr.bf16.mxu0 0
        %559 = vmatpush1.bf16.msra.mxu0 %v550
        %560 = vmatprep.subr.bf16.mxu0 0
        %561 = vmatpush1.bf16.msra.mxu0 %v551
        %562 = vmatprep.subr.bf16.mxu0 0
        %563 = vmatpush1.bf16.msra.mxu0 0
        %564 = vmatprep.subr.bf16.mxu0 0
        %565 = vmatpush1.bf16.msra.mxu0 0
        %566 = vmatprep.subr.bf16.mxu0 0
        %567 = vmatpush1.bf16.msra.mxu0 0
        %568 = vmatprep.subr.bf16.mxu0 0
        %569 = vmatpush1.bf16.msra.mxu0 0
        %570 = vmatprep.subr.bf16.mxu0 0
        %571 = vmatpush1.bf16.msra.mxu0 0
        %572 = vmatprep.subr.bf16.mxu0 0
        %573 = vmatpush1.bf16.msra.mxu0 0
        %574 = vmatprep.subr.bf16.mxu0 0
        %575 = vmatpush1.bf16.msra.mxu0 0
        %576 = vmatprep.subr.bf16.mxu0 0
        %577 = vmatpush1.bf16.msra.mxu0 0
        %578 = vmatprep.subr.bf16.mxu0 0
        %579 = vmatpush1.bf16.msra.mxu0 0
        %580 = vmatprep.subr.bf16.mxu0 0
        %581 = vmatpush1.bf16.msra.mxu0 0
        %582 = vmatprep.subr.bf16.mxu0 0
        %583 = vmatpush1.bf16.msra.mxu0 0
        %584 = vmatprep.subr.bf16.mxu0 0
        %585 = vmatpush1.bf16.msra.mxu0 0
        %586 = vmatprep.subr.bf16.mxu0 0
        %587 = vmatpush1.bf16.msra.mxu0 0
        %588 = vmatprep.subr.bf16.mxu0 0
        %589 = vmatpush1.bf16.msra.mxu0 0
        %590 = vmatprep.mubr.bf16.mxu0 0
        %591 = vmatmul.mubr.bf16.gmra.mrb[0].mxu0 %v556
        %v592 = vpop.f32.mrb[0].mxu0
        %v593 = vadd.f32 0.0, %v592
        %v594 = vpop.f32.mrb[0].mxu0
        %v595 = vpop.f32.mrb[0].mxu0
        %v596 = vadd.f32 0.0, %v595
        %v597 = vpop.f32.mrb[0].mxu0
        %598 = vdwg.mxu0
        %v599 = vrot.slane %v593, 7
        %v600 = vrot.slane %v596, 7
        %vm601 = vcmp.lt.s32.totalorder %v501, 1
        %v602 = vsel %vm601, %v599, %v600
        %v603 = vsel %vm601, %v600, %v599
        %v604 = vsel %vm527, 1, 0
        %v605 = vsel %vm528, 1, 0
        %vm606 = vcmp.eq.s32.totalorder %v604, 1
        %vm607 = vcmp.eq.s32.totalorder %v605, 1
        %v608 = vsel %vm606, %v603, 0.0
        %v609 = vsel %vm607, %v602, 0.0
        %v610 = vadd.f32 %v536, %v608
        %v611 = vadd.f32 %v537, %v609
        %s612 = scalar_lea.vmem %s2, 16
        %v613 = vld [vmem:[%s612] sm:$0xf]
        %v614 = vld [vmem:[%s612 + $0x4] sm:$0xf]
        %v615 = vld [vmem:[%s612 + $0x8] sm:$0xf]
        %v616 = vld [vmem:[%s612 + $0xc] sm:$0xf]
        %v621 = vunpack.c.l.b16 %v613
        %v622 = vunpack.c.l.b16 %v614
        %v623 = vunpack.c.l.b16 %v615
        %v624 = vunpack.c.l.b16 %v616
        %v625 = vpack.c.b16 %v622, %v621
        %v626 = vpack.c.b16 %v624, %v623
        %629 = vmatprep.subr.bf16.mxu0 0
        %630 = vmatpush1.bf16.msra.mxu0 %v625
        %631 = vmatprep.subr.bf16.mxu0 0
        %632 = vmatpush1.bf16.msra.mxu0 %v626
        %633 = vmatprep.subr.bf16.mxu0 0
        %634 = vmatpush1.bf16.msra.mxu0 0
        %635 = vmatprep.subr.bf16.mxu0 0
        %636 = vmatpush1.bf16.msra.mxu0 0
        %637 = vmatprep.subr.bf16.mxu0 0
        %638 = vmatpush1.bf16.msra.mxu0 0
        %639 = vmatprep.subr.bf16.mxu0 0
        %640 = vmatpush1.bf16.msra.mxu0 0
        %641 = vmatprep.subr.bf16.mxu0 0
        %642 = vmatpush1.bf16.msra.mxu0 0
        %643 = vmatprep.subr.bf16.mxu0 0
        %644 = vmatpush1.bf16.msra.mxu0 0
        %645 = vmatprep.subr.bf16.mxu0 0
        %646 = vmatpush1.bf16.msra.mxu0 0
        %647 = vmatprep.subr.bf16.mxu0 0
        %648 = vmatpush1.bf16.msra.mxu0 0
        %649 = vmatprep.subr.bf16.mxu0 0
        %650 = vmatpush1.bf16.msra.mxu0 0
        %651 = vmatprep.subr.bf16.mxu0 0
        %652 = vmatpush1.bf16.msra.mxu0 0
        %653 = vmatprep.subr.bf16.mxu0 0
        %654 = vmatpush1.bf16.msra.mxu0 0
        %655 = vmatprep.subr.bf16.mxu0 0
        %656 = vmatpush1.bf16.msra.mxu0 0
        %657 = vmatprep.subr.bf16.mxu0 0
        %658 = vmatpush1.bf16.msra.mxu0 0
        %659 = vmatprep.subr.bf16.mxu0 0
        %660 = vmatpush1.bf16.msra.mxu0 0
        %661 = vmatprep.mubr.bf16.mxu0 0
        %662 = vmatmul.mubr.bf16.gmra.mrb[0].mxu0 %v556
        %v663 = vpop.f32.mrb[0].mxu0
        %v664 = vadd.f32 0.0, %v663
        %v665 = vpop.f32.mrb[0].mxu0
        %v666 = vpop.f32.mrb[0].mxu0
        %v667 = vadd.f32 0.0, %v666
        %v668 = vpop.f32.mrb[0].mxu0
        %669 = vdwg.mxu0
        %v670 = vadd.f32 %v610, %v664
        %v671 = vadd.f32 %v611, %v667
        %s672 = scalar_lea.vmem %s2, 32
        %v673 = vld [vmem:[%s672] sm:$0xf]
        %v674 = vld [vmem:[%s672 + $0x4] sm:$0xf]
        %v675 = vld [vmem:[%s672 + $0x8] sm:$0xf]
        %v676 = vld [vmem:[%s672 + $0xc] sm:$0xf]
        %v681 = vunpack.c.l.b16 %v673
        %v682 = vunpack.c.l.b16 %v674
        %v683 = vunpack.c.l.b16 %v675
        %v684 = vunpack.c.l.b16 %v676
        %v685 = vpack.c.b16 %v682, %v681
        %v686 = vpack.c.b16 %v684, %v683
        %689 = vmatprep.subr.bf16.mxu0 0
        %690 = vmatpush1.bf16.msra.mxu0 %v685
        %691 = vmatprep.subr.bf16.mxu0 0
        %692 = vmatpush1.bf16.msra.mxu0 %v686
        %693 = vmatprep.subr.bf16.mxu0 0
        %694 = vmatpush1.bf16.msra.mxu0 0
        %695 = vmatprep.subr.bf16.mxu0 0
        %696 = vmatpush1.bf16.msra.mxu0 0
        %697 = vmatprep.subr.bf16.mxu0 0
        %698 = vmatpush1.bf16.msra.mxu0 0
        %699 = vmatprep.subr.bf16.mxu0 0
        %700 = vmatpush1.bf16.msra.mxu0 0
        %701 = vmatprep.subr.bf16.mxu0 0
        %702 = vmatpush1.bf16.msra.mxu0 0
        %703 = vmatprep.subr.bf16.mxu0 0
        %704 = vmatpush1.bf16.msra.mxu0 0
        %705 = vmatprep.subr.bf16.mxu0 0
        %706 = vmatpush1.bf16.msra.mxu0 0
        %707 = vmatprep.subr.bf16.mxu0 0
        %708 = vmatpush1.bf16.msra.mxu0 0
        %709 = vmatprep.subr.bf16.mxu0 0
        %710 = vmatpush1.bf16.msra.mxu0 0
        %711 = vmatprep.subr.bf16.mxu0 0
        %712 = vmatpush1.bf16.msra.mxu0 0
        %713 = vmatprep.subr.bf16.mxu0 0
        %714 = vmatpush1.bf16.msra.mxu0 0
        %715 = vmatprep.subr.bf16.mxu0 0
        %716 = vmatpush1.bf16.msra.mxu0 0
        %717 = vmatprep.subr.bf16.mxu0 0
        %718 = vmatpush1.bf16.msra.mxu0 0
        %719 = vmatprep.subr.bf16.mxu0 0
        %720 = vmatpush1.bf16.msra.mxu0 0
        %721 = vmatprep.mubr.bf16.mxu0 0
        %722 = vmatmul.mubr.bf16.gmra.mrb[0].mxu0 %v556
        %v723 = vpop.f32.mrb[0].mxu0
        %v724 = vadd.f32 0.0, %v723
        %v725 = vpop.f32.mrb[0].mxu0
        %v726 = vpop.f32.mrb[0].mxu0
        %v727 = vadd.f32 0.0, %v726
        %v728 = vpop.f32.mrb[0].mxu0
        %729 = vdwg.mxu0
        %v730 = vrot.slane %v724, 1
        %v731 = vrot.slane %v727, 1
        %vm732 = vcmp.lt.s32.totalorder %v501, 7
        %v733 = vsel %vm732, %v730, %v731
        %v734 = vsel %vm732, %v731, %v730
        %v735 = vsel %vm529, 1, 0
        %v736 = vsel %vm530, 1, 0
        %vm737 = vcmp.eq.s32.totalorder %v735, 1
        %vm738 = vcmp.eq.s32.totalorder %v736, 1
        %v739 = vsel %vm737, %v733, 0.0
        %v740 = vsel %vm738, %v734, 0.0
        %v741 = vadd.f32 %v670, %v739
        %v742 = vadd.f32 %v671, %v740
        %v743 = vxor.u32 %v741, 2147483648
        %v744 = vxor.u32 %v742, 2147483648
        %v745 = vmul.f32 %v743, 1.442695
        %v746 = vpow.pop %v745
        %v747 = vmul.f32 %v744, 1.442695
        %v748 = vpow.pop %v747
        %v749 = vadd.f32 %v746, 1.0
        %v750 = vadd.f32 %v748, 1.0
        %v751 = vrcp.pop %v749
        %v752 = vmul.f32 1.0, %v751
        %v753 = vrcp.pop %v750
        %v754 = vmul.f32 1.0, %v753
        %v755 = vtanh.pop %v741
        %v756 = vtanh.pop %v742
        %759 = vrot.lane.b32.xlu0 %v533, 32
        %v760 = vpop.permute.xlu0 %759
        %761 = vrot.lane.b32.xlu0 %v534, 32
        %v762 = vpop.permute.xlu0 %761
        %v765 = vmul.f32 %v752, %v760
        %v766 = vmul.f32 %v754, %v762
        %769 = vrot.lane.b32.xlu0 %v755, 32
        %v770 = vpop.permute.xlu0 %769
        %771 = vrot.lane.b32.xlu0 %v756, 32
        %v772 = vpop.permute.xlu0 %771
        %v775 = vmul.f32 %v752, %v770
        %v776 = vmul.f32 %v754, %v772
        %779 = vrot.lane.b32.xlu0 %v775, 32
        %v780 = vpop.permute.xlu0 %779
        %781 = vrot.lane.b32.xlu0 %v776, 32
        %v782 = vpop.permute.xlu0 %781
        %v785 = vadd.f32 %v765, %v780
        %v786 = vadd.f32 %v766, %v782
        %v787 = vtanh.pop %v785
        %v788 = vtanh.pop %v786
        %791 = vrot.lane.b32.xlu0 %v787, 32
        %v792 = vpop.permute.xlu0 %791
        %793 = vrot.lane.b32.xlu0 %v788, 32
        %v794 = vpop.permute.xlu0 %793
        %v797 = vmul.f32 %v752, %v792
        %v798 = vmul.f32 %v754, %v794
        %801 = vrot.lane.b32.xlu0 %v797, 64
        %v802 = vpop.permute.xlu0 %801
        %803 = vrot.lane.b32.xlu0 %v798, 64
        %v804 = vpop.permute.xlu0 %803
        %807 = vst.msk [vmem:[%s281] sm:$0xff] %vm554, %v802
        %808 = vst.msk [vmem:[%s281 + $0x8] sm:$0xff] %vm554, %v804
        %v809 = vpack.c.bf16 %v798, %v797
        %s810 = scalar_lea.vmem [#allocation2], 16
        %v811 = vld [vmem:[%s810] sm:$0xff]
        %v812 = vld [vmem:[%s810 + $0x8] sm:$0xff]
        %v813 = vld [vmem:[%s2] sm:$0xf]
        %v814 = vld [vmem:[%s2 + $0x4] sm:$0xf]
        %v815 = vld [vmem:[%s2 + $0x8] sm:$0xf]
        %v816 = vld [vmem:[%s2 + $0xc] sm:$0xf]
        %818 = vrot.lane.b32.xlu0 %v809, 64
        %v819 = vpop.permute.xlu0 %818
        %v824 = vunpack.c.l.b16 %v813
        %v825 = vunpack.c.l.b16 %v814
        %v826 = vunpack.c.l.b16 %v815
        %v827 = vunpack.c.l.b16 %v816
        %v828 = vpack.c.b16 %v825, %v824
        %v829 = vpack.c.b16 %v827, %v826
        %v833 = vsel %vm554, %v819, 0
        %835 = vmatprep.subr.bf16.mxu0 0
        %836 = vmatpush1.bf16.msra.mxu0 %v828
        %837 = vmatprep.subr.bf16.mxu0 0
        %838 = vmatpush1.bf16.msra.mxu0 %v829
        %839 = vmatprep.subr.bf16.mxu0 0
        %840 = vmatpush1.bf16.msra.mxu0 0
        %841 = vmatprep.subr.bf16.mxu0 0
        %842 = vmatpush1.bf16.msra.mxu0 0
        %843 = vmatprep.subr.bf16.mxu0 0
        %844 = vmatpush1.bf16.msra.mxu0 0
        %845 = vmatprep.subr.bf16.mxu0 0
        %846 = vmatpush1.bf16.msra.mxu0 0
        %847 = vmatprep.subr.bf16.mxu0 0
        %848 = vmatpush1.bf16.msra.mxu0 0
        %849 = vmatprep.subr.bf16.mxu0 0
        %850 = vmatpush1.bf16.msra.mxu0 0
        %851 = vmatprep.subr.bf16.mxu0 0
        %852 = vmatpush1.bf16.msra.mxu0 0
        %853 = vmatprep.subr.bf16.mxu0 0
        %854 = vmatpush1.bf16.msra.mxu0 0
        %855 = vmatprep.subr.bf16.mxu0 0
        %856 = vmatpush1.bf16.msra.mxu0 0
        %857 = vmatprep.subr.bf16.mxu0 0
        %858 = vmatpush1.bf16.msra.mxu0 0
        %859 = vmatprep.subr.bf16.mxu0 0
        %860 = vmatpush1.bf16.msra.mxu0 0
        %861 = vmatprep.subr.bf16.mxu0 0
        %862 = vmatpush1.bf16.msra.mxu0 0
        %863 = vmatprep.subr.bf16.mxu0 0
        %864 = vmatpush1.bf16.msra.mxu0 0
        %865 = vmatprep.subr.bf16.mxu0 0
        %866 = vmatpush1.bf16.msra.mxu0 0
        %867 = vmatprep.mubr.bf16.mxu0 0
        %868 = vmatmul.mubr.bf16.gmra.mrb[0].mxu0 %v833
        %v869 = vpop.f32.mrb[0].mxu0
        %v870 = vadd.f32 0.0, %v869
        %v871 = vpop.f32.mrb[0].mxu0
        %v872 = vpop.f32.mrb[0].mxu0
        %v873 = vadd.f32 0.0, %v872
        %v874 = vpop.f32.mrb[0].mxu0
        %875 = vdwg.mxu0
        %v876 = vrot.slane %v870, 7
        %v877 = vrot.slane %v873, 7
        %v878 = vsel %vm601, %v876, %v877
        %v879 = vsel %vm601, %v877, %v876
        %v880 = vsel %vm606, %v879, 0.0
        %v881 = vsel %vm607, %v878, 0.0
        %v882 = vadd.f32 %v811, %v880
        %v883 = vadd.f32 %v812, %v881
        %v884 = vld [vmem:[%s612] sm:$0xf]
        %v885 = vld [vmem:[%s612 + $0x4] sm:$0xf]
        %v886 = vld [vmem:[%s612 + $0x8] sm:$0xf]
        %v887 = vld [vmem:[%s612 + $0xc] sm:$0xf]
        %v892 = vunpack.c.l.b16 %v884
        %v893 = vunpack.c.l.b16 %v885
        %v894 = vunpack.c.l.b16 %v886
        %v895 = vunpack.c.l.b16 %v887
        %v896 = vpack.c.b16 %v893, %v892
        %v897 = vpack.c.b16 %v895, %v894
        %900 = vmatprep.subr.bf16.mxu0 0
        %901 = vmatpush1.bf16.msra.mxu0 %v896
        %902 = vmatprep.subr.bf16.mxu0 0
        %903 = vmatpush1.bf16.msra.mxu0 %v897
        %904 = vmatprep.subr.bf16.mxu0 0
        %905 = vmatpush1.bf16.msra.mxu0 0
        %906 = vmatprep.subr.bf16.mxu0 0
        %907 = vmatpush1.bf16.msra.mxu0 0
        %908 = vmatprep.subr.bf16.mxu0 0
        %909 = vmatpush1.bf16.msra.mxu0 0
        %910 = vmatprep.subr.bf16.mxu0 0
        %911 = vmatpush1.bf16.msra.mxu0 0
        %912 = vmatprep.subr.bf16.mxu0 0
        %913 = vmatpush1.bf16.msra.mxu0 0
        %914 = vmatprep.subr.bf16.mxu0 0
        %915 = vmatpush1.bf16.msra.mxu0 0
        %916 = vmatprep.subr.bf16.mxu0 0
        %917 = vmatpush1.bf16.msra.mxu0 0
        %918 = vmatprep.subr.bf16.mxu0 0
        %919 = vmatpush1.bf16.msra.mxu0 0
        %920 = vmatprep.subr.bf16.mxu0 0
        %921 = vmatpush1.bf16.msra.mxu0 0
        %922 = vmatprep.subr.bf16.mxu0 0
        %923 = vmatpush1.bf16.msra.mxu0 0
        %924 = vmatprep.subr.bf16.mxu0 0
        %925 = vmatpush1.bf16.msra.mxu0 0
        %926 = vmatprep.subr.bf16.mxu0 0
        %927 = vmatpush1.bf16.msra.mxu0 0
        %928 = vmatprep.subr.bf16.mxu0 0
        %929 = vmatpush1.bf16.msra.mxu0 0
        %930 = vmatprep.subr.bf16.mxu0 0
        %931 = vmatpush1.bf16.msra.mxu0 0
        %932 = vmatprep.mubr.bf16.mxu0 0
        %933 = vmatmul.mubr.bf16.gmra.mrb[0].mxu0 %v833
        %v934 = vpop.f32.mrb[0].mxu0
        %v935 = vadd.f32 0.0, %v934
        %v936 = vpop.f32.mrb[0].mxu0
        %v937 = vpop.f32.mrb[0].mxu0
        %v938 = vadd.f32 0.0, %v937
        %v939 = vpop.f32.mrb[0].mxu0
        %940 = vdwg.mxu0
        %v941 = vadd.f32 %v882, %v935
        %v942 = vadd.f32 %v883, %v938
        %v943 = vld [vmem:[%s672] sm:$0xf]
        %v944 = vld [vmem:[%s672 + $0x4] sm:$0xf]
        %v945 = vld [vmem:[%s672 + $0x8] sm:$0xf]
        %v946 = vld [vmem:[%s672 + $0xc] sm:$0xf]
        %v951 = vunpack.c.l.b16 %v943
        %v952 = vunpack.c.l.b16 %v944
        %v953 = vunpack.c.l.b16 %v945
        %v954 = vunpack.c.l.b16 %v946
        %v955 = vpack.c.b16 %v952, %v951
        %v956 = vpack.c.b16 %v954, %v953
        %959 = vmatprep.subr.bf16.mxu0 0
        %960 = vmatpush1.bf16.msra.mxu0 %v955
        %961 = vmatprep.subr.bf16.mxu0 0
        %962 = vmatpush1.bf16.msra.mxu0 %v956
        %963 = vmatprep.subr.bf16.mxu0 0
        %964 = vmatpush1.bf16.msra.mxu0 0
        %965 = vmatprep.subr.bf16.mxu0 0
        %966 = vmatpush1.bf16.msra.mxu0 0
        %967 = vmatprep.subr.bf16.mxu0 0
        %968 = vmatpush1.bf16.msra.mxu0 0
        %969 = vmatprep.subr.bf16.mxu0 0
        %970 = vmatpush1.bf16.msra.mxu0 0
        %971 = vmatprep.subr.bf16.mxu0 0
        %972 = vmatpush1.bf16.msra.mxu0 0
        %973 = vmatprep.subr.bf16.mxu0 0
        %974 = vmatpush1.bf16.msra.mxu0 0
        %975 = vmatprep.subr.bf16.mxu0 0
        %976 = vmatpush1.bf16.msra.mxu0 0
        %977 = vmatprep.subr.bf16.mxu0 0
        %978 = vmatpush1.bf16.msra.mxu0 0
        %979 = vmatprep.subr.bf16.mxu0 0
        %980 = vmatpush1.bf16.msra.mxu0 0
        %981 = vmatprep.subr.bf16.mxu0 0
        %982 = vmatpush1.bf16.msra.mxu0 0
        %983 = vmatprep.subr.bf16.mxu0 0
        %984 = vmatpush1.bf16.msra.mxu0 0
        %985 = vmatprep.subr.bf16.mxu0 0
        %986 = vmatpush1.bf16.msra.mxu0 0
        %987 = vmatprep.subr.bf16.mxu0 0
        %988 = vmatpush1.bf16.msra.mxu0 0
        %989 = vmatprep.subr.bf16.mxu0 0
        %990 = vmatpush1.bf16.msra.mxu0 0
        %991 = vmatprep.mubr.bf16.mxu0 0
        %992 = vmatmul.mubr.bf16.gmra.mrb[0].mxu0 %v833
        %v993 = vpop.f32.mrb[0].mxu0
        %v994 = vadd.f32 0.0, %v993
        %v995 = vpop.f32.mrb[0].mxu0
        %v996 = vpop.f32.mrb[0].mxu0
        %v997 = vadd.f32 0.0, %v996
        %v998 = vpop.f32.mrb[0].mxu0
        %999 = vdwg.mxu0
        %v1000 = vrot.slane %v994, 1
        %v1001 = vrot.slane %v997, 1
        %v1002 = vsel %vm732, %v1000, %v1001
        %v1003 = vsel %vm732, %v1001, %v1000
        %v1004 = vsel %vm737, %v1002, 0.0
        %v1005 = vsel %vm738, %v1003, 0.0
        %v1006 = vadd.f32 %v941, %v1004
        %v1007 = vadd.f32 %v942, %v1005
        %v1008 = vxor.u32 %v1006, 2147483648
        %v1009 = vxor.u32 %v1007, 2147483648
        %v1010 = vmul.f32 %v1008, 1.442695
        %v1011 = vpow.pop %v1010
        %v1012 = vmul.f32 %v1009, 1.442695
        %v1013 = vpow.pop %v1012
        %v1014 = vadd.f32 %v1011, 1.0
        %v1015 = vadd.f32 %v1013, 1.0
        %v1016 = vrcp.pop %v1014
        %v1017 = vmul.f32 1.0, %v1016
        %v1018 = vrcp.pop %v1015
        %v1019 = vmul.f32 1.0, %v1018
        %v1020 = vtanh.pop %v1006
        %v1021 = vtanh.pop %v1007
        %v1022 = vmul.f32 %v1017, %v785
        %v1023 = vmul.f32 %v1019, %v786
        %1026 = vrot.lane.b32.xlu0 %v1020, 32
        %v1027 = vpop.permute.xlu0 %1026
        %1028 = vrot.lane.b32.xlu0 %v1021, 32
        %v1029 = vpop.permute.xlu0 %1028
        %v1032 = vmul.f32 %v1017, %v1027
        %v1033 = vmul.f32 %v1019, %v1029
        %1036 = vrot.lane.b32.xlu0 %v1032, 32
        %v1037 = vpop.permute.xlu0 %1036
        %1038 = vrot.lane.b32.xlu0 %v1033, 32
        %v1039 = vpop.permute.xlu0 %1038
        %v1042 = vadd.f32 %v1022, %v1037
        %v1043 = vadd.f32 %v1023, %v1039
        %v1044 = vtanh.pop %v1042
        %v1045 = vtanh.pop %v1043
        %1048 = vrot.lane.b32.xlu0 %v1044, 32
        %v1049 = vpop.permute.xlu0 %1048
        %1050 = vrot.lane.b32.xlu0 %v1045, 32
        %v1051 = vpop.permute.xlu0 %1050
        %v1054 = vmul.f32 %v1017, %v1049
        %v1055 = vmul.f32 %v1019, %v1051
        %1058 = vrot.lane.b32.xlu0 %v1054, 64
        %v1059 = vpop.permute.xlu0 %1058
        %1060 = vrot.lane.b32.xlu0 %v1055, 64
        %v1061 = vpop.permute.xlu0 %1060
        %s1064 = scalar_lea.vmem %s281, 16
        %1065 = vst.msk [vmem:[%s1064] sm:$0xff] %vm554, %v1059
        %1066 = vst.msk [vmem:[%s1064 + $0x8] sm:$0xff] %vm554, %v1061
        %v1067 = vpack.c.bf16 %v1055, %v1054
        %s1068 = scalar_lea.vmem [#allocation2], 32
        %v1069 = vld [vmem:[%s1068] sm:$0xff]
        %v1070 = vld [vmem:[%s1068 + $0x8] sm:$0xff]
        %v1071 = vld [vmem:[%s2] sm:$0xf]
        %v1072 = vld [vmem:[%s2 + $0x4] sm:$0xf]
        %v1073 = vld [vmem:[%s2 + $0x8] sm:$0xf]
        %v1074 = vld [vmem:[%s2 + $0xc] sm:$0xf]
        %1076 = vrot.lane.b32.xlu0 %v1067, 64
        %v1077 = vpop.permute.xlu0 %1076
        %v1082 = vunpack.c.l.b16 %v1071
        %v1083 = vunpack.c.l.b16 %v1072
        %v1084 = vunpack.c.l.b16 %v1073
        %v1085 = vunpack.c.l.b16 %v1074
        %v1086 = vpack.c.b16 %v1083, %v1082
        %v1087 = vpack.c.b16 %v1085, %v1084
        %v1091 = vsel %vm554, %v1077, 0
        %1093 = vmatprep.subr.bf16.mxu0 0
        %1094 = vmatpush1.bf16.msra.mxu0 %v1086
        %1095 = vmatprep.subr.bf16.mxu0 0
        %1096 = vmatpush1.bf16.msra.mxu0 %v1087
        %1097 = vmatprep.subr.bf16.mxu0 0
        %1098 = vmatpush1.bf16.msra.mxu0 0
        %1099 = vmatprep.subr.bf16.mxu0 0
        %1100 = vmatpush1.bf16.msra.mxu0 0
        %1101 = vmatprep.subr.bf16.mxu0 0
        %1102 = vmatpush1.bf16.msra.mxu0 0
        %1103 = vmatprep.subr.bf16.mxu0 0
        %1104 = vmatpush1.bf16.msra.mxu0 0
        %1105 = vmatprep.subr.bf16.mxu0 0
        %1106 = vmatpush1.bf16.msra.mxu0 0
        %1107 = vmatprep.subr.bf16.mxu0 0
        %1108 = vmatpush1.bf16.msra.mxu0 0
        %1109 = vmatprep.subr.bf16.mxu0 0
        %1110 = vmatpush1.bf16.msra.mxu0 0
        %1111 = vmatprep.subr.bf16.mxu0 0
        %1112 = vmatpush1.bf16.msra.mxu0 0
        %1113 = vmatprep.subr.bf16.mxu0 0
        %1114 = vmatpush1.bf16.msra.mxu0 0
        %1115 = vmatprep.subr.bf16.mxu0 0
        %1116 = vmatpush1.bf16.msra.mxu0 0
        %1117 = vmatprep.subr.bf16.mxu0 0
        %1118 = vmatpush1.bf16.msra.mxu0 0
        %1119 = vmatprep.subr.bf16.mxu0 0
        %1120 = vmatpush1.bf16.msra.mxu0 0
        %1121 = vmatprep.subr.bf16.mxu0 0
        %1122 = vmatpush1.bf16.msra.mxu0 0
        %1123 = vmatprep.subr.bf16.mxu0 0
        %1124 = vmatpush1.bf16.msra.mxu0 0
        %1125 = vmatprep.mubr.bf16.mxu0 0
        %1126 = vmatmul.mubr.bf16.gmra.mrb[0].mxu0 %v1091
        %v1127 = vpop.f32.mrb[0].mxu0
        %v1128 = vadd.f32 0.0, %v1127
        %v1129 = vpop.f32.mrb[0].mxu0
        %v1130 = vpop.f32.mrb[0].mxu0
        %v1131 = vadd.f32 0.0, %v1130
        %v1132 = vpop.f32.mrb[0].mxu0
        %1133 = vdwg.mxu0
        %v1134 = vrot.slane %v1128, 7
        %v1135 = vrot.slane %v1131, 7
        %v1136 = vsel %vm601, %v1134, %v1135
        %v1137 = vsel %vm601, %v1135, %v1134
        %v1138 = vsel %vm606, %v1137, 0.0
        %v1139 = vsel %vm607, %v1136, 0.0
        %v1140 = vadd.f32 %v1069, %v1138
        %v1141 = vadd.f32 %v1070, %v1139
        %v1142 = vld [vmem:[%s612] sm:$0xf]
        %v1143 = vld [vmem:[%s612 + $0x4] sm:$0xf]
        %v1144 = vld [vmem:[%s612 + $0x8] sm:$0xf]
        %v1145 = vld [vmem:[%s612 + $0xc] sm:$0xf]
        %v1150 = vunpack.c.l.b16 %v1142
        %v1151 = vunpack.c.l.b16 %v1143
        %v1152 = vunpack.c.l.b16 %v1144
        %v1153 = vunpack.c.l.b16 %v1145
        %v1154 = vpack.c.b16 %v1151, %v1150
        %v1155 = vpack.c.b16 %v1153, %v1152
        %1158 = vmatprep.subr.bf16.mxu0 0
        %1159 = vmatpush1.bf16.msra.mxu0 %v1154
        %1160 = vmatprep.subr.bf16.mxu0 0
        %1161 = vmatpush1.bf16.msra.mxu0 %v1155
        %1162 = vmatprep.subr.bf16.mxu0 0
        %1163 = vmatpush1.bf16.msra.mxu0 0
        %1164 = vmatprep.subr.bf16.mxu0 0
        %1165 = vmatpush1.bf16.msra.mxu0 0
        %1166 = vmatprep.subr.bf16.mxu0 0
        %1167 = vmatpush1.bf16.msra.mxu0 0
        %1168 = vmatprep.subr.bf16.mxu0 0
        %1169 = vmatpush1.bf16.msra.mxu0 0
        %1170 = vmatprep.subr.bf16.mxu0 0
        %1171 = vmatpush1.bf16.msra.mxu0 0
        %1172 = vmatprep.subr.bf16.mxu0 0
        %1173 = vmatpush1.bf16.msra.mxu0 0
        %1174 = vmatprep.subr.bf16.mxu0 0
        %1175 = vmatpush1.bf16.msra.mxu0 0
        %1176 = vmatprep.subr.bf16.mxu0 0
        %1177 = vmatpush1.bf16.msra.mxu0 0
        %1178 = vmatprep.subr.bf16.mxu0 0
        %1179 = vmatpush1.bf16.msra.mxu0 0
        %1180 = vmatprep.subr.bf16.mxu0 0
        %1181 = vmatpush1.bf16.msra.mxu0 0
        %1182 = vmatprep.subr.bf16.mxu0 0
        %1183 = vmatpush1.bf16.msra.mxu0 0
        %1184 = vmatprep.subr.bf16.mxu0 0
        %1185 = vmatpush1.bf16.msra.mxu0 0
        %1186 = vmatprep.subr.bf16.mxu0 0
        %1187 = vmatpush1.bf16.msra.mxu0 0
        %1188 = vmatprep.subr.bf16.mxu0 0
        %1189 = vmatpush1.bf16.msra.mxu0 0
        %1190 = vmatprep.mubr.bf16.mxu0 0
        %1191 = vmatmul.mubr.bf16.gmra.mrb[0].mxu0 %v1091
        %v1192 = vpop.f32.mrb[0].mxu0
        %v1193 = vadd.f32 0.0, %v1192
        %v1194 = vpop.f32.mrb[0].mxu0
        %v1195 = vpop.f32.mrb[0].mxu0
        %v1196 = vadd.f32 0.0, %v1195
        %v1197 = vpop.f32.mrb[0].mxu0
        %1198 = vdwg.mxu0
        %v1199 = vadd.f32 %v1140, %v1193
        %v1200 = vadd.f32 %v1141, %v1196
        %v1201 = vld [vmem:[%s672] sm:$0xf]
        %v1202 = vld [vmem:[%s672 + $0x4] sm:$0xf]
        %v1203 = vld [vmem:[%s672 + $0x8] sm:$0xf]
        %v1204 = vld [vmem:[%s672 + $0xc] sm:$0xf]
        %v1209 = vunpack.c.l.b16 %v1201
        %v1210 = vunpack.c.l.b16 %v1202
        %v1211 = vunpack.c.l.b16 %v1203
        %v1212 = vunpack.c.l.b16 %v1204
        %v1213 = vpack.c.b16 %v1210, %v1209
        %v1214 = vpack.c.b16 %v1212, %v1211
        %1217 = vmatprep.subr.bf16.mxu0 0
        %1218 = vmatpush1.bf16.msra.mxu0 %v1213
        %1219 = vmatprep.subr.bf16.mxu0 0
        %1220 = vmatpush1.bf16.msra.mxu0 %v1214
        %1221 = vmatprep.subr.bf16.mxu0 0
        %1222 = vmatpush1.bf16.msra.mxu0 0
        %1223 = vmatprep.subr.bf16.mxu0 0
        %1224 = vmatpush1.bf16.msra.mxu0 0
        %1225 = vmatprep.subr.bf16.mxu0 0
        %1226 = vmatpush1.bf16.msra.mxu0 0
        %1227 = vmatprep.subr.bf16.mxu0 0
        %1228 = vmatpush1.bf16.msra.mxu0 0
        %1229 = vmatprep.subr.bf16.mxu0 0
        %1230 = vmatpush1.bf16.msra.mxu0 0
        %1231 = vmatprep.subr.bf16.mxu0 0
        %1232 = vmatpush1.bf16.msra.mxu0 0
        %1233 = vmatprep.subr.bf16.mxu0 0
        %1234 = vmatpush1.bf16.msra.mxu0 0
        %1235 = vmatprep.subr.bf16.mxu0 0
        %1236 = vmatpush1.bf16.msra.mxu0 0
        %1237 = vmatprep.subr.bf16.mxu0 0
        %1238 = vmatpush1.bf16.msra.mxu0 0
        %1239 = vmatprep.subr.bf16.mxu0 0
        %1240 = vmatpush1.bf16.msra.mxu0 0
        %1241 = vmatprep.subr.bf16.mxu0 0
        %1242 = vmatpush1.bf16.msra.mxu0 0
        %1243 = vmatprep.subr.bf16.mxu0 0
        %1244 = vmatpush1.bf16.msra.mxu0 0
        %1245 = vmatprep.subr.bf16.mxu0 0
        %1246 = vmatpush1.bf16.msra.mxu0 0
        %1247 = vmatprep.subr.bf16.mxu0 0
        %1248 = vmatpush1.bf16.msra.mxu0 0
        %1249 = vmatprep.mubr.bf16.mxu0 0
        %1250 = vmatmul.mubr.bf16.gmra.mrb[0].mxu0 %v1091
        %v1251 = vpop.f32.mrb[0].mxu0
        %v1252 = vadd.f32 0.0, %v1251
        %v1253 = vpop.f32.mrb[0].mxu0
        %v1254 = vpop.f32.mrb[0].mxu0
        %v1255 = vadd.f32 0.0, %v1254
        %v1256 = vpop.f32.mrb[0].mxu0
        %1257 = vdwg.mxu0
        %v1258 = vrot.slane %v1252, 1
        %v1259 = vrot.slane %v1255, 1
        %v1260 = vsel %vm732, %v1258, %v1259
        %v1261 = vsel %vm732, %v1259, %v1258
        %v1262 = vsel %vm737, %v1260, 0.0
        %v1263 = vsel %vm738, %v1261, 0.0
        %v1264 = vadd.f32 %v1199, %v1262
        %v1265 = vadd.f32 %v1200, %v1263
        %v1266 = vxor.u32 %v1264, 2147483648
        %v1267 = vxor.u32 %v1265, 2147483648
        %v1268 = vmul.f32 %v1266, 1.442695
        %v1269 = vpow.pop %v1268
        %v1270 = vmul.f32 %v1267, 1.442695
        %v1271 = vpow.pop %v1270
        %v1272 = vadd.f32 %v1269, 1.0
        %v1273 = vadd.f32 %v1271, 1.0
        %v1274 = vrcp.pop %v1272
        %v1275 = vmul.f32 1.0, %v1274
        %v1276 = vrcp.pop %v1273
        %v1277 = vmul.f32 1.0, %v1276
        %v1278 = vtanh.pop %v1264
        %v1279 = vtanh.pop %v1265
        %v1280 = vmul.f32 %v1275, %v1042
        %v1281 = vmul.f32 %v1277, %v1043
        %1284 = vrot.lane.b32.xlu0 %v1278, 32
        %v1285 = vpop.permute.xlu0 %1284
        %1286 = vrot.lane.b32.xlu0 %v1279, 32
        %v1287 = vpop.permute.xlu0 %1286
        %v1290 = vmul.f32 %v1275, %v1285
        %v1291 = vmul.f32 %v1277, %v1287
        %1294 = vrot.lane.b32.xlu0 %v1290, 32
        %v1295 = vpop.permute.xlu0 %1294
        %1296 = vrot.lane.b32.xlu0 %v1291, 32
        %v1297 = vpop.permute.xlu0 %1296
        %v1300 = vadd.f32 %v1280, %v1295
        %v1301 = vadd.f32 %v1281, %v1297
        %v1302 = vtanh.pop %v1300
        %v1303 = vtanh.pop %v1301
        %1306 = vrot.lane.b32.xlu0 %v1302, 32
        %v1307 = vpop.permute.xlu0 %1306
        %1308 = vrot.lane.b32.xlu0 %v1303, 32
        %v1309 = vpop.permute.xlu0 %1308
        %v1312 = vmul.f32 %v1275, %v1307
        %v1313 = vmul.f32 %v1277, %v1309
        %1316 = vrot.lane.b32.xlu0 %v1312, 64
        %v1317 = vpop.permute.xlu0 %1316
        %1318 = vrot.lane.b32.xlu0 %v1313, 64
        %v1319 = vpop.permute.xlu0 %1318
        %s1322 = scalar_lea.vmem %s281, 32
        %1323 = vst.msk [vmem:[%s1322] sm:$0xff] %vm554, %v1317
        %1324 = vst.msk [vmem:[%s1322 + $0x8] sm:$0xff] %vm554, %v1319
        %v1325 = vpack.c.bf16 %v1313, %v1312
        %s1326 = scalar_lea.vmem [#allocation2], 48
        %v1327 = vld [vmem:[%s1326] sm:$0xff]
        %v1328 = vld [vmem:[%s1326 + $0x8] sm:$0xff]
        %v1329 = vld [vmem:[%s2] sm:$0xf]
        %v1330 = vld [vmem:[%s2 + $0x4] sm:$0xf]
        %v1331 = vld [vmem:[%s2 + $0x8] sm:$0xf]
        %v1332 = vld [vmem:[%s2 + $0xc] sm:$0xf]
        %1334 = vrot.lane.b32.xlu0 %v1325, 64
        %v1335 = vpop.permute.xlu0 %1334
        %v1340 = vunpack.c.l.b16 %v1329
        %v1341 = vunpack.c.l.b16 %v1330
        %v1342 = vunpack.c.l.b16 %v1331
        %v1343 = vunpack.c.l.b16 %v1332
        %v1344 = vpack.c.b16 %v1341, %v1340
        %v1345 = vpack.c.b16 %v1343, %v1342
        %v1349 = vsel %vm554, %v1335, 0
        %1351 = vmatprep.subr.bf16.mxu0 0
        %1352 = vmatpush1.bf16.msra.mxu0 %v1344
        %1353 = vmatprep.subr.bf16.mxu0 0
        %1354 = vmatpush1.bf16.msra.mxu0 %v1345
        %1355 = vmatprep.subr.bf16.mxu0 0
        %1356 = vmatpush1.bf16.msra.mxu0 0
        %1357 = vmatprep.subr.bf16.mxu0 0
        %1358 = vmatpush1.bf16.msra.mxu0 0
        %1359 = vmatprep.subr.bf16.mxu0 0
        %1360 = vmatpush1.bf16.msra.mxu0 0
        %1361 = vmatprep.subr.bf16.mxu0 0
        %1362 = vmatpush1.bf16.msra.mxu0 0
        %1363 = vmatprep.subr.bf16.mxu0 0
        %1364 = vmatpush1.bf16.msra.mxu0 0
        %1365 = vmatprep.subr.bf16.mxu0 0
        %1366 = vmatpush1.bf16.msra.mxu0 0
        %1367 = vmatprep.subr.bf16.mxu0 0
        %1368 = vmatpush1.bf16.msra.mxu0 0
        %1369 = vmatprep.subr.bf16.mxu0 0
        %1370 = vmatpush1.bf16.msra.mxu0 0
        %1371 = vmatprep.subr.bf16.mxu0 0
        %1372 = vmatpush1.bf16.msra.mxu0 0
        %1373 = vmatprep.subr.bf16.mxu0 0
        %1374 = vmatpush1.bf16.msra.mxu0 0
        %1375 = vmatprep.subr.bf16.mxu0 0
        %1376 = vmatpush1.bf16.msra.mxu0 0
        %1377 = vmatprep.subr.bf16.mxu0 0
        %1378 = vmatpush1.bf16.msra.mxu0 0
        %1379 = vmatprep.subr.bf16.mxu0 0
        %1380 = vmatpush1.bf16.msra.mxu0 0
        %1381 = vmatprep.subr.bf16.mxu0 0
        %1382 = vmatpush1.bf16.msra.mxu0 0
        %1383 = vmatprep.mubr.bf16.mxu0 0
        %1384 = vmatmul.mubr.bf16.gmra.mrb[0].mxu0 %v1349
        %v1385 = vpop.f32.mrb[0].mxu0
        %v1386 = vadd.f32 0.0, %v1385
        %v1387 = vpop.f32.mrb[0].mxu0
        %v1388 = vpop.f32.mrb[0].mxu0
        %v1389 = vadd.f32 0.0, %v1388
        %v1390 = vpop.f32.mrb[0].mxu0
        %1391 = vdwg.mxu0
        %v1392 = vrot.slane %v1386, 7
        %v1393 = vrot.slane %v1389, 7
        %v1394 = vsel %vm601, %v1392, %v1393
        %v1395 = vsel %vm601, %v1393, %v1392
        %v1396 = vsel %vm606, %v1395, 0.0
        %v1397 = vsel %vm607, %v1394, 0.0
        %v1398 = vadd.f32 %v1327, %v1396
        %v1399 = vadd.f32 %v1328, %v1397
        %v1400 = vld [vmem:[%s612] sm:$0xf]
        %v1401 = vld [vmem:[%s612 + $0x4] sm:$0xf]
        %v1402 = vld [vmem:[%s612 + $0x8] sm:$0xf]
        %v1403 = vld [vmem:[%s612 + $0xc] sm:$0xf]
        %v1408 = vunpack.c.l.b16 %v1400
        %v1409 = vunpack.c.l.b16 %v1401
        %v1410 = vunpack.c.l.b16 %v1402
        %v1411 = vunpack.c.l.b16 %v1403
        %v1412 = vpack.c.b16 %v1409, %v1408
        %v1413 = vpack.c.b16 %v1411, %v1410
        %1416 = vmatprep.subr.bf16.mxu0 0
        %1417 = vmatpush1.bf16.msra.mxu0 %v1412
        %1418 = vmatprep.subr.bf16.mxu0 0
        %1419 = vmatpush1.bf16.msra.mxu0 %v1413
        %1420 = vmatprep.subr.bf16.mxu0 0
        %1421 = vmatpush1.bf16.msra.mxu0 0
        %1422 = vmatprep.subr.bf16.mxu0 0
        %1423 = vmatpush1.bf16.msra.mxu0 0
        %1424 = vmatprep.subr.bf16.mxu0 0
        %1425 = vmatpush1.bf16.msra.mxu0 0
        %1426 = vmatprep.subr.bf16.mxu0 0
        %1427 = vmatpush1.bf16.msra.mxu0 0
        %1428 = vmatprep.subr.bf16.mxu0 0
        %1429 = vmatpush1.bf16.msra.mxu0 0
        %1430 = vmatprep.subr.bf16.mxu0 0
        %1431 = vmatpush1.bf16.msra.mxu0 0
        %1432 = vmatprep.subr.bf16.mxu0 0
        %1433 = vmatpush1.bf16.msra.mxu0 0
        %1434 = vmatprep.subr.bf16.mxu0 0
        %1435 = vmatpush1.bf16.msra.mxu0 0
        %1436 = vmatprep.subr.bf16.mxu0 0
        %1437 = vmatpush1.bf16.msra.mxu0 0
        %1438 = vmatprep.subr.bf16.mxu0 0
        %1439 = vmatpush1.bf16.msra.mxu0 0
        %1440 = vmatprep.subr.bf16.mxu0 0
        %1441 = vmatpush1.bf16.msra.mxu0 0
        %1442 = vmatprep.subr.bf16.mxu0 0
        %1443 = vmatpush1.bf16.msra.mxu0 0
        %1444 = vmatprep.subr.bf16.mxu0 0
        %1445 = vmatpush1.bf16.msra.mxu0 0
        %1446 = vmatprep.subr.bf16.mxu0 0
        %1447 = vmatpush1.bf16.msra.mxu0 0
        %1448 = vmatprep.mubr.bf16.mxu0 0
        %1449 = vmatmul.mubr.bf16.gmra.mrb[0].mxu0 %v1349
        %v1450 = vpop.f32.mrb[0].mxu0
        %v1451 = vadd.f32 0.0, %v1450
        %v1452 = vpop.f32.mrb[0].mxu0
        %v1453 = vpop.f32.mrb[0].mxu0
        %v1454 = vadd.f32 0.0, %v1453
        %v1455 = vpop.f32.mrb[0].mxu0
        %1456 = vdwg.mxu0
        %v1457 = vadd.f32 %v1398, %v1451
        %v1458 = vadd.f32 %v1399, %v1454
        %v1459 = vld [vmem:[%s672] sm:$0xf]
        %v1460 = vld [vmem:[%s672 + $0x4] sm:$0xf]
        %v1461 = vld [vmem:[%s672 + $0x8] sm:$0xf]
        %v1462 = vld [vmem:[%s672 + $0xc] sm:$0xf]
        %v1467 = vunpack.c.l.b16 %v1459
        %v1468 = vunpack.c.l.b16 %v1460
        %v1469 = vunpack.c.l.b16 %v1461
        %v1470 = vunpack.c.l.b16 %v1462
        %v1471 = vpack.c.b16 %v1468, %v1467
        %v1472 = vpack.c.b16 %v1470, %v1469
        %1475 = vmatprep.subr.bf16.mxu0 0
        %1476 = vmatpush1.bf16.msra.mxu0 %v1471
        %1477 = vmatprep.subr.bf16.mxu0 0
        %1478 = vmatpush1.bf16.msra.mxu0 %v1472
        %1479 = vmatprep.subr.bf16.mxu0 0
        %1480 = vmatpush1.bf16.msra.mxu0 0
        %1481 = vmatprep.subr.bf16.mxu0 0
        %1482 = vmatpush1.bf16.msra.mxu0 0
        %1483 = vmatprep.subr.bf16.mxu0 0
        %1484 = vmatpush1.bf16.msra.mxu0 0
        %1485 = vmatprep.subr.bf16.mxu0 0
        %1486 = vmatpush1.bf16.msra.mxu0 0
        %1487 = vmatprep.subr.bf16.mxu0 0
        %1488 = vmatpush1.bf16.msra.mxu0 0
        %1489 = vmatprep.subr.bf16.mxu0 0
        %1490 = vmatpush1.bf16.msra.mxu0 0
        %1491 = vmatprep.subr.bf16.mxu0 0
        %1492 = vmatpush1.bf16.msra.mxu0 0
        %1493 = vmatprep.subr.bf16.mxu0 0
        %1494 = vmatpush1.bf16.msra.mxu0 0
        %1495 = vmatprep.subr.bf16.mxu0 0
        %1496 = vmatpush1.bf16.msra.mxu0 0
        %1497 = vmatprep.subr.bf16.mxu0 0
        %1498 = vmatpush1.bf16.msra.mxu0 0
        %1499 = vmatprep.subr.bf16.mxu0 0
        %1500 = vmatpush1.bf16.msra.mxu0 0
        %1501 = vmatprep.subr.bf16.mxu0 0
        %1502 = vmatpush1.bf16.msra.mxu0 0
        %1503 = vmatprep.subr.bf16.mxu0 0
        %1504 = vmatpush1.bf16.msra.mxu0 0
        %1505 = vmatprep.subr.bf16.mxu0 0
        %1506 = vmatpush1.bf16.msra.mxu0 0
        %1507 = vmatprep.mubr.bf16.mxu0 0
        %1508 = vmatmul.mubr.bf16.gmra.mrb[0].mxu0 %v1349
        %v1509 = vpop.f32.mrb[0].mxu0
        %v1510 = vadd.f32 0.0, %v1509
        %v1511 = vpop.f32.mrb[0].mxu0
        %v1512 = vpop.f32.mrb[0].mxu0
        %v1513 = vadd.f32 0.0, %v1512
        %v1514 = vpop.f32.mrb[0].mxu0
        %1515 = vdwg.mxu0
        %v1516 = vrot.slane %v1510, 1
        %v1517 = vrot.slane %v1513, 1
        %v1518 = vsel %vm732, %v1516, %v1517
        %v1519 = vsel %vm732, %v1517, %v1516
        %v1520 = vsel %vm737, %v1518, 0.0
        %v1521 = vsel %vm738, %v1519, 0.0
        %v1522 = vadd.f32 %v1457, %v1520
        %v1523 = vadd.f32 %v1458, %v1521
        %v1524 = vxor.u32 %v1522, 2147483648
        %v1525 = vxor.u32 %v1523, 2147483648
        %v1526 = vmul.f32 %v1524, 1.442695
        %v1527 = vpow.pop %v1526
        %v1528 = vmul.f32 %v1525, 1.442695
        %v1529 = vpow.pop %v1528
        %v1530 = vadd.f32 %v1527, 1.0
        %v1531 = vadd.f32 %v1529, 1.0
        %v1532 = vrcp.pop %v1530
        %v1533 = vmul.f32 1.0, %v1532
        %v1534 = vrcp.pop %v1531
        %v1535 = vmul.f32 1.0, %v1534
        %v1536 = vtanh.pop %v1522
        %v1537 = vtanh.pop %v1523
        %v1538 = vmul.f32 %v1533, %v1300
        %v1539 = vmul.f32 %v1535, %v1301
        %1542 = vrot.lane.b32.xlu0 %v1536, 32
        %v1543 = vpop.permute.xlu0 %1542
        %1544 = vrot.lane.b32.xlu0 %v1537, 32
        %v1545 = vpop.permute.xlu0 %1544
        %v1548 = vmul.f32 %v1533, %v1543
        %v1549 = vmul.f32 %v1535, %v1545
        %1552 = vrot.lane.b32.xlu0 %v1548, 32
        %v1553 = vpop.permute.xlu0 %1552
        %1554 = vrot.lane.b32.xlu0 %v1549, 32
        %v1555 = vpop.permute.xlu0 %1554
        %v1558 = vadd.f32 %v1538, %v1553
        %v1559 = vadd.f32 %v1539, %v1555
        %v1560 = vtanh.pop %v1558
        %v1561 = vtanh.pop %v1559
        %1564 = vrot.lane.b32.xlu0 %v1560, 32
        %v1565 = vpop.permute.xlu0 %1564
        %1566 = vrot.lane.b32.xlu0 %v1561, 32
        %v1567 = vpop.permute.xlu0 %1566
        %v1570 = vmul.f32 %v1533, %v1565
        %v1571 = vmul.f32 %v1535, %v1567
        %1574 = vrot.lane.b32.xlu0 %v1570, 64
        %v1575 = vpop.permute.xlu0 %1574
        %1576 = vrot.lane.b32.xlu0 %v1571, 64
        %v1577 = vpop.permute.xlu0 %1576
        %s1580 = scalar_lea.vmem %s281, 48
        %1581 = vst.msk [vmem:[%s1580] sm:$0xff] %vm554, %v1575
        %1582 = vst.msk [vmem:[%s1580 + $0x8] sm:$0xff] %vm554, %v1577
        %v1583 = vpack.c.bf16 %v1571, %v1570
        %s1584 = scalar_lea.vmem [#allocation2], 64
        %v1585 = vld [vmem:[%s1584] sm:$0xff]
        %v1586 = vld [vmem:[%s1584 + $0x8] sm:$0xff]
        %v1587 = vld [vmem:[%s2] sm:$0xf]
        %v1588 = vld [vmem:[%s2 + $0x4] sm:$0xf]
        %v1589 = vld [vmem:[%s2 + $0x8] sm:$0xf]
        %v1590 = vld [vmem:[%s2 + $0xc] sm:$0xf]
        %1592 = vrot.lane.b32.xlu0 %v1583, 64
        %v1593 = vpop.permute.xlu0 %1592
        %v1598 = vunpack.c.l.b16 %v1587
        %v1599 = vunpack.c.l.b16 %v1588
        %v1600 = vunpack.c.l.b16 %v1589
        %v1601 = vunpack.c.l.b16 %v1590
        %v1602 = vpack.c.b16 %v1599, %v1598
        %v1603 = vpack.c.b16 %v1601, %v1600
        %v1607 = vsel %vm554, %v1593, 0
        %1609 = vmatprep.subr.bf16.mxu0 0
        %1610 = vmatpush1.bf16.msra.mxu0 %v1602
        %1611 = vmatprep.subr.bf16.mxu0 0
        %1612 = vmatpush1.bf16.msra.mxu0 %v1603
        %1613 = vmatprep.subr.bf16.mxu0 0
        %1614 = vmatpush1.bf16.msra.mxu0 0
        %1615 = vmatprep.subr.bf16.mxu0 0
        %1616 = vmatpush1.bf16.msra.mxu0 0
        %1617 = vmatprep.subr.bf16.mxu0 0
        %1618 = vmatpush1.bf16.msra.mxu0 0
        %1619 = vmatprep.subr.bf16.mxu0 0
        %1620 = vmatpush1.bf16.msra.mxu0 0
        %1621 = vmatprep.subr.bf16.mxu0 0
        %1622 = vmatpush1.bf16.msra.mxu0 0
        %1623 = vmatprep.subr.bf16.mxu0 0
        %1624 = vmatpush1.bf16.msra.mxu0 0
        %1625 = vmatprep.subr.bf16.mxu0 0
        %1626 = vmatpush1.bf16.msra.mxu0 0
        %1627 = vmatprep.subr.bf16.mxu0 0
        %1628 = vmatpush1.bf16.msra.mxu0 0
        %1629 = vmatprep.subr.bf16.mxu0 0
        %1630 = vmatpush1.bf16.msra.mxu0 0
        %1631 = vmatprep.subr.bf16.mxu0 0
        %1632 = vmatpush1.bf16.msra.mxu0 0
        %1633 = vmatprep.subr.bf16.mxu0 0
        %1634 = vmatpush1.bf16.msra.mxu0 0
        %1635 = vmatprep.subr.bf16.mxu0 0
        %1636 = vmatpush1.bf16.msra.mxu0 0
        %1637 = vmatprep.subr.bf16.mxu0 0
        %1638 = vmatpush1.bf16.msra.mxu0 0
        %1639 = vmatprep.subr.bf16.mxu0 0
        %1640 = vmatpush1.bf16.msra.mxu0 0
        %1641 = vmatprep.mubr.bf16.mxu0 0
        %1642 = vmatmul.mubr.bf16.gmra.mrb[0].mxu0 %v1607
        %v1643 = vpop.f32.mrb[0].mxu0
        %v1644 = vadd.f32 0.0, %v1643
        %v1645 = vpop.f32.mrb[0].mxu0
        %v1646 = vpop.f32.mrb[0].mxu0
        %v1647 = vadd.f32 0.0, %v1646
        %v1648 = vpop.f32.mrb[0].mxu0
        %1649 = vdwg.mxu0
        %v1650 = vrot.slane %v1644, 7
        %v1651 = vrot.slane %v1647, 7
        %v1652 = vsel %vm601, %v1650, %v1651
        %v1653 = vsel %vm601, %v1651, %v1650
        %v1654 = vsel %vm606, %v1653, 0.0
        %v1655 = vsel %vm607, %v1652, 0.0
        %v1656 = vadd.f32 %v1585, %v1654
        %v1657 = vadd.f32 %v1586, %v1655
        %v1658 = vld [vmem:[%s612] sm:$0xf]
        %v1659 = vld [vmem:[%s612 + $0x4] sm:$0xf]
        %v1660 = vld [vmem:[%s612 + $0x8] sm:$0xf]
        %v1661 = vld [vmem:[%s612 + $0xc] sm:$0xf]
        %v1666 = vunpack.c.l.b16 %v1658
        %v1667 = vunpack.c.l.b16 %v1659
        %v1668 = vunpack.c.l.b16 %v1660
        %v1669 = vunpack.c.l.b16 %v1661
        %v1670 = vpack.c.b16 %v1667, %v1666
        %v1671 = vpack.c.b16 %v1669, %v1668
        %1674 = vmatprep.subr.bf16.mxu0 0
        %1675 = vmatpush1.bf16.msra.mxu0 %v1670
        %1676 = vmatprep.subr.bf16.mxu0 0
        %1677 = vmatpush1.bf16.msra.mxu0 %v1671
        %1678 = vmatprep.subr.bf16.mxu0 0
        %1679 = vmatpush1.bf16.msra.mxu0 0
        %1680 = vmatprep.subr.bf16.mxu0 0
        %1681 = vmatpush1.bf16.msra.mxu0 0
        %1682 = vmatprep.subr.bf16.mxu0 0
        %1683 = vmatpush1.bf16.msra.mxu0 0
        %1684 = vmatprep.subr.bf16.mxu0 0
        %1685 = vmatpush1.bf16.msra.mxu0 0
        %1686 = vmatprep.subr.bf16.mxu0 0
        %1687 = vmatpush1.bf16.msra.mxu0 0
        %1688 = vmatprep.subr.bf16.mxu0 0
        %1689 = vmatpush1.bf16.msra.mxu0 0
        %1690 = vmatprep.subr.bf16.mxu0 0
        %1691 = vmatpush1.bf16.msra.mxu0 0
        %1692 = vmatprep.subr.bf16.mxu0 0
        %1693 = vmatpush1.bf16.msra.mxu0 0
        %1694 = vmatprep.subr.bf16.mxu0 0
        %1695 = vmatpush1.bf16.msra.mxu0 0
        %1696 = vmatprep.subr.bf16.mxu0 0
        %1697 = vmatpush1.bf16.msra.mxu0 0
        %1698 = vmatprep.subr.bf16.mxu0 0
        %1699 = vmatpush1.bf16.msra.mxu0 0
        %1700 = vmatprep.subr.bf16.mxu0 0
        %1701 = vmatpush1.bf16.msra.mxu0 0
        %1702 = vmatprep.subr.bf16.mxu0 0
        %1703 = vmatpush1.bf16.msra.mxu0 0
        %1704 = vmatprep.subr.bf16.mxu0 0
        %1705 = vmatpush1.bf16.msra.mxu0 0
        %1706 = vmatprep.mubr.bf16.mxu0 0
        %1707 = vmatmul.mubr.bf16.gmra.mrb[0].mxu0 %v1607
        %v1708 = vpop.f32.mrb[0].mxu0
        %v1709 = vadd.f32 0.0, %v1708
        %v1710 = vpop.f32.mrb[0].mxu0
        %v1711 = vpop.f32.mrb[0].mxu0
        %v1712 = vadd.f32 0.0, %v1711
        %v1713 = vpop.f32.mrb[0].mxu0
        %1714 = vdwg.mxu0
        %v1715 = vadd.f32 %v1656, %v1709
        %v1716 = vadd.f32 %v1657, %v1712
        %v1717 = vld [vmem:[%s672] sm:$0xf]
        %v1718 = vld [vmem:[%s672 + $0x4] sm:$0xf]
        %v1719 = vld [vmem:[%s672 + $0x8] sm:$0xf]
        %v1720 = vld [vmem:[%s672 + $0xc] sm:$0xf]
        %v1725 = vunpack.c.l.b16 %v1717
        %v1726 = vunpack.c.l.b16 %v1718
        %v1727 = vunpack.c.l.b16 %v1719
        %v1728 = vunpack.c.l.b16 %v1720
        %v1729 = vpack.c.b16 %v1726, %v1725
        %v1730 = vpack.c.b16 %v1728, %v1727
        %1733 = vmatprep.subr.bf16.mxu0 0
        %1734 = vmatpush1.bf16.msra.mxu0 %v1729
        %1735 = vmatprep.subr.bf16.mxu0 0
        %1736 = vmatpush1.bf16.msra.mxu0 %v1730
        %1737 = vmatprep.subr.bf16.mxu0 0
        %1738 = vmatpush1.bf16.msra.mxu0 0
        %1739 = vmatprep.subr.bf16.mxu0 0
        %1740 = vmatpush1.bf16.msra.mxu0 0
        %1741 = vmatprep.subr.bf16.mxu0 0
        %1742 = vmatpush1.bf16.msra.mxu0 0
        %1743 = vmatprep.subr.bf16.mxu0 0
        %1744 = vmatpush1.bf16.msra.mxu0 0
        %1745 = vmatprep.subr.bf16.mxu0 0
        %1746 = vmatpush1.bf16.msra.mxu0 0
        %1747 = vmatprep.subr.bf16.mxu0 0
        %1748 = vmatpush1.bf16.msra.mxu0 0
        %1749 = vmatprep.subr.bf16.mxu0 0
        %1750 = vmatpush1.bf16.msra.mxu0 0
        %1751 = vmatprep.subr.bf16.mxu0 0
        %1752 = vmatpush1.bf16.msra.mxu0 0
        %1753 = vmatprep.subr.bf16.mxu0 0
        %1754 = vmatpush1.bf16.msra.mxu0 0
        %1755 = vmatprep.subr.bf16.mxu0 0
        %1756 = vmatpush1.bf16.msra.mxu0 0
        %1757 = vmatprep.subr.bf16.mxu0 0
        %1758 = vmatpush1.bf16.msra.mxu0 0
        %1759 = vmatprep.subr.bf16.mxu0 0
        %1760 = vmatpush1.bf16.msra.mxu0 0
        %1761 = vmatprep.subr.bf16.mxu0 0
        %1762 = vmatpush1.bf16.msra.mxu0 0
        %1763 = vmatprep.subr.bf16.mxu0 0
        %1764 = vmatpush1.bf16.msra.mxu0 0
        %1765 = vmatprep.mubr.bf16.mxu0 0
        %1766 = vmatmul.mubr.bf16.gmra.mrb[0].mxu0 %v1607
        %v1767 = vpop.f32.mrb[0].mxu0
        %v1768 = vadd.f32 0.0, %v1767
        %v1769 = vpop.f32.mrb[0].mxu0
        %v1770 = vpop.f32.mrb[0].mxu0
        %v1771 = vadd.f32 0.0, %v1770
        %v1772 = vpop.f32.mrb[0].mxu0
        %1773 = vdwg.mxu0
        %v1774 = vrot.slane %v1768, 1
        %v1775 = vrot.slane %v1771, 1
        %v1776 = vsel %vm732, %v1774, %v1775
        %v1777 = vsel %vm732, %v1775, %v1774
        %v1778 = vsel %vm737, %v1776, 0.0
        %v1779 = vsel %vm738, %v1777, 0.0
        %v1780 = vadd.f32 %v1715, %v1778
        %v1781 = vadd.f32 %v1716, %v1779
        %v1782 = vxor.u32 %v1780, 2147483648
        %v1783 = vxor.u32 %v1781, 2147483648
        %v1784 = vmul.f32 %v1782, 1.442695
        %v1785 = vpow.pop %v1784
        %v1786 = vmul.f32 %v1783, 1.442695
        %v1787 = vpow.pop %v1786
        %v1788 = vadd.f32 %v1785, 1.0
        %v1789 = vadd.f32 %v1787, 1.0
        %v1790 = vrcp.pop %v1788
        %v1791 = vmul.f32 1.0, %v1790
        %v1792 = vrcp.pop %v1789
        %v1793 = vmul.f32 1.0, %v1792
        %v1794 = vtanh.pop %v1780
        %v1795 = vtanh.pop %v1781
        %v1796 = vmul.f32 %v1791, %v1558
        %v1797 = vmul.f32 %v1793, %v1559
        %1800 = vrot.lane.b32.xlu0 %v1794, 32
        %v1801 = vpop.permute.xlu0 %1800
        %1802 = vrot.lane.b32.xlu0 %v1795, 32
        %v1803 = vpop.permute.xlu0 %1802
        %v1806 = vmul.f32 %v1791, %v1801
        %v1807 = vmul.f32 %v1793, %v1803
        %1810 = vrot.lane.b32.xlu0 %v1806, 32
        %v1811 = vpop.permute.xlu0 %1810
        %1812 = vrot.lane.b32.xlu0 %v1807, 32
        %v1813 = vpop.permute.xlu0 %1812
        %v1816 = vadd.f32 %v1796, %v1811
        %v1817 = vadd.f32 %v1797, %v1813
        %v1818 = vtanh.pop %v1816
        %v1819 = vtanh.pop %v1817
        %1822 = vrot.lane.b32.xlu0 %v1818, 32
        %v1823 = vpop.permute.xlu0 %1822
        %1824 = vrot.lane.b32.xlu0 %v1819, 32
        %v1825 = vpop.permute.xlu0 %1824
        %v1828 = vmul.f32 %v1791, %v1823
        %v1829 = vmul.f32 %v1793, %v1825
        %1832 = vrot.lane.b32.xlu0 %v1828, 64
        %v1833 = vpop.permute.xlu0 %1832
        %1834 = vrot.lane.b32.xlu0 %v1829, 64
        %v1835 = vpop.permute.xlu0 %1834
        %s1838 = scalar_lea.vmem %s281, 64
        %1839 = vst.msk [vmem:[%s1838] sm:$0xff] %vm554, %v1833
        %1840 = vst.msk [vmem:[%s1838 + $0x8] sm:$0xff] %vm554, %v1835
        %v1841 = vpack.c.bf16 %v1829, %v1828
        %s1842 = scalar_lea.vmem [#allocation2], 80
        %v1843 = vld [vmem:[%s1842] sm:$0xff]
        %v1844 = vld [vmem:[%s1842 + $0x8] sm:$0xff]
        %v1845 = vld [vmem:[%s2] sm:$0xf]
        %v1846 = vld [vmem:[%s2 + $0x4] sm:$0xf]
        %v1847 = vld [vmem:[%s2 + $0x8] sm:$0xf]
        %v1848 = vld [vmem:[%s2 + $0xc] sm:$0xf]
        %1850 = vrot.lane.b32.xlu0 %v1841, 64
        %v1851 = vpop.permute.xlu0 %1850
        %v1856 = vunpack.c.l.b16 %v1845
        %v1857 = vunpack.c.l.b16 %v1846
        %v1858 = vunpack.c.l.b16 %v1847
        %v1859 = vunpack.c.l.b16 %v1848
        %v1860 = vpack.c.b16 %v1857, %v1856
        %v1861 = vpack.c.b16 %v1859, %v1858
        %v1865 = vsel %vm554, %v1851, 0
        %1867 = vmatprep.subr.bf16.mxu0 0
        %1868 = vmatpush1.bf16.msra.mxu0 %v1860
        %1869 = vmatprep.subr.bf16.mxu0 0
        %1870 = vmatpush1.bf16.msra.mxu0 %v1861
        %1871 = vmatprep.subr.bf16.mxu0 0
        %1872 = vmatpush1.bf16.msra.mxu0 0
        %1873 = vmatprep.subr.bf16.mxu0 0
        %1874 = vmatpush1.bf16.msra.mxu0 0
        %1875 = vmatprep.subr.bf16.mxu0 0
        %1876 = vmatpush1.bf16.msra.mxu0 0
        %1877 = vmatprep.subr.bf16.mxu0 0
        %1878 = vmatpush1.bf16.msra.mxu0 0
        %1879 = vmatprep.subr.bf16.mxu0 0
        %1880 = vmatpush1.bf16.msra.mxu0 0
        %1881 = vmatprep.subr.bf16.mxu0 0
        %1882 = vmatpush1.bf16.msra.mxu0 0
        %1883 = vmatprep.subr.bf16.mxu0 0
        %1884 = vmatpush1.bf16.msra.mxu0 0
        %1885 = vmatprep.subr.bf16.mxu0 0
        %1886 = vmatpush1.bf16.msra.mxu0 0
        %1887 = vmatprep.subr.bf16.mxu0 0
        %1888 = vmatpush1.bf16.msra.mxu0 0
        %1889 = vmatprep.subr.bf16.mxu0 0
        %1890 = vmatpush1.bf16.msra.mxu0 0
        %1891 = vmatprep.subr.bf16.mxu0 0
        %1892 = vmatpush1.bf16.msra.mxu0 0
        %1893 = vmatprep.subr.bf16.mxu0 0
        %1894 = vmatpush1.bf16.msra.mxu0 0
        %1895 = vmatprep.subr.bf16.mxu0 0
        %1896 = vmatpush1.bf16.msra.mxu0 0
        %1897 = vmatprep.subr.bf16.mxu0 0
        %1898 = vmatpush1.bf16.msra.mxu0 0
        %1899 = vmatprep.mubr.bf16.mxu0 0
        %1900 = vmatmul.mubr.bf16.gmra.mrb[0].mxu0 %v1865
        %v1901 = vpop.f32.mrb[0].mxu0
        %v1902 = vadd.f32 0.0, %v1901
        %v1903 = vpop.f32.mrb[0].mxu0
        %v1904 = vpop.f32.mrb[0].mxu0
        %v1905 = vadd.f32 0.0, %v1904
        %v1906 = vpop.f32.mrb[0].mxu0
        %1907 = vdwg.mxu0
        %v1908 = vrot.slane %v1902, 7
        %v1909 = vrot.slane %v1905, 7
        %v1910 = vsel %vm601, %v1908, %v1909
        %v1911 = vsel %vm601, %v1909, %v1908
        %v1912 = vsel %vm606, %v1911, 0.0
        %v1913 = vsel %vm607, %v1910, 0.0
        %v1914 = vadd.f32 %v1843, %v1912
        %v1915 = vadd.f32 %v1844, %v1913
        %v1916 = vld [vmem:[%s612] sm:$0xf]
        %v1917 = vld [vmem:[%s612 + $0x4] sm:$0xf]
        %v1918 = vld [vmem:[%s612 + $0x8] sm:$0xf]
        %v1919 = vld [vmem:[%s612 + $0xc] sm:$0xf]
        %v1924 = vunpack.c.l.b16 %v1916
        %v1925 = vunpack.c.l.b16 %v1917
        %v1926 = vunpack.c.l.b16 %v1918
        %v1927 = vunpack.c.l.b16 %v1919
        %v1928 = vpack.c.b16 %v1925, %v1924
        %v1929 = vpack.c.b16 %v1927, %v1926
        %1932 = vmatprep.subr.bf16.mxu0 0
        %1933 = vmatpush1.bf16.msra.mxu0 %v1928
        %1934 = vmatprep.subr.bf16.mxu0 0
        %1935 = vmatpush1.bf16.msra.mxu0 %v1929
        %1936 = vmatprep.subr.bf16.mxu0 0
        %1937 = vmatpush1.bf16.msra.mxu0 0
        %1938 = vmatprep.subr.bf16.mxu0 0
        %1939 = vmatpush1.bf16.msra.mxu0 0
        %1940 = vmatprep.subr.bf16.mxu0 0
        %1941 = vmatpush1.bf16.msra.mxu0 0
        %1942 = vmatprep.subr.bf16.mxu0 0
        %1943 = vmatpush1.bf16.msra.mxu0 0
        %1944 = vmatprep.subr.bf16.mxu0 0
        %1945 = vmatpush1.bf16.msra.mxu0 0
        %1946 = vmatprep.subr.bf16.mxu0 0
        %1947 = vmatpush1.bf16.msra.mxu0 0
        %1948 = vmatprep.subr.bf16.mxu0 0
        %1949 = vmatpush1.bf16.msra.mxu0 0
        %1950 = vmatprep.subr.bf16.mxu0 0
        %1951 = vmatpush1.bf16.msra.mxu0 0
        %1952 = vmatprep.subr.bf16.mxu0 0
        %1953 = vmatpush1.bf16.msra.mxu0 0
        %1954 = vmatprep.subr.bf16.mxu0 0
        %1955 = vmatpush1.bf16.msra.mxu0 0
        %1956 = vmatprep.subr.bf16.mxu0 0
        %1957 = vmatpush1.bf16.msra.mxu0 0
        %1958 = vmatprep.subr.bf16.mxu0 0
        %1959 = vmatpush1.bf16.msra.mxu0 0
        %1960 = vmatprep.subr.bf16.mxu0 0
        %1961 = vmatpush1.bf16.msra.mxu0 0
        %1962 = vmatprep.subr.bf16.mxu0 0
        %1963 = vmatpush1.bf16.msra.mxu0 0
        %1964 = vmatprep.mubr.bf16.mxu0 0
        %1965 = vmatmul.mubr.bf16.gmra.mrb[0].mxu0 %v1865
        %v1966 = vpop.f32.mrb[0].mxu0
        %v1967 = vadd.f32 0.0, %v1966
        %v1968 = vpop.f32.mrb[0].mxu0
        %v1969 = vpop.f32.mrb[0].mxu0
        %v1970 = vadd.f32 0.0, %v1969
        %v1971 = vpop.f32.mrb[0].mxu0
        %1972 = vdwg.mxu0
        %v1973 = vadd.f32 %v1914, %v1967
        %v1974 = vadd.f32 %v1915, %v1970
        %v1975 = vld [vmem:[%s672] sm:$0xf]
        %v1976 = vld [vmem:[%s672 + $0x4] sm:$0xf]
        %v1977 = vld [vmem:[%s672 + $0x8] sm:$0xf]
        %v1978 = vld [vmem:[%s672 + $0xc] sm:$0xf]
        %v1983 = vunpack.c.l.b16 %v1975
        %v1984 = vunpack.c.l.b16 %v1976
        %v1985 = vunpack.c.l.b16 %v1977
        %v1986 = vunpack.c.l.b16 %v1978
        %v1987 = vpack.c.b16 %v1984, %v1983
        %v1988 = vpack.c.b16 %v1986, %v1985
        %1991 = vmatprep.subr.bf16.mxu0 0
        %1992 = vmatpush1.bf16.msra.mxu0 %v1987
        %1993 = vmatprep.subr.bf16.mxu0 0
        %1994 = vmatpush1.bf16.msra.mxu0 %v1988
        %1995 = vmatprep.subr.bf16.mxu0 0
        %1996 = vmatpush1.bf16.msra.mxu0 0
        %1997 = vmatprep.subr.bf16.mxu0 0
        %1998 = vmatpush1.bf16.msra.mxu0 0
        %1999 = vmatprep.subr.bf16.mxu0 0
        %2000 = vmatpush1.bf16.msra.mxu0 0
        %2001 = vmatprep.subr.bf16.mxu0 0
        %2002 = vmatpush1.bf16.msra.mxu0 0
        %2003 = vmatprep.subr.bf16.mxu0 0
        %2004 = vmatpush1.bf16.msra.mxu0 0
        %2005 = vmatprep.subr.bf16.mxu0 0
        %2006 = vmatpush1.bf16.msra.mxu0 0
        %2007 = vmatprep.subr.bf16.mxu0 0
        %2008 = vmatpush1.bf16.msra.mxu0 0
        %2009 = vmatprep.subr.bf16.mxu0 0
        %2010 = vmatpush1.bf16.msra.mxu0 0
        %2011 = vmatprep.subr.bf16.mxu0 0
        %2012 = vmatpush1.bf16.msra.mxu0 0
        %2013 = vmatprep.subr.bf16.mxu0 0
        %2014 = vmatpush1.bf16.msra.mxu0 0
        %2015 = vmatprep.subr.bf16.mxu0 0
        %2016 = vmatpush1.bf16.msra.mxu0 0
        %2017 = vmatprep.subr.bf16.mxu0 0
        %2018 = vmatpush1.bf16.msra.mxu0 0
        %2019 = vmatprep.subr.bf16.mxu0 0
        %2020 = vmatpush1.bf16.msra.mxu0 0
        %2021 = vmatprep.subr.bf16.mxu0 0
        %2022 = vmatpush1.bf16.msra.mxu0 0
        %2023 = vmatprep.mubr.bf16.mxu0 0
        %2024 = vmatmul.mubr.bf16.gmra.mrb[0].mxu0 %v1865
        %v2025 = vpop.f32.mrb[0].mxu0
        %v2026 = vadd.f32 0.0, %v2025
        %v2027 = vpop.f32.mrb[0].mxu0
        %v2028 = vpop.f32.mrb[0].mxu0
        %v2029 = vadd.f32 0.0, %v2028
        %v2030 = vpop.f32.mrb[0].mxu0
        %2031 = vdwg.mxu0
        %v2032 = vrot.slane %v2026, 1
        %v2033 = vrot.slane %v2029, 1
        %v2034 = vsel %vm732, %v2032, %v2033
        %v2035 = vsel %vm732, %v2033, %v2032
        %v2036 = vsel %vm737, %v2034, 0.0
        %v2037 = vsel %vm738, %v2035, 0.0
        %v2038 = vadd.f32 %v1973, %v2036
        %v2039 = vadd.f32 %v1974, %v2037
        %v2040 = vxor.u32 %v2038, 2147483648
        %v2041 = vxor.u32 %v2039, 2147483648
        %v2042 = vmul.f32 %v2040, 1.442695
        %v2043 = vpow.pop %v2042
        %v2044 = vmul.f32 %v2041, 1.442695
        %v2045 = vpow.pop %v2044
        %v2046 = vadd.f32 %v2043, 1.0
        %v2047 = vadd.f32 %v2045, 1.0
        %v2048 = vrcp.pop %v2046
        %v2049 = vmul.f32 1.0, %v2048
        %v2050 = vrcp.pop %v2047
        %v2051 = vmul.f32 1.0, %v2050
        %v2052 = vtanh.pop %v2038
        %v2053 = vtanh.pop %v2039
        %v2054 = vmul.f32 %v2049, %v1816
        %v2055 = vmul.f32 %v2051, %v1817
        %2058 = vrot.lane.b32.xlu0 %v2052, 32
        %v2059 = vpop.permute.xlu0 %2058
        %2060 = vrot.lane.b32.xlu0 %v2053, 32
        %v2061 = vpop.permute.xlu0 %2060
        %v2064 = vmul.f32 %v2049, %v2059
        %v2065 = vmul.f32 %v2051, %v2061
        %2068 = vrot.lane.b32.xlu0 %v2064, 32
        %v2069 = vpop.permute.xlu0 %2068
        %2070 = vrot.lane.b32.xlu0 %v2065, 32
        %v2071 = vpop.permute.xlu0 %2070
        %v2074 = vadd.f32 %v2054, %v2069
        %v2075 = vadd.f32 %v2055, %v2071
        %v2076 = vtanh.pop %v2074
        %v2077 = vtanh.pop %v2075
        %2080 = vrot.lane.b32.xlu0 %v2076, 32
        %v2081 = vpop.permute.xlu0 %2080
        %2082 = vrot.lane.b32.xlu0 %v2077, 32
        %v2083 = vpop.permute.xlu0 %2082
        %v2086 = vmul.f32 %v2049, %v2081
        %v2087 = vmul.f32 %v2051, %v2083
        %2090 = vrot.lane.b32.xlu0 %v2086, 64
        %v2091 = vpop.permute.xlu0 %2090
        %2092 = vrot.lane.b32.xlu0 %v2087, 64
        %v2093 = vpop.permute.xlu0 %2092
        %s2096 = scalar_lea.vmem %s281, 80
        %2097 = vst.msk [vmem:[%s2096] sm:$0xff] %vm554, %v2091
        %2098 = vst.msk [vmem:[%s2096 + $0x8] sm:$0xff] %vm554, %v2093
        %v2099 = vpack.c.bf16 %v2087, %v2086
        %s2100 = scalar_lea.vmem [#allocation2], 96
        %v2101 = vld [vmem:[%s2100] sm:$0xff]
        %v2102 = vld [vmem:[%s2100 + $0x8] sm:$0xff]
        %v2103 = vld [vmem:[%s2] sm:$0xf]
        %v2104 = vld [vmem:[%s2 + $0x4] sm:$0xf]
        %v2105 = vld [vmem:[%s2 + $0x8] sm:$0xf]
        %v2106 = vld [vmem:[%s2 + $0xc] sm:$0xf]
        %2108 = vrot.lane.b32.xlu0 %v2099, 64
        %v2109 = vpop.permute.xlu0 %2108
        %v2114 = vunpack.c.l.b16 %v2103
        %v2115 = vunpack.c.l.b16 %v2104
        %v2116 = vunpack.c.l.b16 %v2105
        %v2117 = vunpack.c.l.b16 %v2106
        %v2118 = vpack.c.b16 %v2115, %v2114
        %v2119 = vpack.c.b16 %v2117, %v2116
        %v2123 = vsel %vm554, %v2109, 0
        %2125 = vmatprep.subr.bf16.mxu0 0
        %2126 = vmatpush1.bf16.msra.mxu0 %v2118
        %2127 = vmatprep.subr.bf16.mxu0 0
        %2128 = vmatpush1.bf16.msra.mxu0 %v2119
        %2129 = vmatprep.subr.bf16.mxu0 0
        %2130 = vmatpush1.bf16.msra.mxu0 0
        %2131 = vmatprep.subr.bf16.mxu0 0
        %2132 = vmatpush1.bf16.msra.mxu0 0
        %2133 = vmatprep.subr.bf16.mxu0 0
        %2134 = vmatpush1.bf16.msra.mxu0 0
        %2135 = vmatprep.subr.bf16.mxu0 0
        %2136 = vmatpush1.bf16.msra.mxu0 0
        %2137 = vmatprep.subr.bf16.mxu0 0
        %2138 = vmatpush1.bf16.msra.mxu0 0
        %2139 = vmatprep.subr.bf16.mxu0 0
        %2140 = vmatpush1.bf16.msra.mxu0 0
        %2141 = vmatprep.subr.bf16.mxu0 0
        %2142 = vmatpush1.bf16.msra.mxu0 0
        %2143 = vmatprep.subr.bf16.mxu0 0
        %2144 = vmatpush1.bf16.msra.mxu0 0
        %2145 = vmatprep.subr.bf16.mxu0 0
        %2146 = vmatpush1.bf16.msra.mxu0 0
        %2147 = vmatprep.subr.bf16.mxu0 0
        %2148 = vmatpush1.bf16.msra.mxu0 0
        %2149 = vmatprep.subr.bf16.mxu0 0
        %2150 = vmatpush1.bf16.msra.mxu0 0
        %2151 = vmatprep.subr.bf16.mxu0 0
        %2152 = vmatpush1.bf16.msra.mxu0 0
        %2153 = vmatprep.subr.bf16.mxu0 0
        %2154 = vmatpush1.bf16.msra.mxu0 0
        %2155 = vmatprep.subr.bf16.mxu0 0
        %2156 = vmatpush1.bf16.msra.mxu0 0
        %2157 = vmatprep.mubr.bf16.mxu0 0
        %2158 = vmatmul.mubr.bf16.gmra.mrb[0].mxu0 %v2123
        %v2159 = vpop.f32.mrb[0].mxu0
        %v2160 = vadd.f32 0.0, %v2159
        %v2161 = vpop.f32.mrb[0].mxu0
        %v2162 = vpop.f32.mrb[0].mxu0
        %v2163 = vadd.f32 0.0, %v2162
        %v2164 = vpop.f32.mrb[0].mxu0
        %2165 = vdwg.mxu0
        %v2166 = vrot.slane %v2160, 7
        %v2167 = vrot.slane %v2163, 7
        %v2168 = vsel %vm601, %v2166, %v2167
        %v2169 = vsel %vm601, %v2167, %v2166
        %v2170 = vsel %vm606, %v2169, 0.0
        %v2171 = vsel %vm607, %v2168, 0.0
        %v2172 = vadd.f32 %v2101, %v2170
        %v2173 = vadd.f32 %v2102, %v2171
        %v2174 = vld [vmem:[%s612] sm:$0xf]
        %v2175 = vld [vmem:[%s612 + $0x4] sm:$0xf]
        %v2176 = vld [vmem:[%s612 + $0x8] sm:$0xf]
        %v2177 = vld [vmem:[%s612 + $0xc] sm:$0xf]
        %v2182 = vunpack.c.l.b16 %v2174
        %v2183 = vunpack.c.l.b16 %v2175
        %v2184 = vunpack.c.l.b16 %v2176
        %v2185 = vunpack.c.l.b16 %v2177
        %v2186 = vpack.c.b16 %v2183, %v2182
        %v2187 = vpack.c.b16 %v2185, %v2184
        %2190 = vmatprep.subr.bf16.mxu0 0
        %2191 = vmatpush1.bf16.msra.mxu0 %v2186
        %2192 = vmatprep.subr.bf16.mxu0 0
        %2193 = vmatpush1.bf16.msra.mxu0 %v2187
        %2194 = vmatprep.subr.bf16.mxu0 0
        %2195 = vmatpush1.bf16.msra.mxu0 0
        %2196 = vmatprep.subr.bf16.mxu0 0
        %2197 = vmatpush1.bf16.msra.mxu0 0
        %2198 = vmatprep.subr.bf16.mxu0 0
        %2199 = vmatpush1.bf16.msra.mxu0 0
        %2200 = vmatprep.subr.bf16.mxu0 0
        %2201 = vmatpush1.bf16.msra.mxu0 0
        %2202 = vmatprep.subr.bf16.mxu0 0
        %2203 = vmatpush1.bf16.msra.mxu0 0
        %2204 = vmatprep.subr.bf16.mxu0 0
        %2205 = vmatpush1.bf16.msra.mxu0 0
        %2206 = vmatprep.subr.bf16.mxu0 0
        %2207 = vmatpush1.bf16.msra.mxu0 0
        %2208 = vmatprep.subr.bf16.mxu0 0
        %2209 = vmatpush1.bf16.msra.mxu0 0
        %2210 = vmatprep.subr.bf16.mxu0 0
        %2211 = vmatpush1.bf16.msra.mxu0 0
        %2212 = vmatprep.subr.bf16.mxu0 0
        %2213 = vmatpush1.bf16.msra.mxu0 0
        %2214 = vmatprep.subr.bf16.mxu0 0
        %2215 = vmatpush1.bf16.msra.mxu0 0
        %2216 = vmatprep.subr.bf16.mxu0 0
        %2217 = vmatpush1.bf16.msra.mxu0 0
        %2218 = vmatprep.subr.bf16.mxu0 0
        %2219 = vmatpush1.bf16.msra.mxu0 0
        %2220 = vmatprep.subr.bf16.mxu0 0
        %2221 = vmatpush1.bf16.msra.mxu0 0
        %2222 = vmatprep.mubr.bf16.mxu0 0
        %2223 = vmatmul.mubr.bf16.gmra.mrb[0].mxu0 %v2123
        %v2224 = vpop.f32.mrb[0].mxu0
        %v2225 = vadd.f32 0.0, %v2224
        %v2226 = vpop.f32.mrb[0].mxu0
        %v2227 = vpop.f32.mrb[0].mxu0
        %v2228 = vadd.f32 0.0, %v2227
        %v2229 = vpop.f32.mrb[0].mxu0
        %2230 = vdwg.mxu0
        %v2231 = vadd.f32 %v2172, %v2225
        %v2232 = vadd.f32 %v2173, %v2228
        %v2233 = vld [vmem:[%s672] sm:$0xf]
        %v2234 = vld [vmem:[%s672 + $0x4] sm:$0xf]
        %v2235 = vld [vmem:[%s672 + $0x8] sm:$0xf]
        %v2236 = vld [vmem:[%s672 + $0xc] sm:$0xf]
        %v2241 = vunpack.c.l.b16 %v2233
        %v2242 = vunpack.c.l.b16 %v2234
        %v2243 = vunpack.c.l.b16 %v2235
        %v2244 = vunpack.c.l.b16 %v2236
        %v2245 = vpack.c.b16 %v2242, %v2241
        %v2246 = vpack.c.b16 %v2244, %v2243
        %2249 = vmatprep.subr.bf16.mxu0 0
        %2250 = vmatpush1.bf16.msra.mxu0 %v2245
        %2251 = vmatprep.subr.bf16.mxu0 0
        %2252 = vmatpush1.bf16.msra.mxu0 %v2246
        %2253 = vmatprep.subr.bf16.mxu0 0
        %2254 = vmatpush1.bf16.msra.mxu0 0
        %2255 = vmatprep.subr.bf16.mxu0 0
        %2256 = vmatpush1.bf16.msra.mxu0 0
        %2257 = vmatprep.subr.bf16.mxu0 0
        %2258 = vmatpush1.bf16.msra.mxu0 0
        %2259 = vmatprep.subr.bf16.mxu0 0
        %2260 = vmatpush1.bf16.msra.mxu0 0
        %2261 = vmatprep.subr.bf16.mxu0 0
        %2262 = vmatpush1.bf16.msra.mxu0 0
        %2263 = vmatprep.subr.bf16.mxu0 0
        %2264 = vmatpush1.bf16.msra.mxu0 0
        %2265 = vmatprep.subr.bf16.mxu0 0
        %2266 = vmatpush1.bf16.msra.mxu0 0
        %2267 = vmatprep.subr.bf16.mxu0 0
        %2268 = vmatpush1.bf16.msra.mxu0 0
        %2269 = vmatprep.subr.bf16.mxu0 0
        %2270 = vmatpush1.bf16.msra.mxu0 0
        %2271 = vmatprep.subr.bf16.mxu0 0
        %2272 = vmatpush1.bf16.msra.mxu0 0
        %2273 = vmatprep.subr.bf16.mxu0 0
        %2274 = vmatpush1.bf16.msra.mxu0 0
        %2275 = vmatprep.subr.bf16.mxu0 0
        %2276 = vmatpush1.bf16.msra.mxu0 0
        %2277 = vmatprep.subr.bf16.mxu0 0
        %2278 = vmatpush1.bf16.msra.mxu0 0
        %2279 = vmatprep.subr.bf16.mxu0 0
        %2280 = vmatpush1.bf16.msra.mxu0 0
        %2281 = vmatprep.mubr.bf16.mxu0 0
        %2282 = vmatmul.mubr.bf16.gmra.mrb[0].mxu0 %v2123
        %v2283 = vpop.f32.mrb[0].mxu0
        %v2284 = vadd.f32 0.0, %v2283
        %v2285 = vpop.f32.mrb[0].mxu0
        %v2286 = vpop.f32.mrb[0].mxu0
        %v2287 = vadd.f32 0.0, %v2286
        %v2288 = vpop.f32.mrb[0].mxu0
        %2289 = vdwg.mxu0
        %v2290 = vrot.slane %v2284, 1
        %v2291 = vrot.slane %v2287, 1
        %v2292 = vsel %vm732, %v2290, %v2291
        %v2293 = vsel %vm732, %v2291, %v2290
        %v2294 = vsel %vm737, %v2292, 0.0
        %v2295 = vsel %vm738, %v2293, 0.0
        %v2296 = vadd.f32 %v2231, %v2294
        %v2297 = vadd.f32 %v2232, %v2295
        %v2298 = vxor.u32 %v2296, 2147483648
        %v2299 = vxor.u32 %v2297, 2147483648
        %v2300 = vmul.f32 %v2298, 1.442695
        %v2301 = vpow.pop %v2300
        %v2302 = vmul.f32 %v2299, 1.442695
        %v2303 = vpow.pop %v2302
        %v2304 = vadd.f32 %v2301, 1.0
        %v2305 = vadd.f32 %v2303, 1.0
        %v2306 = vrcp.pop %v2304
        %v2307 = vmul.f32 1.0, %v2306
        %v2308 = vrcp.pop %v2305
        %v2309 = vmul.f32 1.0, %v2308
        %v2310 = vtanh.pop %v2296
        %v2311 = vtanh.pop %v2297
        %v2312 = vmul.f32 %v2307, %v2074
        %v2313 = vmul.f32 %v2309, %v2075
        %2316 = vrot.lane.b32.xlu0 %v2310, 32
        %v2317 = vpop.permute.xlu0 %2316
        %2318 = vrot.lane.b32.xlu0 %v2311, 32
        %v2319 = vpop.permute.xlu0 %2318
        %v2322 = vmul.f32 %v2307, %v2317
        %v2323 = vmul.f32 %v2309, %v2319
        %2326 = vrot.lane.b32.xlu0 %v2322, 32
        %v2327 = vpop.permute.xlu0 %2326
        %2328 = vrot.lane.b32.xlu0 %v2323, 32
        %v2329 = vpop.permute.xlu0 %2328
        %v2332 = vadd.f32 %v2312, %v2327
        %v2333 = vadd.f32 %v2313, %v2329
        %v2334 = vtanh.pop %v2332
        %v2335 = vtanh.pop %v2333
        %2338 = vrot.lane.b32.xlu0 %v2334, 32
        %v2339 = vpop.permute.xlu0 %2338
        %2340 = vrot.lane.b32.xlu0 %v2335, 32
        %v2341 = vpop.permute.xlu0 %2340
        %v2344 = vmul.f32 %v2307, %v2339
        %v2345 = vmul.f32 %v2309, %v2341
        %2348 = vrot.lane.b32.xlu0 %v2344, 64
        %v2349 = vpop.permute.xlu0 %2348
        %2350 = vrot.lane.b32.xlu0 %v2345, 64
        %v2351 = vpop.permute.xlu0 %2350
        %s2354 = scalar_lea.vmem %s281, 96
        %2355 = vst.msk [vmem:[%s2354] sm:$0xff] %vm554, %v2349
        %2356 = vst.msk [vmem:[%s2354 + $0x8] sm:$0xff] %vm554, %v2351
        %v2357 = vpack.c.bf16 %v2345, %v2344
        %s2358 = scalar_lea.vmem [#allocation2], 112
        %v2359 = vld [vmem:[%s2358] sm:$0xff]
        %v2360 = vld [vmem:[%s2358 + $0x8] sm:$0xff]
        %v2361 = vld [vmem:[%s2] sm:$0xf]
        %v2362 = vld [vmem:[%s2 + $0x4] sm:$0xf]
        %v2363 = vld [vmem:[%s2 + $0x8] sm:$0xf]
        %v2364 = vld [vmem:[%s2 + $0xc] sm:$0xf]
        %2366 = vrot.lane.b32.xlu0 %v2357, 64
        %v2367 = vpop.permute.xlu0 %2366
        %v2372 = vunpack.c.l.b16 %v2361
        %v2373 = vunpack.c.l.b16 %v2362
        %v2374 = vunpack.c.l.b16 %v2363
        %v2375 = vunpack.c.l.b16 %v2364
        %v2376 = vpack.c.b16 %v2373, %v2372
        %v2377 = vpack.c.b16 %v2375, %v2374
        %v2381 = vsel %vm554, %v2367, 0
        %2383 = vmatprep.subr.bf16.mxu0 0
        %2384 = vmatpush1.bf16.msra.mxu0 %v2376
        %2385 = vmatprep.subr.bf16.mxu0 0
        %2386 = vmatpush1.bf16.msra.mxu0 %v2377
        %2387 = vmatprep.subr.bf16.mxu0 0
        %2388 = vmatpush1.bf16.msra.mxu0 0
        %2389 = vmatprep.subr.bf16.mxu0 0
        %2390 = vmatpush1.bf16.msra.mxu0 0
        %2391 = vmatprep.subr.bf16.mxu0 0
        %2392 = vmatpush1.bf16.msra.mxu0 0
        %2393 = vmatprep.subr.bf16.mxu0 0
        %2394 = vmatpush1.bf16.msra.mxu0 0
        %2395 = vmatprep.subr.bf16.mxu0 0
        %2396 = vmatpush1.bf16.msra.mxu0 0
        %2397 = vmatprep.subr.bf16.mxu0 0
        %2398 = vmatpush1.bf16.msra.mxu0 0
        %2399 = vmatprep.subr.bf16.mxu0 0
        %2400 = vmatpush1.bf16.msra.mxu0 0
        %2401 = vmatprep.subr.bf16.mxu0 0
        %2402 = vmatpush1.bf16.msra.mxu0 0
        %2403 = vmatprep.subr.bf16.mxu0 0
        %2404 = vmatpush1.bf16.msra.mxu0 0
        %2405 = vmatprep.subr.bf16.mxu0 0
        %2406 = vmatpush1.bf16.msra.mxu0 0
        %2407 = vmatprep.subr.bf16.mxu0 0
        %2408 = vmatpush1.bf16.msra.mxu0 0
        %2409 = vmatprep.subr.bf16.mxu0 0
        %2410 = vmatpush1.bf16.msra.mxu0 0
        %2411 = vmatprep.subr.bf16.mxu0 0
        %2412 = vmatpush1.bf16.msra.mxu0 0
        %2413 = vmatprep.subr.bf16.mxu0 0
        %2414 = vmatpush1.bf16.msra.mxu0 0
        %2415 = vmatprep.mubr.bf16.mxu0 0
        %2416 = vmatmul.mubr.bf16.gmra.mrb[0].mxu0 %v2381
        %v2417 = vpop.f32.mrb[0].mxu0
        %v2418 = vadd.f32 0.0, %v2417
        %v2419 = vpop.f32.mrb[0].mxu0
        %v2420 = vpop.f32.mrb[0].mxu0
        %v2421 = vadd.f32 0.0, %v2420
        %v2422 = vpop.f32.mrb[0].mxu0
        %2423 = vdwg.mxu0
        %v2424 = vrot.slane %v2418, 7
        %v2425 = vrot.slane %v2421, 7
        %v2426 = vsel %vm601, %v2424, %v2425
        %v2427 = vsel %vm601, %v2425, %v2424
        %v2428 = vsel %vm606, %v2427, 0.0
        %v2429 = vsel %vm607, %v2426, 0.0
        %v2430 = vadd.f32 %v2359, %v2428
        %v2431 = vadd.f32 %v2360, %v2429
        %v2432 = vld [vmem:[%s612] sm:$0xf]
        %v2433 = vld [vmem:[%s612 + $0x4] sm:$0xf]
        %v2434 = vld [vmem:[%s612 + $0x8] sm:$0xf]
        %v2435 = vld [vmem:[%s612 + $0xc] sm:$0xf]
        %v2440 = vunpack.c.l.b16 %v2432
        %v2441 = vunpack.c.l.b16 %v2433
        %v2442 = vunpack.c.l.b16 %v2434
        %v2443 = vunpack.c.l.b16 %v2435
        %v2444 = vpack.c.b16 %v2441, %v2440
        %v2445 = vpack.c.b16 %v2443, %v2442
        %2448 = vmatprep.subr.bf16.mxu0 0
        %2449 = vmatpush1.bf16.msra.mxu0 %v2444
        %2450 = vmatprep.subr.bf16.mxu0 0
        %2451 = vmatpush1.bf16.msra.mxu0 %v2445
        %2452 = vmatprep.subr.bf16.mxu0 0
        %2453 = vmatpush1.bf16.msra.mxu0 0
        %2454 = vmatprep.subr.bf16.mxu0 0
        %2455 = vmatpush1.bf16.msra.mxu0 0
        %2456 = vmatprep.subr.bf16.mxu0 0
        %2457 = vmatpush1.bf16.msra.mxu0 0
        %2458 = vmatprep.subr.bf16.mxu0 0
        %2459 = vmatpush1.bf16.msra.mxu0 0
        %2460 = vmatprep.subr.bf16.mxu0 0
        %2461 = vmatpush1.bf16.msra.mxu0 0
        %2462 = vmatprep.subr.bf16.mxu0 0
        %2463 = vmatpush1.bf16.msra.mxu0 0
        %2464 = vmatprep.subr.bf16.mxu0 0
        %2465 = vmatpush1.bf16.msra.mxu0 0
        %2466 = vmatprep.subr.bf16.mxu0 0
        %2467 = vmatpush1.bf16.msra.mxu0 0
        %2468 = vmatprep.subr.bf16.mxu0 0
        %2469 = vmatpush1.bf16.msra.mxu0 0
        %2470 = vmatprep.subr.bf16.mxu0 0
        %2471 = vmatpush1.bf16.msra.mxu0 0
        %2472 = vmatprep.subr.bf16.mxu0 0
        %2473 = vmatpush1.bf16.msra.mxu0 0
        %2474 = vmatprep.subr.bf16.mxu0 0
        %2475 = vmatpush1.bf16.msra.mxu0 0
        %2476 = vmatprep.subr.bf16.mxu0 0
        %2477 = vmatpush1.bf16.msra.mxu0 0
        %2478 = vmatprep.subr.bf16.mxu0 0
        %2479 = vmatpush1.bf16.msra.mxu0 0
        %2480 = vmatprep.mubr.bf16.mxu0 0
        %2481 = vmatmul.mubr.bf16.gmra.mrb[0].mxu0 %v2381
        %v2482 = vpop.f32.mrb[0].mxu0
        %v2483 = vadd.f32 0.0, %v2482
        %v2484 = vpop.f32.mrb[0].mxu0
        %v2485 = vpop.f32.mrb[0].mxu0
        %v2486 = vadd.f32 0.0, %v2485
        %v2487 = vpop.f32.mrb[0].mxu0
        %2488 = vdwg.mxu0
        %v2489 = vadd.f32 %v2430, %v2483
        %v2490 = vadd.f32 %v2431, %v2486
        %v2491 = vld [vmem:[%s672] sm:$0xf]
        %v2492 = vld [vmem:[%s672 + $0x4] sm:$0xf]
        %v2493 = vld [vmem:[%s672 + $0x8] sm:$0xf]
        %v2494 = vld [vmem:[%s672 + $0xc] sm:$0xf]
        %v2499 = vunpack.c.l.b16 %v2491
        %v2500 = vunpack.c.l.b16 %v2492
        %v2501 = vunpack.c.l.b16 %v2493
        %v2502 = vunpack.c.l.b16 %v2494
        %v2503 = vpack.c.b16 %v2500, %v2499
        %v2504 = vpack.c.b16 %v2502, %v2501
        %2507 = vmatprep.subr.bf16.mxu0 0
        %2508 = vmatpush1.bf16.msra.mxu0 %v2503
        %2509 = vmatprep.subr.bf16.mxu0 0
        %2510 = vmatpush1.bf16.msra.mxu0 %v2504
        %2511 = vmatprep.subr.bf16.mxu0 0
        %2512 = vmatpush1.bf16.msra.mxu0 0
        %2513 = vmatprep.subr.bf16.mxu0 0
        %2514 = vmatpush1.bf16.msra.mxu0 0
        %2515 = vmatprep.subr.bf16.mxu0 0
        %2516 = vmatpush1.bf16.msra.mxu0 0
        %2517 = vmatprep.subr.bf16.mxu0 0
        %2518 = vmatpush1.bf16.msra.mxu0 0
        %2519 = vmatprep.subr.bf16.mxu0 0
        %2520 = vmatpush1.bf16.msra.mxu0 0
        %2521 = vmatprep.subr.bf16.mxu0 0
        %2522 = vmatpush1.bf16.msra.mxu0 0
        %2523 = vmatprep.subr.bf16.mxu0 0
        %2524 = vmatpush1.bf16.msra.mxu0 0
        %2525 = vmatprep.subr.bf16.mxu0 0
        %2526 = vmatpush1.bf16.msra.mxu0 0
        %2527 = vmatprep.subr.bf16.mxu0 0
        %2528 = vmatpush1.bf16.msra.mxu0 0
        %2529 = vmatprep.subr.bf16.mxu0 0
        %2530 = vmatpush1.bf16.msra.mxu0 0
        %2531 = vmatprep.subr.bf16.mxu0 0
        %2532 = vmatpush1.bf16.msra.mxu0 0
        %2533 = vmatprep.subr.bf16.mxu0 0
        %2534 = vmatpush1.bf16.msra.mxu0 0
        %2535 = vmatprep.subr.bf16.mxu0 0
        %2536 = vmatpush1.bf16.msra.mxu0 0
        %2537 = vmatprep.subr.bf16.mxu0 0
        %2538 = vmatpush1.bf16.msra.mxu0 0
        %2539 = vmatprep.mubr.bf16.mxu0 0
        %2540 = vmatmul.mubr.bf16.gmra.mrb[0].mxu0 %v2381
        %v2541 = vpop.f32.mrb[0].mxu0
        %v2542 = vadd.f32 0.0, %v2541
        %v2543 = vpop.f32.mrb[0].mxu0
        %v2544 = vpop.f32.mrb[0].mxu0
        %v2545 = vadd.f32 0.0, %v2544
        %v2546 = vpop.f32.mrb[0].mxu0
        %2547 = vdwg.mxu0
        %v2548 = vrot.slane %v2542, 1
        %v2549 = vrot.slane %v2545, 1
        %v2550 = vsel %vm732, %v2548, %v2549
        %v2551 = vsel %vm732, %v2549, %v2548
        %v2552 = vsel %vm737, %v2550, 0.0
        %v2553 = vsel %vm738, %v2551, 0.0
        %v2554 = vadd.f32 %v2489, %v2552
        %v2555 = vadd.f32 %v2490, %v2553
        %v2556 = vxor.u32 %v2554, 2147483648
        %v2557 = vxor.u32 %v2555, 2147483648
        %v2558 = vmul.f32 %v2556, 1.442695
        %v2559 = vpow.pop %v2558
        %v2560 = vmul.f32 %v2557, 1.442695
        %v2561 = vpow.pop %v2560
        %v2562 = vadd.f32 %v2559, 1.0
        %v2563 = vadd.f32 %v2561, 1.0
        %v2564 = vrcp.pop %v2562
        %v2565 = vmul.f32 1.0, %v2564
        %v2566 = vrcp.pop %v2563
        %v2567 = vmul.f32 1.0, %v2566
        %v2568 = vtanh.pop %v2554
        %v2569 = vtanh.pop %v2555
        %v2570 = vmul.f32 %v2565, %v2332
        %v2571 = vmul.f32 %v2567, %v2333
        %2574 = vrot.lane.b32.xlu0 %v2568, 32
        %v2575 = vpop.permute.xlu0 %2574
        %2576 = vrot.lane.b32.xlu0 %v2569, 32
        %v2577 = vpop.permute.xlu0 %2576
        %v2580 = vmul.f32 %v2565, %v2575
        %v2581 = vmul.f32 %v2567, %v2577
        %2584 = vrot.lane.b32.xlu0 %v2580, 32
        %v2585 = vpop.permute.xlu0 %2584
        %2586 = vrot.lane.b32.xlu0 %v2581, 32
        %v2587 = vpop.permute.xlu0 %2586
        %v2590 = vadd.f32 %v2570, %v2585
        %v2591 = vadd.f32 %v2571, %v2587
        %v2592 = vtanh.pop %v2590
        %v2593 = vtanh.pop %v2591
        %2596 = vrot.lane.b32.xlu0 %v2592, 32
        %v2597 = vpop.permute.xlu0 %2596
        %2598 = vrot.lane.b32.xlu0 %v2593, 32
        %v2599 = vpop.permute.xlu0 %2598
        %v2602 = vmul.f32 %v2565, %v2597
        %v2603 = vmul.f32 %v2567, %v2599
        %2606 = vrot.lane.b32.xlu0 %v2602, 64
        %v2607 = vpop.permute.xlu0 %2606
        %2608 = vrot.lane.b32.xlu0 %v2603, 64
        %v2609 = vpop.permute.xlu0 %2608
        %s2612 = scalar_lea.vmem %s281, 112
        %2613 = vst.msk [vmem:[%s2612] sm:$0xff] %vm554, %v2607
        %2614 = vst.msk [vmem:[%s2612 + $0x8] sm:$0xff] %vm554, %v2609
        %2615 = vst.msk [vmem:[%s256] sm:$0xff] %vm554, %v2607
        %2616 = vst.msk [vmem:[%s256 + $0x8] sm:$0xff] %vm554, %v2609
        %2619 = vrot.lane.b32.xlu0 %v2590, 96
        %v2620 = vpop.permute.xlu0 %2619
        %2621 = vrot.lane.b32.xlu0 %v2591, 96
        %v2622 = vpop.permute.xlu0 %2621
        %2625 = vst.msk [vmem:[%s263] sm:$0xff] %vm554, %v2620
        %2626 = vst.msk [vmem:[%s263 + $0x8] sm:$0xff] %vm554, %v2622
        %p2627 = scmp.lt.s32.totalorder %s27, 1
        %s2628 = scalar_select %p2627, %s27, 1
        %p2629 = scmp.lt.s32.totalorder %s28, 0
        %s2630 = scalar_select %p2629, %s28, 0
        %s2631 = smul.addr %s2630, 16
        %s2632 = smul.addr %s2628, 16
        %s2633 = sadd.s32 %s2631, %s2632
        %s2634 = smul.addr %s2633, 8
        %s2635 = scalar_lea.vmem %s3, %s2634
        %s2636 = sand.u32 %s141, 1
        %s2637 = scalar_lea.sflag [#allocation4], %s2636
        %s2638 = sand.u32 %s141, 1
        %s2639 = smul.addr %s2638, 16
        %s2640 = scalar_lea.vmem [#allocation3], %s2639
        %s2641 = sand.u32 %s167, 1
        %s2642 = scalar_lea.sflag [#allocation6], %s2641
        %s2643 = sand.u32 %s167, 1
        %s2644 = smul.addr %s2643, 16
        %s2645 = scalar_lea.vmem [#allocation5], %s2644
        // Predicated region
        $region37: #{tpu_custom_call.1} parent=31 // pred_check
          %p2646 = pneg %p125
        $region38: #{tpu_custom_call.1} parent=31 // pred_check_branch
          %2648 = sbr.rel (%p2646) target = $region40
        $region39: #{tpu_custom_call.1} parent=31 // pred_region
          _
        $region40: #{tpu_custom_call.1} parent=31 // pred_fallthru
          _
        // Predicated region
        $region41: #{tpu_custom_call.1} parent=31 // pred_check
          %p2649 = pneg %p151
        $region42: #{tpu_custom_call.1} parent=31 // pred_check_branch
          %2651 = sbr.rel (%p2649) target = $region44
        $region43: #{tpu_custom_call.1} parent=31 // pred_region
          %s2653 = ssub.s32 256, 256
          %2654 = vsyncadd %s2637, %s2653
          %s2655 = smul.addr %s27, 2
          %s2656 = smul.addr %s2655, 128
          %s2657 = scalar_lea.hbm %s4, %s2656
          %s2658 = sshll.u32 %s2640, 4
          %s2659 = int_to_ptr.vmem [resolvable:$true] %s2658
          %2664 = dma.vmem_to_hbm [thread:$0]  %s2659, 256, %s2657, %s2637, 128, 128, 8
        $region44: #{tpu_custom_call.1} parent=31 // pred_fallthru
          _
        // Predicated region
        $region45: #{tpu_custom_call.1} parent=31 // pred_check
          %p2665 = pneg %p177
        $region46: #{tpu_custom_call.1} parent=31 // pred_check_branch
          %2667 = sbr.rel (%p2665) target = $region48
        $region47: #{tpu_custom_call.1} parent=31 // pred_region
          %s2669 = ssub.s32 256, 256
          %2670 = vsyncadd %s2642, %s2669
          %s2671 = smul.addr %s27, 2
          %s2672 = smul.addr %s2671, 128
          %s2673 = scalar_lea.hbm %s5, %s2672
          %s2674 = sshll.u32 %s2645, 4
          %s2675 = int_to_ptr.vmem [resolvable:$true] %s2674
          %2680 = dma.vmem_to_hbm [thread:$0]  %s2675, 256, %s2673, %s2642, 128, 128, 8
        $region48: #{tpu_custom_call.1} parent=31 // pred_fallthru
          _
      $region32: #{tpu_custom_call.1} parent=5 // pred_fallthru
        _
      %p2681 = scmp.le.s32.totalorder 2, %s18
      // Predicated region
      $region49: #{tpu_custom_call.1} parent=5 // pred_check
        %p2682 = pneg %p2681
      $region50: #{tpu_custom_call.1} parent=5 // pred_check_branch
        %2684 = sbr.rel (%p2682) target = $region52
      $region51: #{tpu_custom_call.1} parent=5 // pred_region
        %s2685 = ssub.s32 %s18, 2
        // Predicated region
        $region53: #{tpu_custom_call.1} parent=51 // pred_check
          %p2686 = pneg %p131
        $region54: #{tpu_custom_call.1} parent=51 // pred_check_branch
          %2688 = sbr.rel (%p2686) target = $region56
        $region55: #{tpu_custom_call.1} parent=51 // pred_region
          %p2689 = scmp.lt.s32.totalorder %s29, 1
          %s2690 = scalar_select %p2689, %s29, 1
          %p2691 = scmp.lt.s32.totalorder %s30, 0
          %s2692 = scalar_select %p2691, %s30, 0
          %s2693 = smul.addr %s2692, 16
          %s2694 = smul.addr %s2690, 16
          %s2695 = sadd.s32 %s2693, %s2694
          %s2696 = smul.addr %s2695, 8
          %s2697 = scalar_lea.vmem %s3, %s2696
        $region56: #{tpu_custom_call.1} parent=51 // pred_fallthru
          _
        // Predicated region
        $region57: #{tpu_custom_call.1} parent=51 // pred_check
          %p2698 = pneg %p157
        $region58: #{tpu_custom_call.1} parent=51 // pred_check_branch
          %2700 = sbr.rel (%p2698) target = $region60
        $region59: #{tpu_custom_call.1} parent=51 // pred_region
          %s2701 = sand.u32 %s142, 1
          %s2702 = scalar_lea.sflag [#allocation4], %s2701
          %s2703 = sand.u32 %s142, 1
          %s2704 = smul.addr %s2703, 16
          %s2705 = scalar_lea.vmem [#allocation3], %s2704
          %2706 = dma.done %s2702, 256
        $region60: #{tpu_custom_call.1} parent=51 // pred_fallthru
          _
        // Predicated region
        $region61: #{tpu_custom_call.1} parent=51 // pred_check
          %p2707 = pneg %p183
        $region62: #{tpu_custom_call.1} parent=51 // pred_check_branch
          %2709 = sbr.rel (%p2707) target = $region64
        $region63: #{tpu_custom_call.1} parent=51 // pred_region
          %s2710 = sand.u32 %s168, 1
          %s2711 = scalar_lea.sflag [#allocation6], %s2710
          %s2712 = sand.u32 %s168, 1
          %s2713 = smul.addr %s2712, 16
          %s2714 = scalar_lea.vmem [#allocation5], %s2713
          %2715 = dma.done %s2711, 256
        $region64: #{tpu_custom_call.1} parent=51 // pred_fallthru
          _
      $region52: #{tpu_custom_call.1} parent=5 // pred_fallthru
        _
    $region6: #{tpu_custom_call.1} parent=1 // loop_footer
      %s22 = sadd.s32 1, %s18
    $region7: #{tpu_custom_call.1} parent=1 // loop_footer_branch
      %17 = sbr.rel target = $region3
    $region8: #{tpu_custom_call.1} parent=1 // loop_exit
      _
    %2716 = vsyncpa [#allocation4], 1
    %s2717 = scalar_lea.sflag [#allocation4], 1
    %2718 = vsyncpa %s2717, 1
    %2719 = vsyncpa [#allocation6], 1
    %s2720 = scalar_lea.sflag [#allocation6], 1
    %2721 = vsyncpa %s2720, 1

</llo_original>
